<compile_context>
chip_gen: v7x
topology: tpu7x:2x2x1
jax: 0.10.0
libtpu: 0.0.40
codegen_flags: <defaults>
</compile_context>

<pallas_src>
import functools

import jax
import jax.numpy as jnp
from jax.experimental import pallas as pl
from jax.experimental.pallas import tpu as pltpu

HID = 128          # hidden_dim (forced to 128, see notes above)
L = 280            # ConvLSTMCell.init_hidden hard-codes length 280
NSEG = 7           # h.view(B, 128, -1, 7)
NQ = L // NSEG     # 40


def _convlstm_kernel(y_ref, wc_ref, bc_ref, w1_ref, b1_ref, w2_ref, b2_ref,
                     w3_ref, b3_ref, out_ref, h_ref, c_ref, pooled_ref,
                     *, fuse_k, gate_dtype):
    t = pl.program_id(1)

    # Fresh recurrent state at the start of each batch element's T sweep.
    @pl.when(t == 0)
    def _():
        h_ref[...] = jnp.zeros(h_ref.shape, h_ref.dtype)
        c_ref[...] = jnp.zeros(c_ref.shape, c_ref.dtype)

    y_t = y_ref[0, 0]                       # (L, HID) bf16 : convf(x_t) + bias
    h = h_ref[...]                          # (L, HID) bf16

    # Conv1d(k=1) on cat([y, h]): one K=256 matmul on 256-deep MXUs (v6e / TPU7x);
    # two K=128 matmuls on v5e and older (128-deep MXU, concat would only add copies).
    if fuse_k:
        comb = jnp.concatenate([y_t, h], axis=-1)                      # lane concat, no XLU
        z = jnp.dot(comb, wc_ref[...], preferred_element_type=jnp.float32)
    else:
        z = jnp.dot(y_t, wc_ref[pl.ds(0, HID), :], preferred_element_type=jnp.float32)
        z = z + jnp.dot(h, wc_ref[pl.ds(HID, HID), :], preferred_element_type=jnp.float32)
    z = z + bc_ref[...]                                                # (L, 4*HID) f32

    zg = z.astype(gate_dtype)               # bf16 gates on v6e/TPU7x, f32 on <=v5
    i_g = jax.nn.sigmoid(zg[:, 0 * HID:1 * HID])
    f_g = jax.nn.sigmoid(zg[:, 1 * HID:2 * HID])
    o_g = jax.nn.sigmoid(zg[:, 2 * HID:3 * HID])
    g_g = jnp.tanh(zg[:, 3 * HID:4 * HID])

    c_new = f_g.astype(jnp.float32) * c_ref[...] + (i_g * g_g).astype(jnp.float32)
    h_new = o_g * jnp.tanh(c_new.astype(gate_dtype))

    c_ref[...] = c_new
    h_ref[...] = h_new.astype(h_ref.dtype)

    # h.view(128, 40, 7).max over the 40-dim: in our row layout the 40 "q" rows of each
    # segment r form a contiguous, 8-aligned sublane block -> one strided sublane reduce
    # and a contiguous (7, 128) store per timestep.
    pooled_ref[t] = jnp.max(h_new.reshape(NSEG, NQ, HID), axis=1).astype(pooled_ref.dtype)

    # fc head once per batch element, on all T pooled rows at once.
    @pl.when(t == pl.num_programs(1) - 1)
    def _():
        seq = pooled_ref.shape[0]
        p = pooled_ref[...].reshape(seq, NSEG * HID)                   # (T, 896) bf16
        a1 = jnp.dot(p, w1_ref[...], preferred_element_type=jnp.float32) + b1_ref[...]
        a1 = jnp.where(a1 > 0, a1, 0.1 * a1)                           # LeakyReLU(0.1)
        a2 = jnp.dot(a1.astype(jnp.bfloat16), w2_ref[...],
                     preferred_element_type=jnp.float32) + b2_ref[...]
        a2 = jnp.where(a2 > 0, a2, 0.1 * a2)
        a3 = jnp.dot(a2.astype(jnp.bfloat16), w3_ref[...],
                     preferred_element_type=jnp.float32) + b3_ref[...]
        out_ref[0] = a3                                                # (T, 128) lane-dense


def convlstm_forward(x, params):
    """x: (B, T, Cin, L) — same axis convention as the PyTorch module."""
    B, T, Cin, Lx = x.shape
    assert Lx == L
    wf, bf, wc, bc, w1, b1, w2, b2, w3, b3 = params

    # convf (1x1 conv) hoisted out of the kernel: one XLA matmul for all (b, t, l).
    y = jnp.einsum('btcl,oc->btlo', x, wf[:, :, 0]) + bf               # (B, T, L, 128) f32
    # Row layout within a batch: row = r*40 + q corresponds to PyTorch length l = 7*q + r.
    y = y.reshape(B, T, NQ, NSEG, HID)
    y = jnp.transpose(y, (0, 1, 3, 2, 4)).reshape(B, T, L, HID).astype(jnp.bfloat16)

    # Weight plumbing (pure glue, done once).
    wc_k = jnp.transpose(wc[:, :, 0]).astype(jnp.bfloat16)             # (256, 512)
    bc_k = bc.reshape(1, -1).astype(jnp.float32)
    # w1_k[r*HID + c, j] = W1[j, c*7 + r]  (matches pooled (T, r, c) flatten order)
    w1_k = jnp.transpose(w1.reshape(256, HID, NSEG), (2, 1, 0)) \
              .reshape(NSEG * HID, 256).astype(jnp.bfloat16)
    b1_k = b1.reshape(1, -1).astype(jnp.float32)
    w2_k = jnp.transpose(w2).astype(jnp.bfloat16)                      # (256, 128)
    b2_k = b2.reshape(1, -1).astype(jnp.float32)
    # Pad fc3 to 128 output columns for a lane-dense final store; slice [:7] outside.
    w3_k = (jnp.zeros((HID, HID), jnp.float32)
               .at[:, :NSEG].set(jnp.transpose(w3))).astype(jnp.bfloat16)
    b3_k = jnp.zeros((1, HID), jnp.float32).at[0, :NSEG].set(b3)

    # bf16 gates + fused K=256 matmul only where the hardware has a bf16 VPU/EUP and a
    # 256-deep MXU (v6e, TPU7x "tpu7x", and later).  v2-v5 keep f32 gates + split K=128.
    kind = jax.devices()[0].device_kind.lower()
    legacy = any(s in kind for s in ("v2", "v3", "v4", "v5"))
    gate_dtype = jnp.float32 if legacy else jnp.bfloat16
    fuse_k = not legacy

    kernel = functools.partial(_convlstm_kernel, fuse_k=fuse_k, gate_dtype=gate_dtype)

    def full(a):
        return pl.BlockSpec(a.shape, lambda b, t, n=a.ndim: (0,) * n)

    weights = (wc_k, bc_k, w1_k, b1_k, w2_k, b2_k, w3_k, b3_k)
    weight_bytes = sum(int(a.size) * a.dtype.itemsize for a in weights)
    block_bytes = 2 * (L * HID * 2) + 2 * (T * HID * 4)                # y + out, 2x-buffered
    scratch_bytes = L * HID * (2 + 4) + T * NSEG * HID * 2             # h + c + pooled
    vmem_limit = 2 * (weight_bytes + block_bytes + scratch_bytes) + (4 << 20)

    out = pl.pallas_call(
        kernel,
        out_shape=jax.ShapeDtypeStruct((B, T, HID), jnp.float32),
        grid=(B, T),
        in_specs=[
            pl.BlockSpec((1, 1, L, HID), lambda b, t: (b, t, 0, 0)),
            *[full(a) for a in weights],
        ],
        out_specs=pl.BlockSpec((1, T, HID), lambda b, t: (b, 0, 0)),
        scratch_shapes=[
            pltpu.VMEM((L, HID), jnp.bfloat16),          # h (recurrent state)
            pltpu.VMEM((L, HID), jnp.float32),           # c (recurrent state, f32)
            pltpu.VMEM((T, NSEG, HID), jnp.bfloat16),    # pooled max per timestep
        ],
        compiler_params=pltpu.CompilerParams(
            # Batch axis is parallel (fresh h/c per b) -> TPU7x's two TensorCores split
            # it; keep B >= 2 (ideally even) per call so neither core idles.
            dimension_semantics=("parallel", "arbitrary"),
            vmem_limit_bytes=int(vmem_limit)),
    )(y, *weights)

    return out[:, :, :NSEG]                              # (B, T, 7), like torch.stack(dim=1)


def convlstm_reference(x, params):
    """Pure-JAX f32 mirror of the PyTorch forward, for correctness checking."""
    wf, bf, wc, bc, w1, b1, w2, b2, w3, b3 = params
    B, T, Cin, Lx = x.shape
    h = jnp.zeros((B, HID, Lx), jnp.float32)
    c = jnp.zeros((B, HID, Lx), jnp.float32)
    lrelu = lambda v: jnp.where(v > 0, v, 0.1 * v)
    outs = []
    for t in range(T):
        xt = x[:, t]                                                       # (B, Cin, L)
        y = jnp.einsum('oc,bcl->bol', wf[:, :, 0], xt) + bf[None, :, None]
        comb = jnp.concatenate([y, h], axis=1)
        z = jnp.einsum('oc,bcl->bol', wc[:, :, 0], comb) + bc[None, :, None]
        ig = jax.nn.sigmoid(z[:, 0:HID])
        fg = jax.nn.sigmoid(z[:, HID:2 * HID])
        og = jax.nn.sigmoid(z[:, 2 * HID:3 * HID])
        gg = jnp.tanh(z[:, 3 * HID:4 * HID])
        c = fg * c + ig * gg
        h = og * jnp.tanh(c)
        v = jnp.max(h.reshape(B, HID, NQ, NSEG), axis=2).reshape(B, HID * NSEG)
        a1 = lrelu(v @ w1.T + b1)
        a2 = lrelu(a1 @ w2.T + b2)
        a3 = a2 @ w3.T + b3
        outs.append(a3)
    return jnp.stack(outs, axis=1)


if __name__ == "__main__":
    key = jax.random.PRNGKey(0)
    B, T, Cin = 2, 8, 4
    ks = jax.random.split(key, 12)
    x = jax.random.normal(ks[0], (B, T, Cin, L), jnp.float32)

    params = (
        0.10 * jax.random.normal(ks[1], (HID, Cin, 1), jnp.float32),          # convf weight
        0.01 * jax.random.normal(ks[2], (HID,), jnp.float32),                 # convf bias
        0.05 * jax.random.normal(ks[3], (4 * HID, 2 * HID, 1), jnp.float32),  # conv weight
        0.01 * jax.random.normal(ks[4], (4 * HID,), jnp.float32),             # conv bias
        0.05 * jax.random.normal(ks[5], (256, 896), jnp.float32),             # fc1 weight
        0.01 * jax.random.normal(ks[6], (256,), jnp.float32),                 # fc1 bias
        0.05 * jax.random.normal(ks[7], (128, 256), jnp.float32),             # fc2 weight
        0.01 * jax.random.normal(ks[8], (128,), jnp.float32),                 # fc2 bias
        0.05 * jax.random.normal(ks[9], (7, 128), jnp.float32),               # fc3 weight
        0.01 * jax.random.normal(ks[10], (7,), jnp.float32),                  # fc3 bias
    )

    out = jax.block_until_ready(convlstm_forward(x, params))
    ref = jax.block_until_ready(convlstm_reference(x, params))
    assert out.shape == (B, T, 7), out.shape
    # 3e-2 tolerance covers the bf16 matmul/gate path against the f32 reference over T=8.
    assert jnp.allclose(out, ref, rtol=3e-2, atol=3e-2), float(jnp.max(jnp.abs(out - ref)))
    print("KERNEL_OK")
</pallas_src>

<mosaic_0001>
module attributes {stable_mosaic.version = 11 : i64} {
  func.func @_convlstm_kernel(%arg0: i32, %arg1: i32, %arg2: memref<1x1x280x128xbf16, #tpu.memory_space<vmem>>, %arg3: memref<256x512xbf16, #tpu.memory_space<vmem>>, %arg4: memref<1x512xf32, #tpu.memory_space<vmem>>, %arg5: memref<896x256xbf16, #tpu.memory_space<vmem>>, %arg6: memref<1x256xf32, #tpu.memory_space<vmem>>, %arg7: memref<256x128xbf16, #tpu.memory_space<vmem>>, %arg8: memref<1x128xf32, #tpu.memory_space<vmem>>, %arg9: memref<128x128xbf16, #tpu.memory_space<vmem>>, %arg10: memref<1x128xf32, #tpu.memory_space<vmem>>, %arg11: memref<1x8x128xf32, #tpu.memory_space<vmem>>, %arg12: memref<280x128xbf16, #tpu.memory_space<vmem>>, %arg13: memref<280x128xf32, #tpu.memory_space<vmem>>, %arg14: memref<8x7x128xbf16, #tpu.memory_space<vmem>>) attributes {dimension_semantics = [#tpu.dimension_semantics<parallel>, #tpu.dimension_semantics<arbitrary>], iteration_bounds = array<i64: 2, 8>, scalar_prefetch = 0 : i64, scratch_operands = 3 : i64, tpu.core_type = #tpu.core_type<tc>, window_params = [{transform_indices = @transform_0, window_bounds = array<i64: 1, 1, 280, 128>}, {pipeline_mode = #tpu.pipeline_mode<synchronous>, transform_indices = @transform_1, window_bounds = array<i64: 256, 512>}, {pipeline_mode = #tpu.pipeline_mode<synchronous>, transform_indices = @transform_2, window_bounds = array<i64: 1, 512>}, {pipeline_mode = #tpu.pipeline_mode<synchronous>, transform_indices = @transform_3, window_bounds = array<i64: 896, 256>}, {pipeline_mode = #tpu.pipeline_mode<synchronous>, transform_indices = @transform_4, window_bounds = array<i64: 1, 256>}, {pipeline_mode = #tpu.pipeline_mode<synchronous>, transform_indices = @transform_5, window_bounds = array<i64: 256, 128>}, {pipeline_mode = #tpu.pipeline_mode<synchronous>, transform_indices = @transform_6, window_bounds = array<i64: 1, 128>}, {pipeline_mode = #tpu.pipeline_mode<synchronous>, transform_indices = @transform_7, window_bounds = array<i64: 128, 128>}, {pipeline_mode = #tpu.pipeline_mode<synchronous>, transform_indices = @transform_8, window_bounds = array<i64: 1, 128>}, {transform_indices = @transform_9, window_bounds = array<i64: 1, 8, 128>}]} {
    %c0_i32 = arith.constant 0 : i32
    %0 = arith.cmpi eq, %arg1, %c0_i32 : i32
    %1 = arith.extui %0 : i1 to i32
    %c0_i32_0 = arith.constant 0 : i32
    %2 = arith.cmpi ne, %1, %c0_i32_0 : i32
    scf.if %2 {
      %cst_23 = arith.constant 0.000000e+00 : bf16
      %53 = vector.broadcast %cst_23 : bf16 to vector<280x128xbf16>
      %c0_24 = arith.constant 0 : index
      %c0_25 = arith.constant 0 : index
      %54 = vector.load %arg12[%c0_24, %c0_25] : memref<280x128xbf16, #tpu.memory_space<vmem>>, vector<280x128xbf16>
      tpu.vector_store %arg12[%c0_24, %c0_25], %53 {strides = array<i32>} : memref<280x128xbf16, #tpu.memory_space<vmem>>, vector<280x128xbf16>,
      %cst_26 = arith.constant 0.000000e+00 : f32
      %55 = vector.broadcast %cst_26 : f32 to vector<280x128xf32>
      %c0_27 = arith.constant 0 : index
      %c0_28 = arith.constant 0 : index
      %56 = vector.load %arg13[%c0_27, %c0_28] : memref<280x128xf32, #tpu.memory_space<vmem>>, vector<280x128xf32>
      tpu.vector_store %arg13[%c0_27, %c0_28], %55 {strides = array<i32>} : memref<280x128xf32, #tpu.memory_space<vmem>>, vector<280x128xf32>,
    } else {
    }
    %c0 = arith.constant 0 : index
    %c0_1 = arith.constant 0 : index
    %c0_2 = arith.constant 0 : index
    %c0_3 = arith.constant 0 : index
    %3 = vector.load %arg2[%c0, %c0_1, %c0_2, %c0_3] : memref<1x1x280x128xbf16, #tpu.memory_space<vmem>>, vector<1x1x280x128xbf16>
    %4 = vector.shape_cast %3 : vector<1x1x280x128xbf16> to vector<280x128xbf16>
    %c0_4 = arith.constant 0 : index
    %c0_5 = arith.constant 0 : index
    %5 = vector.load %arg12[%c0_4, %c0_5] : memref<280x128xbf16, #tpu.memory_space<vmem>>, vector<280x128xbf16>
    %6 = tpu.concatenate %4, %5 in 1 : vector<280x128xbf16>, vector<280x128xbf16> -> vector<280x256xbf16>
    %c0_6 = arith.constant 0 : index
    %c0_7 = arith.constant 0 : index
    %7 = vector.load %arg3[%c0_6, %c0_7] : memref<256x512xbf16, #tpu.memory_space<vmem>>, vector<256x512xbf16>
    %cst = arith.constant dense<0.000000e+00> : vector<280x512xf32>
    %8 = tpu.matmul %6, %7, %cst {dimension_numbers = #tpu.dot_dimension_numbers<[1], [0], [0], [1], [0, 0, 1, 1], [], []>} : vector<280x256xbf16>, vector<256x512xbf16>, vector<280x512xf32> -> vector<280x512xf32>
    %c0_8 = arith.constant 0 : index
    %c0_9 = arith.constant 0 : index
    %9 = vector.load %arg4[%c0_8, %c0_9] : memref<1x512xf32, #tpu.memory_space<vmem>>, vector<1x512xf32>
    %10 = vector.broadcast %9 : vector<1x512xf32> to vector<280x512xf32>
    %11 = arith.addf %8, %10 : vector<280x512xf32>
    %12 = arith.truncf %11 : vector<280x512xf32> to vector<280x512xbf16>
    %13 = vector.extract_strided_slice %12 {offsets = [0, 0], sizes = [280, 128], strides = [1, 1]} : vector<280x512xbf16> to vector<280x128xbf16>
    %14 = arith.negf %13 : vector<280x128xbf16>
    %15 = math.exp %14 : vector<280x128xbf16>
    %cst_10 = arith.constant 1.000000e+00 : bf16
    %16 = vector.broadcast %cst_10 : bf16 to vector<280x128xbf16>
    %17 = arith.addf %16, %15 : vector<280x128xbf16>
    %18 = arith.divf %16, %17 : vector<280x128xbf16>
    %19 = vector.extract_strided_slice %12 {offsets = [0, 128], sizes = [280, 128], strides = [1, 1]} : vector<280x512xbf16> to vector<280x128xbf16>
    %20 = arith.negf %19 : vector<280x128xbf16>
    %21 = math.exp %20 : vector<280x128xbf16>
    %cst_11 = arith.constant 1.000000e+00 : bf16
    %22 = vector.broadcast %cst_11 : bf16 to vector<280x128xbf16>
    %23 = arith.addf %22, %21 : vector<280x128xbf16>
    %24 = arith.divf %22, %23 : vector<280x128xbf16>
    %25 = vector.extract_strided_slice %12 {offsets = [0, 256], sizes = [280, 128], strides = [1, 1]} : vector<280x512xbf16> to vector<280x128xbf16>
    %26 = arith.negf %25 : vector<280x128xbf16>
    %27 = math.exp %26 : vector<280x128xbf16>
    %cst_12 = arith.constant 1.000000e+00 : bf16
    %28 = vector.broadcast %cst_12 : bf16 to vector<280x128xbf16>
    %29 = arith.addf %28, %27 : vector<280x128xbf16>
    %30 = arith.divf %28, %29 : vector<280x128xbf16>
    %31 = vector.extract_strided_slice %12 {offsets = [0, 384], sizes = [280, 128], strides = [1, 1]} : vector<280x512xbf16> to vector<280x128xbf16>
    %32 = math.tanh %31 : vector<280x128xbf16>
    %33 = arith.extf %24 : vector<280x128xbf16> to vector<280x128xf32>
    %c0_13 = arith.constant 0 : index
    %c0_14 = arith.constant 0 : index
    %34 = vector.load %arg13[%c0_13, %c0_14] : memref<280x128xf32, #tpu.memory_space<vmem>>, vector<280x128xf32>
    %35 = arith.mulf %33, %34 : vector<280x128xf32>
    %36 = arith.mulf %18, %32 : vector<280x128xbf16>
    %37 = arith.extf %36 : vector<280x128xbf16> to vector<280x128xf32>
    %38 = arith.addf %35, %37 : vector<280x128xf32>
    %39 = arith.truncf %38 : vector<280x128xf32> to vector<280x128xbf16>
    %40 = math.tanh %39 : vector<280x128xbf16>
    %41 = arith.mulf %30, %40 : vector<280x128xbf16>
    %c0_15 = arith.constant 0 : index
    %c0_16 = arith.constant 0 : index
    %42 = vector.load %arg13[%c0_15, %c0_16] : memref<280x128xf32, #tpu.memory_space<vmem>>, vector<280x128xf32>
    tpu.vector_store %arg13[%c0_15, %c0_16], %38 {strides = array<i32>} : memref<280x128xf32, #tpu.memory_space<vmem>>, vector<280x128xf32>,
    %c0_17 = arith.constant 0 : index
    %c0_18 = arith.constant 0 : index
    %43 = vector.load %arg12[%c0_17, %c0_18] : memref<280x128xbf16, #tpu.memory_space<vmem>>, vector<280x128xbf16>
    tpu.vector_store %arg12[%c0_17, %c0_18], %41 {strides = array<i32>} : memref<280x128xbf16, #tpu.memory_space<vmem>>, vector<280x128xbf16>,
    %44 = vector.shape_cast %41 : vector<280x128xbf16> to vector<7x40x128xbf16>
    %cst_19 = arith.constant dense<0xFF80> : vector<7x128xbf16>
    %45 = vector.multi_reduction <maximumf>, %44, %cst_19 [1] : vector<7x40x128xbf16> to vector<7x128xbf16>
    %46 = arith.index_cast %arg1 : i32 to index
    %c0_20 = arith.constant 0 : index
    %c0_21 = arith.constant 0 : index
    %47 = vector.load %arg14[%46, %c0_20, %c0_21] : memref<8x7x128xbf16, #tpu.memory_space<vmem>>, vector<1x7x128xbf16>
    %48 = vector.shape_cast %47 : vector<1x7x128xbf16> to vector<7x128xbf16>
    %49 = vector.shape_cast %45 : vector<7x128xbf16> to vector<1x7x128xbf16>
    tpu.vector_store %arg14[%46, %c0_20, %c0_21], %49 {strides = array<i32>} : memref<8x7x128xbf16, #tpu.memory_space<vmem>>, vector<1x7x128xbf16>,
    %c7_i32 = arith.constant 7 : i32
    %50 = arith.cmpi eq, %arg1, %c7_i32 : i32
    %51 = arith.extui %50 : i1 to i32
    %c0_i32_22 = arith.constant 0 : i32
    %52 = arith.cmpi ne, %51, %c0_i32_22 : i32
    scf.if %52 {
      %c0_23 = arith.constant 0 : index
      %c0_24 = arith.constant 0 : index
      %c0_25 = arith.constant 0 : index
      %53 = vector.load %arg14[%c0_23, %c0_24, %c0_25] : memref<8x7x128xbf16, #tpu.memory_space<vmem>>, vector<8x7x128xbf16>
      %54 = vector.shape_cast %53 : vector<8x7x128xbf16> to vector<8x896xbf16>
      %c0_26 = arith.constant 0 : index
      %c0_27 = arith.constant 0 : index
      %55 = vector.load %arg5[%c0_26, %c0_27] : memref<896x256xbf16, #tpu.memory_space<vmem>>, vector<896x256xbf16>
      %cst_28 = arith.constant dense<0.000000e+00> : vector<8x256xf32>
      %56 = tpu.matmul %54, %55, %cst_28 {dimension_numbers = #tpu.dot_dimension_numbers<[1], [0], [0], [1], [0, 0, 1, 1], [], []>} : vector<8x896xbf16>, vector<896x256xbf16>, vector<8x256xf32> -> vector<8x256xf32>
      %c0_29 = arith.constant 0 : index
      %c0_30 = arith.constant 0 : index
      %57 = vector.load %arg6[%c0_29, %c0_30] : memref<1x256xf32, #tpu.memory_space<vmem>>, vector<1x256xf32>
      %58 = vector.broadcast %57 : vector<1x256xf32> to vector<8x256xf32>
      %59 = arith.addf %56, %58 : vector<8x256xf32>
      %cst_31 = arith.constant 0.000000e+00 : f32
      %60 = vector.broadcast %cst_31 : f32 to vector<8x256xf32>
      %61 = arith.cmpf ogt, %59, %60 : vector<8x256xf32>
      %cst_32 = arith.constant 1.000000e-01 : f32
      %62 = vector.broadcast %cst_32 : f32 to vector<8x256xf32>
      %63 = arith.mulf %62, %59 : vector<8x256xf32>
      %64 = arith.select %61, %59, %63 : vector<8x256xi1>, vector<8x256xf32>
      %65 = arith.truncf %64 : vector<8x256xf32> to vector<8x256xbf16>
      %c0_33 = arith.constant 0 : index
      %c0_34 = arith.constant 0 : index
      %66 = vector.load %arg7[%c0_33, %c0_34] : memref<256x128xbf16, #tpu.memory_space<vmem>>, vector<256x128xbf16>
      %cst_35 = arith.constant dense<0.000000e+00> : vector<8x128xf32>
      %67 = tpu.matmul %65, %66, %cst_35 {dimension_numbers = #tpu.dot_dimension_numbers<[1], [0], [0], [1], [0, 0, 1, 1], [], []>} : vector<8x256xbf16>, vector<256x128xbf16>, vector<8x128xf32> -> vector<8x128xf32>
      %c0_36 = arith.constant 0 : index
      %c0_37 = arith.constant 0 : index
      %68 = vector.load %arg8[%c0_36, %c0_37] : memref<1x128xf32, #tpu.memory_space<vmem>>, vector<1x128xf32>
      %69 = vector.broadcast %68 : vector<1x128xf32> to vector<8x128xf32>
      %70 = arith.addf %67, %69 : vector<8x128xf32>
      %cst_38 = arith.constant 0.000000e+00 : f32
      %71 = vector.broadcast %cst_38 : f32 to vector<8x128xf32>
      %72 = arith.cmpf ogt, %70, %71 : vector<8x128xf32>
      %cst_39 = arith.constant 1.000000e-01 : f32
      %73 = vector.broadcast %cst_39 : f32 to vector<8x128xf32>
      %74 = arith.mulf %73, %70 : vector<8x128xf32>
      %75 = arith.select %72, %70, %74 : vector<8x128xi1>, vector<8x128xf32>
      %76 = arith.truncf %75 : vector<8x128xf32> to vector<8x128xbf16>
      %c0_40 = arith.constant 0 : index
      %c0_41 = arith.constant 0 : index
      %77 = vector.load %arg9[%c0_40, %c0_41] : memref<128x128xbf16, #tpu.memory_space<vmem>>, vector<128x128xbf16>
      %cst_42 = arith.constant dense<0.000000e+00> : vector<8x128xf32>
      %78 = tpu.matmul %76, %77, %cst_42 {dimension_numbers = #tpu.dot_dimension_numbers<[1], [0], [0], [1], [0, 0, 1, 1], [], []>} : vector<8x128xbf16>, vector<128x128xbf16>, vector<8x128xf32> -> vector<8x128xf32>
      %c0_43 = arith.constant 0 : index
      %c0_44 = arith.constant 0 : index
      %79 = vector.load %arg10[%c0_43, %c0_44] : memref<1x128xf32, #tpu.memory_space<vmem>>, vector<1x128xf32>
      %80 = vector.broadcast %79 : vector<1x128xf32> to vector<8x128xf32>
      %81 = arith.addf %78, %80 : vector<8x128xf32>
      %c0_45 = arith.constant 0 : index
      %c0_46 = arith.constant 0 : index
      %c0_47 = arith.constant 0 : index
      %82 = vector.load %arg11[%c0_45, %c0_46, %c0_47] : memref<1x8x128xf32, #tpu.memory_space<vmem>>, vector<1x8x128xf32>
      %83 = vector.shape_cast %82 : vector<1x8x128xf32> to vector<8x128xf32>
      %84 = vector.shape_cast %81 : vector<8x128xf32> to vector<1x8x128xf32>
      tpu.vector_store %arg11[%c0_45, %c0_46, %c0_47], %84 {strides = array<i32>} : memref<1x8x128xf32, #tpu.memory_space<vmem>>, vector<1x8x128xf32>,
    } else {
    }
    return
  }
  func.func @transform_0(%arg0: i32, %arg1: i32) -> (i32, i32, i32, i32) {
    %c0_i32 = arith.constant 0 : i32
    %c0_i32_0 = arith.constant 0 : i32
    %c0_i32_1 = arith.constant 0 : i32
    return %arg0, %arg1, %c0_i32, %c0_i32_0 : i32, i32, i32, i32
  }
  func.func @transform_1(%arg0: i32, %arg1: i32) -> (i32, i32) {
    %c0_i32 = arith.constant 0 : i32
    %c0_i32_0 = arith.constant 0 : i32
    %c0_i32_1 = arith.constant 0 : i32
    return %c0_i32, %c0_i32_0 : i32, i32
  }
  func.func @transform_2(%arg0: i32, %arg1: i32) -> (i32, i32) {
    %c0_i32 = arith.constant 0 : i32
    %c0_i32_0 = arith.constant 0 : i32
    %c0_i32_1 = arith.constant 0 : i32
    return %c0_i32, %c0_i32_0 : i32, i32
  }
  func.func @transform_3(%arg0: i32, %arg1: i32) -> (i32, i32) {
    %c0_i32 = arith.constant 0 : i32
    %c0_i32_0 = arith.constant 0 : i32
    %c0_i32_1 = arith.constant 0 : i32
    return %c0_i32, %c0_i32_0 : i32, i32
  }
  func.func @transform_4(%arg0: i32, %arg1: i32) -> (i32, i32) {
    %c0_i32 = arith.constant 0 : i32
    %c0_i32_0 = arith.constant 0 : i32
    %c0_i32_1 = arith.constant 0 : i32
    return %c0_i32, %c0_i32_0 : i32, i32
  }
  func.func @transform_5(%arg0: i32, %arg1: i32) -> (i32, i32) {
    %c0_i32 = arith.constant 0 : i32
    %c0_i32_0 = arith.constant 0 : i32
    %c0_i32_1 = arith.constant 0 : i32
    return %c0_i32, %c0_i32_0 : i32, i32
  }
  func.func @transform_6(%arg0: i32, %arg1: i32) -> (i32, i32) {
    %c0_i32 = arith.constant 0 : i32
    %c0_i32_0 = arith.constant 0 : i32
    %c0_i32_1 = arith.constant 0 : i32
    return %c0_i32, %c0_i32_0 : i32, i32
  }
  func.func @transform_7(%arg0: i32, %arg1: i32) -> (i32, i32) {
    %c0_i32 = arith.constant 0 : i32
    %c0_i32_0 = arith.constant 0 : i32
    %c0_i32_1 = arith.constant 0 : i32
    return %c0_i32, %c0_i32_0 : i32, i32
  }
  func.func @transform_8(%arg0: i32, %arg1: i32) -> (i32, i32) {
    %c0_i32 = arith.constant 0 : i32
    %c0_i32_0 = arith.constant 0 : i32
    %c0_i32_1 = arith.constant 0 : i32
    return %c0_i32, %c0_i32_0 : i32, i32
  }
  func.func @transform_9(%arg0: i32, %arg1: i32) -> (i32, i32, i32) {
    %c0_i32 = arith.constant 0 : i32
    %c0_i32_0 = arith.constant 0 : i32
    %c0_i32_1 = arith.constant 0 : i32
    return %arg0, %c0_i32, %c0_i32_0 : i32, i32, i32
  }
}

</mosaic_0001>

<llo_original>
// kernel: tpu_custom_call.1
$region0: #{tpu_custom_call.1}
  #allocation0 [shape = 'u32[]', space=smem, size = 0x4, offset = 0x4, fixed_abs, tag = 'smem constant byte address 0x4 - core index']
  #allocation1 [shape = 'u32[144,128]{1,0:T(1,128)}', space=vmem, size = 0x12000, scoped, tag = 'internal scratch']
  #allocation2 [shape = 'bf16[280,128]{1,0:T(8,128)(2,1)}', space=vmem, size = 0x11800, scoped, tag = 'scratch operand']
  #allocation3 [shape = 'f32[280,128]{1,0:T(8,128)}', space=vmem, size = 0x23000, scoped, tag = 'scratch operand']
  #allocation4 [shape = 'bf16[8,7,128]{2,1,0:T(8,128)(2,1)}', space=vmem, size = 0x4000, scoped, tag = 'scratch operand']
  %s0 = inlined_call_operand.hbm [shape: bf16[2,8,280,128], index: 0, kind: input, shape index: {}]
  %s1 = inlined_call_operand.hbm [shape: bf16[256,512], index: 1, kind: input, shape index: {}]
  %s2 = inlined_call_operand.hbm [shape: f32[1,512], index: 2, kind: input, shape index: {}]
  %s3 = inlined_call_operand.hbm [shape: bf16[896,256], index: 3, kind: input, shape index: {}]
  %s4 = inlined_call_operand.hbm [shape: f32[1,256], index: 4, kind: input, shape index: {}]
  %s5 = inlined_call_operand.hbm [shape: bf16[256,128], index: 5, kind: input, shape index: {}]
  %s6 = inlined_call_operand.hbm [shape: f32[1,128], index: 6, kind: input, shape index: {}]
  %s7 = inlined_call_operand.hbm [shape: bf16[128,128], index: 7, kind: input, shape index: {}]
  %s8 = inlined_call_operand.hbm [shape: f32[1,128], index: 8, kind: input, shape index: {}]
  %s9 = inlined_call_operand.hbm [shape: f32[2,8,128], index: 9, kind: output, shape index: {}]
  %s10 = sld [smem:[#allocation0]]
  $region113: #{tpu_custom_call.1} parent=0
    _
  %s12 = ssub.s32 1, %s10
  %s13 = scalar_select 0, %s12, %s10
  $region1: #{tpu_custom_call.1} parent=0
    #allocation5 [shape = 'u8[143360]{0}', space=vmem, size = 0x23000, scoped, tag = 'input window, operand 0']
    #allocation6 [shape = 's32[2]{0}', space=sflag, size = 0x8, scoped, tag = 'scoped memory for tpu_custom_call.1']
    #allocation7 [shape = 's32[2]{0}', space=sflag, size = 0x8, scoped, tag = 'scoped memory for tpu_custom_call.1']
    #allocation8 [shape = 'u8[262144]{0}', space=vmem, size = 0x40000, scoped, tag = 'input window, operand 1, single buffered']
    #allocation9 [shape = 's32[1]{0}', space=sflag, size = 0x4, scoped, tag = 'scoped memory for tpu_custom_call.1']
    #allocation10 [shape = 'u8[2048]{0}', space=vmem, size = 0x800, scoped, tag = 'input window, operand 2, single buffered']
    #allocation11 [shape = 'u8[458752]{0}', space=vmem, size = 0x70000, scoped, tag = 'input window, operand 3, single buffered']
    #allocation12 [shape = 's32[1]{0}', space=sflag, size = 0x4, scoped, tag = 'scoped memory for tpu_custom_call.1']
    #allocation13 [shape = 'u8[1024]{0}', space=vmem, size = 0x400, scoped, tag = 'input window, operand 4, single buffered']
    #allocation14 [shape = 'u8[65536]{0}', space=vmem, size = 0x10000, scoped, tag = 'input window, operand 5, single buffered']
    #allocation15 [shape = 's32[1]{0}', space=sflag, size = 0x4, scoped, tag = 'scoped memory for tpu_custom_call.1']
    #allocation16 [shape = 'u8[512]{0}', space=vmem, size = 0x400, scoped, tag = 'input window, operand 6, single buffered']
    #allocation17 [shape = 'u8[32768]{0}', space=vmem, size = 0x8000, scoped, tag = 'input window, operand 7, single buffered']
    #allocation18 [shape = 's32[1]{0}', space=sflag, size = 0x4, scoped, tag = 'scoped memory for tpu_custom_call.1']
    #allocation19 [shape = 'u8[512]{0}', space=vmem, size = 0x400, scoped, tag = 'input window, operand 8, single buffered']
    #allocation20 [shape = 'u8[8192]{0}', space=vmem, size = 0x2000, scoped, tag = 'output window, operand 0']
    %14 = vsyncpa [#allocation6], 0
    %s15 = scalar_lea.sflag [#allocation6], 1
    %16 = vsyncpa %s15, 0
    %17 = vsyncpa [#allocation9], 0
    %18 = vsyncpa [#allocation12], 0
    %19 = vsyncpa [#allocation15], 0
    %20 = vsyncpa [#allocation18], 0
    %21 = vsyncpa [#allocation7], 0
    %s22 = scalar_lea.sflag [#allocation7], 1
    %23 = vsyncpa %s22, 0
    loop: start=0, step=1, limit=18
    $region2: #{tpu_custom_call.1} parent=1 // loop_pre_header
      _
    $region3: #{tpu_custom_call.1} parent=1 // loop_header
      %s25 = sphi 0, %s29
      %p26 = scmp.ge.s32.totalorder %s25, 18
      %s32 = sphi 0, %s44
      %s33 = sphi 0, %s40
      %s34 = sphi 0, %s32
      %s35 = sphi 0, %s33
      %s36 = sphi 0, %s34
      %s37 = sphi 0, %s35
      %s49 = sphi 0, %s51
      %s52 = sphi 0, %s49
      %s53 = sphi 0, %s52
      %s69 = sphi 0, %s53
      %s73 = sphi 0, %s73
      %s75 = sphi 0, %s73
      %s76 = sphi 0, %s75
      %s90 = sphi 0, %s76
      %s94 = sphi 0, %s94
      %s96 = sphi 0, %s94
      %s97 = sphi 0, %s96
      %s111 = sphi 0, %s97
      %s115 = sphi 0, %s115
      %s117 = sphi 0, %s115
      %s118 = sphi 0, %s117
      %s132 = sphi 0, %s118
      %s136 = sphi 0, %s136
      %s138 = sphi 0, %s136
      %s139 = sphi 0, %s138
      %s153 = sphi 0, %s139
      %s157 = sphi 0, %s157
      %s159 = sphi 0, %s157
      %s160 = sphi 0, %s159
      %s174 = sphi 0, %s160
      %s178 = sphi 0, %s178
      %s180 = sphi 0, %s178
      %s181 = sphi 0, %s180
      %s195 = sphi 0, %s181
      %s199 = sphi 0, %s199
      %s201 = sphi 0, %s199
      %s202 = sphi 0, %s201
      %s216 = sphi 0, %s202
      %s220 = sphi 0, %s220
      %s222 = sphi 0, %s220
      %s223 = sphi 0, %s222
      %s237 = sphi 0, %s223
      %s243 = sphi 0, %s245
      %s246 = sphi 0, %s243
      %s247 = sphi 0, %s246
      %s263 = sphi 0, %s247
    $region4: #{tpu_custom_call.1} parent=1 // loop_header_branch
      %28 = sbr.rel (%p26) target = $region8
    $region5: #{tpu_custom_call.1} parent=1 // loop_body
      %s30 = ssub.s32 %s25, 1
      %s31 = ssub.s32 %s25, 2
      %s38 = sadd.s32 1, %s33
      %p39 = scmp.ge.s32.totalorder %s38, 8
      %s40 = scalar_select %p39, 0, %s38
      %s41 = sadd.s32 1, %s32
      %s42 = scalar_select %p39, %s41, %s32
      %p43 = scmp.ge.s32.totalorder %s42, 2
      %s44 = scalar_select %p43, 0, %s42
      %s45 = ssub.s32 %s32, %s44
      %s46 = ssub.s32 %s33, %s40
      %s47 = sor.u32 %s45, %s46
      %p48 = scmp.eq.s32.totalorder %s47, 0
      %s50 = sadd.s32 %s49, 1
      %s51 = scalar_select %p48, %s49, %s50
      %p54 = pneg %p48
      %p55 = scmp.eq.s32.totalorder %s25, 15
      %p56 = por %p54, %p55
      %p57 = scmp.ne.s32.totalorder %s49, %s52
      %p58 = scmp.eq.s32.totalorder %s25, 0
      %p59 = por %p57, %p58
      %p60 = scmp.ne.s32.totalorder %s49, %s52
      %p61 = scmp.eq.s32.totalorder %s30, 15
      %p62 = por %p60, %p61
      %p63 = scmp.ne.s32.totalorder %s52, %s53
      %p64 = scmp.eq.s32.totalorder %s30, 0
      %p65 = por %p63, %p64
      %p66 = scmp.ne.s32.totalorder %s52, %s53
      %p67 = scmp.eq.s32.totalorder %s31, 15
      %p68 = por %p66, %p67
      %p70 = scmp.ne.s32.totalorder %s53, %s69
      %p71 = scmp.eq.s32.totalorder %s31, 0
      %p72 = por %p70, %p71
      %s74 = sadd.s32 %s73, 1
      %p77 = scmp.eq.s32.totalorder %s25, 15
      %p78 = scmp.ne.s32.totalorder %s73, %s75
      %p79 = scmp.eq.s32.totalorder %s25, 0
      %p80 = por %p78, %p79
      %p81 = scmp.ne.s32.totalorder %s73, %s75
      %p82 = scmp.eq.s32.totalorder %s30, 15
      %p83 = por %p81, %p82
      %p84 = scmp.ne.s32.totalorder %s75, %s76
      %p85 = scmp.eq.s32.totalorder %s30, 0
      %p86 = por %p84, %p85
      %p87 = scmp.ne.s32.totalorder %s75, %s76
      %p88 = scmp.eq.s32.totalorder %s31, 15
      %p89 = por %p87, %p88
      %p91 = scmp.ne.s32.totalorder %s76, %s90
      %p92 = scmp.eq.s32.totalorder %s31, 0
      %p93 = por %p91, %p92
      %s95 = sadd.s32 %s94, 1
      %p98 = scmp.eq.s32.totalorder %s25, 15
      %p99 = scmp.ne.s32.totalorder %s94, %s96
      %p100 = scmp.eq.s32.totalorder %s25, 0
      %p101 = por %p99, %p100
      %p102 = scmp.ne.s32.totalorder %s94, %s96
      %p103 = scmp.eq.s32.totalorder %s30, 15
      %p104 = por %p102, %p103
      %p105 = scmp.ne.s32.totalorder %s96, %s97
      %p106 = scmp.eq.s32.totalorder %s30, 0
      %p107 = por %p105, %p106
      %p108 = scmp.ne.s32.totalorder %s96, %s97
      %p109 = scmp.eq.s32.totalorder %s31, 15
      %p110 = por %p108, %p109
      %p112 = scmp.ne.s32.totalorder %s97, %s111
      %p113 = scmp.eq.s32.totalorder %s31, 0
      %p114 = por %p112, %p113
      %s116 = sadd.s32 %s115, 1
      %p119 = scmp.eq.s32.totalorder %s25, 15
      %p120 = scmp.ne.s32.totalorder %s115, %s117
      %p121 = scmp.eq.s32.totalorder %s25, 0
      %p122 = por %p120, %p121
      %p123 = scmp.ne.s32.totalorder %s115, %s117
      %p124 = scmp.eq.s32.totalorder %s30, 15
      %p125 = por %p123, %p124
      %p126 = scmp.ne.s32.totalorder %s117, %s118
      %p127 = scmp.eq.s32.totalorder %s30, 0
      %p128 = por %p126, %p127
      %p129 = scmp.ne.s32.totalorder %s117, %s118
      %p130 = scmp.eq.s32.totalorder %s31, 15
      %p131 = por %p129, %p130
      %p133 = scmp.ne.s32.totalorder %s118, %s132
      %p134 = scmp.eq.s32.totalorder %s31, 0
      %p135 = por %p133, %p134
      %s137 = sadd.s32 %s136, 1
      %p140 = scmp.eq.s32.totalorder %s25, 15
      %p141 = scmp.ne.s32.totalorder %s136, %s138
      %p142 = scmp.eq.s32.totalorder %s25, 0
      %p143 = por %p141, %p142
      %p144 = scmp.ne.s32.totalorder %s136, %s138
      %p145 = scmp.eq.s32.totalorder %s30, 15
      %p146 = por %p144, %p145
      %p147 = scmp.ne.s32.totalorder %s138, %s139
      %p148 = scmp.eq.s32.totalorder %s30, 0
      %p149 = por %p147, %p148
      %p150 = scmp.ne.s32.totalorder %s138, %s139
      %p151 = scmp.eq.s32.totalorder %s31, 15
      %p152 = por %p150, %p151
      %p154 = scmp.ne.s32.totalorder %s139, %s153
      %p155 = scmp.eq.s32.totalorder %s31, 0
      %p156 = por %p154, %p155
      %s158 = sadd.s32 %s157, 1
      %p161 = scmp.eq.s32.totalorder %s25, 15
      %p162 = scmp.ne.s32.totalorder %s157, %s159
      %p163 = scmp.eq.s32.totalorder %s25, 0
      %p164 = por %p162, %p163
      %p165 = scmp.ne.s32.totalorder %s157, %s159
      %p166 = scmp.eq.s32.totalorder %s30, 15
      %p167 = por %p165, %p166
      %p168 = scmp.ne.s32.totalorder %s159, %s160
      %p169 = scmp.eq.s32.totalorder %s30, 0
      %p170 = por %p168, %p169
      %p171 = scmp.ne.s32.totalorder %s159, %s160
      %p172 = scmp.eq.s32.totalorder %s31, 15
      %p173 = por %p171, %p172
      %p175 = scmp.ne.s32.totalorder %s160, %s174
      %p176 = scmp.eq.s32.totalorder %s31, 0
      %p177 = por %p175, %p176
      %s179 = sadd.s32 %s178, 1
      %p182 = scmp.eq.s32.totalorder %s25, 15
      %p183 = scmp.ne.s32.totalorder %s178, %s180
      %p184 = scmp.eq.s32.totalorder %s25, 0
      %p185 = por %p183, %p184
      %p186 = scmp.ne.s32.totalorder %s178, %s180
      %p187 = scmp.eq.s32.totalorder %s30, 15
      %p188 = por %p186, %p187
      %p189 = scmp.ne.s32.totalorder %s180, %s181
      %p190 = scmp.eq.s32.totalorder %s30, 0
      %p191 = por %p189, %p190
      %p192 = scmp.ne.s32.totalorder %s180, %s181
      %p193 = scmp.eq.s32.totalorder %s31, 15
      %p194 = por %p192, %p193
      %p196 = scmp.ne.s32.totalorder %s181, %s195
      %p197 = scmp.eq.s32.totalorder %s31, 0
      %p198 = por %p196, %p197
      %s200 = sadd.s32 %s199, 1
      %p203 = scmp.eq.s32.totalorder %s25, 15
      %p204 = scmp.ne.s32.totalorder %s199, %s201
      %p205 = scmp.eq.s32.totalorder %s25, 0
      %p206 = por %p204, %p205
      %p207 = scmp.ne.s32.totalorder %s199, %s201
      %p208 = scmp.eq.s32.totalorder %s30, 15
      %p209 = por %p207, %p208
      %p210 = scmp.ne.s32.totalorder %s201, %s202
      %p211 = scmp.eq.s32.totalorder %s30, 0
      %p212 = por %p210, %p211
      %p213 = scmp.ne.s32.totalorder %s201, %s202
      %p214 = scmp.eq.s32.totalorder %s31, 15
      %p215 = por %p213, %p214
      %p217 = scmp.ne.s32.totalorder %s202, %s216
      %p218 = scmp.eq.s32.totalorder %s31, 0
      %p219 = por %p217, %p218
      %s221 = sadd.s32 %s220, 1
      %p224 = scmp.eq.s32.totalorder %s25, 15
      %p225 = scmp.ne.s32.totalorder %s220, %s222
      %p226 = scmp.eq.s32.totalorder %s25, 0
      %p227 = por %p225, %p226
      %p228 = scmp.ne.s32.totalorder %s220, %s222
      %p229 = scmp.eq.s32.totalorder %s30, 15
      %p230 = por %p228, %p229
      %p231 = scmp.ne.s32.totalorder %s222, %s223
      %p232 = scmp.eq.s32.totalorder %s30, 0
      %p233 = por %p231, %p232
      %p234 = scmp.ne.s32.totalorder %s222, %s223
      %p235 = scmp.eq.s32.totalorder %s31, 15
      %p236 = por %p234, %p235
      %p238 = scmp.ne.s32.totalorder %s223, %s237
      %p239 = scmp.eq.s32.totalorder %s31, 0
      %p240 = por %p238, %p239
      %s241 = ssub.s32 %s32, %s44
      %p242 = scmp.eq.s32.totalorder %s241, 0
      %s244 = sadd.s32 %s243, 1
      %s245 = scalar_select %p242, %s243, %s244
      %p248 = pneg %p242
      %p249 = scmp.eq.s32.totalorder %s25, 15
      %p250 = por %p248, %p249
      %p251 = scmp.ne.s32.totalorder %s243, %s246
      %p252 = scmp.eq.s32.totalorder %s25, 0
      %p253 = por %p251, %p252
      %p254 = scmp.ne.s32.totalorder %s243, %s246
      %p255 = scmp.eq.s32.totalorder %s30, 15
      %p256 = por %p254, %p255
      %p257 = scmp.ne.s32.totalorder %s246, %s247
      %p258 = scmp.eq.s32.totalorder %s30, 0
      %p259 = por %p257, %p258
      %p260 = scmp.ne.s32.totalorder %s246, %s247
      %p261 = scmp.eq.s32.totalorder %s31, 15
      %p262 = por %p260, %p261
      %p264 = scmp.ne.s32.totalorder %s247, %s263
      %p265 = scmp.eq.s32.totalorder %s31, 0
      %p266 = por %p264, %p265
      %p267 = scmp.le.s32.totalorder 1, %s25
      %p268 = scmp.lt.s32.totalorder %s25, 17
      %p269 = pnand %p267, %p268
      %p270 = pneg %p269
      // Predicated region
      $region9: #{tpu_custom_call.1} parent=5 // pred_check
        _
      $region10: #{tpu_custom_call.1} parent=5 // pred_check_branch
        %272 = sbr.rel (%p269) target = $region12
      $region11: #{tpu_custom_call.1} parent=5 // pred_region
        %s273 = ssub.s32 %s25, 1
        // Predicated region
        $region13: #{tpu_custom_call.1} parent=11 // pred_check
          %p274 = pneg %p86
        $region14: #{tpu_custom_call.1} parent=11 // pred_check_branch
          %276 = sbr.rel (%p274) target = $region16
        $region15: #{tpu_custom_call.1} parent=11 // pred_region
          %s278 = ssub.s32 8192, 8192
          %279 = vsyncadd [#allocation9], %s278
          %s280 = sshll.u32 [#allocation8], 4
          %s281 = int_to_ptr.vmem [resolvable:$true] %s280
          %286 = dma.hbm_to_vmem [thread:$0]  %s1, 8192, %s281, [#allocation9], 256, 256, 16
        $region16: #{tpu_custom_call.1} parent=11 // pred_fallthru
          _
        // Predicated region
        $region17: #{tpu_custom_call.1} parent=11 // pred_check
          %p287 = pneg %p107
        $region18: #{tpu_custom_call.1} parent=11 // pred_check_branch
          %289 = sbr.rel (%p287) target = $region20
        $region19: #{tpu_custom_call.1} parent=11 // pred_region
          %s291 = ssub.s32 64, 64
          %292 = vsyncadd [#allocation9], %s291
          %s294 = sshll.u32 [#allocation10], 4
          %s295 = int_to_ptr.vmem [resolvable:$true] %s294
          %297 = dma.hbm_to_vmem [thread:$0]  %s2, 64, %s295, [#allocation9]
        $region20: #{tpu_custom_call.1} parent=11 // pred_fallthru
          _
        // Predicated region
        $region21: #{tpu_custom_call.1} parent=11 // pred_check
          %p298 = pneg %p128
        $region22: #{tpu_custom_call.1} parent=11 // pred_check_branch
          %300 = sbr.rel (%p298) target = $region24
        $region23: #{tpu_custom_call.1} parent=11 // pred_region
          %s302 = ssub.s32 14336, 14336
          %303 = vsyncadd [#allocation12], %s302
          %s304 = sshll.u32 [#allocation11], 4
          %s305 = int_to_ptr.vmem [resolvable:$true] %s304
          %310 = dma.hbm_to_vmem [thread:$0]  %s3, 14336, %s305, [#allocation12], 128, 128, 8
        $region24: #{tpu_custom_call.1} parent=11 // pred_fallthru
          _
        // Predicated region
        $region25: #{tpu_custom_call.1} parent=11 // pred_check
          %p311 = pneg %p149
        $region26: #{tpu_custom_call.1} parent=11 // pred_check_branch
          %313 = sbr.rel (%p311) target = $region28
        $region27: #{tpu_custom_call.1} parent=11 // pred_region
          %s315 = ssub.s32 32, 32
          %316 = vsyncadd [#allocation12], %s315
          %s318 = sshll.u32 [#allocation13], 4
          %s319 = int_to_ptr.vmem [resolvable:$true] %s318
          %321 = dma.hbm_to_vmem [thread:$0]  %s4, 32, %s319, [#allocation12]
        $region28: #{tpu_custom_call.1} parent=11 // pred_fallthru
          _
        // Predicated region
        $region29: #{tpu_custom_call.1} parent=11 // pred_check
          %p322 = pneg %p170
        $region30: #{tpu_custom_call.1} parent=11 // pred_check_branch
          %324 = sbr.rel (%p322) target = $region32
        $region31: #{tpu_custom_call.1} parent=11 // pred_region
          %s326 = ssub.s32 2048, 2048
          %327 = vsyncadd [#allocation15], %s326
          %s328 = sshll.u32 [#allocation14], 4
          %s329 = int_to_ptr.vmem [resolvable:$true] %s328
          %334 = dma.hbm_to_vmem [thread:$0]  %s5, 2048, %s329, [#allocation15], 64, 64, 4
        $region32: #{tpu_custom_call.1} parent=11 // pred_fallthru
          _
        // Predicated region
        $region33: #{tpu_custom_call.1} parent=11 // pred_check
          %p335 = pneg %p191
        $region34: #{tpu_custom_call.1} parent=11 // pred_check_branch
          %337 = sbr.rel (%p335) target = $region36
        $region35: #{tpu_custom_call.1} parent=11 // pred_region
          %s339 = ssub.s32 16, 16
          %340 = vsyncadd [#allocation15], %s339
          %s342 = sshll.u32 [#allocation16], 4
          %s343 = int_to_ptr.vmem [resolvable:$true] %s342
          %345 = dma.hbm_to_vmem [thread:$0]  %s6, 16, %s343, [#allocation15]
        $region36: #{tpu_custom_call.1} parent=11 // pred_fallthru
          _
        // Predicated region
        $region37: #{tpu_custom_call.1} parent=11 // pred_check
          %p346 = pneg %p212
        $region38: #{tpu_custom_call.1} parent=11 // pred_check_branch
          %348 = sbr.rel (%p346) target = $region40
        $region39: #{tpu_custom_call.1} parent=11 // pred_region
          %s350 = ssub.s32 1024, 1024
          %351 = vsyncadd [#allocation18], %s350
          %s352 = sshll.u32 [#allocation17], 4
          %s353 = int_to_ptr.vmem [resolvable:$true] %s352
          %358 = dma.hbm_to_vmem [thread:$0]  %s7, 1024, %s353, [#allocation18], 64, 64, 4
        $region40: #{tpu_custom_call.1} parent=11 // pred_fallthru
          _
        // Predicated region
        $region41: #{tpu_custom_call.1} parent=11 // pred_check
          %p359 = pneg %p233
        $region42: #{tpu_custom_call.1} parent=11 // pred_check_branch
          %361 = sbr.rel (%p359) target = $region44
        $region43: #{tpu_custom_call.1} parent=11 // pred_region
          %s363 = ssub.s32 16, 16
          %364 = vsyncadd [#allocation18], %s363
          %s366 = sshll.u32 [#allocation19], 4
          %s367 = int_to_ptr.vmem [resolvable:$true] %s366
          %369 = dma.hbm_to_vmem [thread:$0]  %s8, 16, %s367, [#allocation18]
        $region44: #{tpu_custom_call.1} parent=11 // pred_fallthru
          _
      $region12: #{tpu_custom_call.1} parent=5 // pred_fallthru
        _
      %p370 = scmp.lt.s32.totalorder %s25, 16
      // Predicated region
      $region45: #{tpu_custom_call.1} parent=5 // pred_check
        %p371 = pneg %p370
      $region46: #{tpu_custom_call.1} parent=5 // pred_check_branch
        %373 = sbr.rel (%p371) target = $region48
      $region47: #{tpu_custom_call.1} parent=5 // pred_region
        // Predicated region
        $region49: #{tpu_custom_call.1} parent=47 // pred_check
          %p374 = pneg %p59
        $region50: #{tpu_custom_call.1} parent=47 // pred_check_branch
          %376 = sbr.rel (%p374) target = $region52
        $region51: #{tpu_custom_call.1} parent=47 // pred_region
          %s377 = sand.u32 %s49, 1
          %s378 = scalar_lea.sflag [#allocation6], %s377
          %s379 = sand.u32 %s49, 1
          %s380 = smul.addr %s379, 140
          %s381 = scalar_lea.vmem [#allocation5], %s380
          %s383 = ssub.s32 2240, 2240
          %384 = vsyncadd %s378, %s383
          %s385 = smul.addr %s33, 35
          %s386 = smul.addr %s32, 280
          %s387 = sadd.s32 %s385, %s386
          %s388 = smul.addr %s387, 64
          %s389 = scalar_lea.hbm %s0, %s388
          %s390 = sshll.u32 %s381, 4
          %s391 = int_to_ptr.vmem [resolvable:$true] %s390
          %396 = dma.hbm_to_vmem [thread:$0]  %s389, 2240, %s391, %s378, 64, 64, 4
        $region52: #{tpu_custom_call.1} parent=47 // pred_fallthru
          _
      $region48: #{tpu_custom_call.1} parent=5 // pred_fallthru
        _
      %p397 = scmp.le.s32.totalorder 1, %s25
      %p398 = scmp.lt.s32.totalorder %s25, 17
      %p399 = pnand %p397, %p398
      %p400 = pneg %p399
      // Predicated region
      $region53: #{tpu_custom_call.1} parent=5 // pred_check
        _
      $region54: #{tpu_custom_call.1} parent=5 // pred_check_branch
        %402 = sbr.rel (%p399) target = $region56
      $region55: #{tpu_custom_call.1} parent=5 // pred_region
        %s403 = ssub.s32 %s25, 1
        %s404 = sand.u32 %s52, 1
        %s405 = scalar_lea.sflag [#allocation6], %s404
        %s406 = sand.u32 %s52, 1
        %s407 = smul.addr %s406, 140
        %s408 = scalar_lea.vmem [#allocation5], %s407
        // Predicated region
        $region57: #{tpu_custom_call.1} parent=55 // pred_check
          %p409 = pneg %p65
        $region58: #{tpu_custom_call.1} parent=55 // pred_check_branch
          %411 = sbr.rel (%p409) target = $region60
        $region59: #{tpu_custom_call.1} parent=55 // pred_region
          %412 = dma.done %s405, 2240
        $region60: #{tpu_custom_call.1} parent=55 // pred_fallthru
          _
        // Predicated region
        $region61: #{tpu_custom_call.1} parent=55 // pred_check
          %p413 = pneg %p86
        $region62: #{tpu_custom_call.1} parent=55 // pred_check_branch
          %415 = sbr.rel (%p413) target = $region64
        $region63: #{tpu_custom_call.1} parent=55 // pred_region
          %416 = dma.done [#allocation9], 8192
        $region64: #{tpu_custom_call.1} parent=55 // pred_fallthru
          _
        // Predicated region
        $region65: #{tpu_custom_call.1} parent=55 // pred_check
          %p417 = pneg %p107
        $region66: #{tpu_custom_call.1} parent=55 // pred_check_branch
          %419 = sbr.rel (%p417) target = $region68
        $region67: #{tpu_custom_call.1} parent=55 // pred_region
          %420 = dma.done [#allocation9], 64
        $region68: #{tpu_custom_call.1} parent=55 // pred_fallthru
          _
        // Predicated region
        $region69: #{tpu_custom_call.1} parent=55 // pred_check
          %p421 = pneg %p128
        $region70: #{tpu_custom_call.1} parent=55 // pred_check_branch
          %423 = sbr.rel (%p421) target = $region72
        $region71: #{tpu_custom_call.1} parent=55 // pred_region
          %424 = dma.done [#allocation12], 14336
        $region72: #{tpu_custom_call.1} parent=55 // pred_fallthru
          _
        // Predicated region
        $region73: #{tpu_custom_call.1} parent=55 // pred_check
          %p425 = pneg %p149
        $region74: #{tpu_custom_call.1} parent=55 // pred_check_branch
          %427 = sbr.rel (%p425) target = $region76
        $region75: #{tpu_custom_call.1} parent=55 // pred_region
          %428 = dma.done [#allocation12], 32
        $region76: #{tpu_custom_call.1} parent=55 // pred_fallthru
          _
        // Predicated region
        $region77: #{tpu_custom_call.1} parent=55 // pred_check
          %p429 = pneg %p170
        $region78: #{tpu_custom_call.1} parent=55 // pred_check_branch
          %431 = sbr.rel (%p429) target = $region80
        $region79: #{tpu_custom_call.1} parent=55 // pred_region
          %432 = dma.done [#allocation15], 2048
        $region80: #{tpu_custom_call.1} parent=55 // pred_fallthru
          _
        // Predicated region
        $region81: #{tpu_custom_call.1} parent=55 // pred_check
          %p433 = pneg %p191
        $region82: #{tpu_custom_call.1} parent=55 // pred_check_branch
          %435 = sbr.rel (%p433) target = $region84
        $region83: #{tpu_custom_call.1} parent=55 // pred_region
          %436 = dma.done [#allocation15], 16
        $region84: #{tpu_custom_call.1} parent=55 // pred_fallthru
          _
        // Predicated region
        $region85: #{tpu_custom_call.1} parent=55 // pred_check
          %p437 = pneg %p212
        $region86: #{tpu_custom_call.1} parent=55 // pred_check_branch
          %439 = sbr.rel (%p437) target = $region88
        $region87: #{tpu_custom_call.1} parent=55 // pred_region
          %440 = dma.done [#allocation18], 1024
        $region88: #{tpu_custom_call.1} parent=55 // pred_fallthru
          _
        // Predicated region
        $region89: #{tpu_custom_call.1} parent=55 // pred_check
          %p441 = pneg %p233
        $region90: #{tpu_custom_call.1} parent=55 // pred_check_branch
          %443 = sbr.rel (%p441) target = $region92
        $region91: #{tpu_custom_call.1} parent=55 // pred_region
          %444 = dma.done [#allocation18], 16
        $region92: #{tpu_custom_call.1} parent=55 // pred_fallthru
          _
        %s445 = sand.u32 %s52, 1
        %s446 = scalar_lea.sflag [#allocation6], %s445
        %s447 = sand.u32 %s52, 1
        %s448 = smul.addr %s447, 140
        %s449 = scalar_lea.vmem [#allocation5], %s448
        %p450 = pneg %p65
        %p451 = pneg %p62
        %p452 = pneg %p86
        %p453 = pneg %p83
        %p454 = pneg %p107
        %p455 = pneg %p104
        %p456 = pneg %p128
        %p457 = pneg %p125
        %p458 = pneg %p149
        %p459 = pneg %p146
        %p460 = pneg %p170
        %p461 = pneg %p167
        %p462 = pneg %p191
        %p463 = pneg %p188
        %p464 = pneg %p212
        %p465 = pneg %p209
        %p466 = pneg %p233
        %p467 = pneg %p230
        %p468 = pneg %p259
        %p469 = pneg %p256
        %s470 = sand.u32 %s246, 1
        %s471 = scalar_lea.sflag [#allocation7], %s470
        %s472 = sand.u32 %s246, 1
        %s473 = smul.addr %s472, 8
        %s474 = scalar_lea.vmem [#allocation20], %s473
        %p478 = scmp.eq.s32.totalorder %s35, 0
        // Predicated region
        $region93: #{tpu_custom_call.1} parent=55 // pred_check
          %p479 = pneg %p478
        $region94: #{tpu_custom_call.1} parent=55 // pred_check_branch
          %481 = sbr.rel (%p479) target = $region96
        $region95: #{tpu_custom_call.1} parent=55 // pred_region
          %482 = vst [vmem:[#allocation2] sm:$0xf] 0
          %483 = vst [vmem:[#allocation2 + $0x4] sm:$0xf] 0
          %484 = vst [vmem:[#allocation2 + $0x8] sm:$0xf] 0
          %485 = vst [vmem:[#allocation2 + $0xc] sm:$0xf] 0
          %486 = vst [vmem:[#allocation2 + $0x10] sm:$0xf] 0
          %487 = vst [vmem:[#allocation2 + $0x14] sm:$0xf] 0
          %488 = vst [vmem:[#allocation2 + $0x18] sm:$0xf] 0
          %489 = vst [vmem:[#allocation2 + $0x1c] sm:$0xf] 0
          %490 = vst [vmem:[#allocation2 + $0x20] sm:$0xf] 0
          %491 = vst [vmem:[#allocation2 + $0x24] sm:$0xf] 0
          %492 = vst [vmem:[#allocation2 + $0x28] sm:$0xf] 0
          %493 = vst [vmem:[#allocation2 + $0x2c] sm:$0xf] 0
          %494 = vst [vmem:[#allocation2 + $0x30] sm:$0xf] 0
          %495 = vst [vmem:[#allocation2 + $0x34] sm:$0xf] 0
          %496 = vst [vmem:[#allocation2 + $0x38] sm:$0xf] 0
          %497 = vst [vmem:[#allocation2 + $0x3c] sm:$0xf] 0
          %498 = vst [vmem:[#allocation2 + $0x40] sm:$0xf] 0
          %499 = vst [vmem:[#allocation2 + $0x44] sm:$0xf] 0
          %500 = vst [vmem:[#allocation2 + $0x48] sm:$0xf] 0
          %501 = vst [vmem:[#allocation2 + $0x4c] sm:$0xf] 0
          %502 = vst [vmem:[#allocation2 + $0x50] sm:$0xf] 0
          %503 = vst [vmem:[#allocation2 + $0x54] sm:$0xf] 0
          %504 = vst [vmem:[#allocation2 + $0x58] sm:$0xf] 0
          %505 = vst [vmem:[#allocation2 + $0x5c] sm:$0xf] 0
          %506 = vst [vmem:[#allocation2 + $0x60] sm:$0xf] 0
          %507 = vst [vmem:[#allocation2 + $0x64] sm:$0xf] 0
          %508 = vst [vmem:[#allocation2 + $0x68] sm:$0xf] 0
          %509 = vst [vmem:[#allocation2 + $0x6c] sm:$0xf] 0
          %510 = vst [vmem:[#allocation2 + $0x70] sm:$0xf] 0
          %511 = vst [vmem:[#allocation2 + $0x74] sm:$0xf] 0
          %512 = vst [vmem:[#allocation2 + $0x78] sm:$0xf] 0
          %513 = vst [vmem:[#allocation2 + $0x7c] sm:$0xf] 0
          %514 = vst [vmem:[#allocation2 + $0x80] sm:$0xf] 0
          %515 = vst [vmem:[#allocation2 + $0x84] sm:$0xf] 0
          %516 = vst [vmem:[#allocation2 + $0x88] sm:$0xf] 0
          %517 = vst [vmem:[#allocation3] sm:$0xff] 0.0
          %518 = vst [vmem:[#allocation3 + $0x8] sm:$0xff] 0.0
          %519 = vst [vmem:[#allocation3 + $0x10] sm:$0xff] 0.0
          %520 = vst [vmem:[#allocation3 + $0x18] sm:$0xff] 0.0
          %521 = vst [vmem:[#allocation3 + $0x20] sm:$0xff] 0.0
          %522 = vst [vmem:[#allocation3 + $0x28] sm:$0xff] 0.0
          %523 = vst [vmem:[#allocation3 + $0x30] sm:$0xff] 0.0
          %524 = vst [vmem:[#allocation3 + $0x38] sm:$0xff] 0.0
          %525 = vst [vmem:[#allocation3 + $0x40] sm:$0xff] 0.0
          %526 = vst [vmem:[#allocation3 + $0x48] sm:$0xff] 0.0
          %527 = vst [vmem:[#allocation3 + $0x50] sm:$0xff] 0.0
          %528 = vst [vmem:[#allocation3 + $0x58] sm:$0xff] 0.0
          %529 = vst [vmem:[#allocation3 + $0x60] sm:$0xff] 0.0
          %530 = vst [vmem:[#allocation3 + $0x68] sm:$0xff] 0.0
          %531 = vst [vmem:[#allocation3 + $0x70] sm:$0xff] 0.0
          %532 = vst [vmem:[#allocation3 + $0x78] sm:$0xff] 0.0
          %533 = vst [vmem:[#allocation3 + $0x80] sm:$0xff] 0.0
          %534 = vst [vmem:[#allocation3 + $0x88] sm:$0xff] 0.0
          %535 = vst [vmem:[#allocation3 + $0x90] sm:$0xff] 0.0
          %536 = vst [vmem:[#allocation3 + $0x98] sm:$0xff] 0.0
          %537 = vst [vmem:[#allocation3 + $0xa0] sm:$0xff] 0.0
          %538 = vst [vmem:[#allocation3 + $0xa8] sm:$0xff] 0.0
          %539 = vst [vmem:[#allocation3 + $0xb0] sm:$0xff] 0.0
          %540 = vst [vmem:[#allocation3 + $0xb8] sm:$0xff] 0.0
          %541 = vst [vmem:[#allocation3 + $0xc0] sm:$0xff] 0.0
          %542 = vst [vmem:[#allocation3 + $0xc8] sm:$0xff] 0.0
          %543 = vst [vmem:[#allocation3 + $0xd0] sm:$0xff] 0.0
          %544 = vst [vmem:[#allocation3 + $0xd8] sm:$0xff] 0.0
          %545 = vst [vmem:[#allocation3 + $0xe0] sm:$0xff] 0.0
          %546 = vst [vmem:[#allocation3 + $0xe8] sm:$0xff] 0.0
          %547 = vst [vmem:[#allocation3 + $0xf0] sm:$0xff] 0.0
          %548 = vst [vmem:[#allocation3 + $0xf8] sm:$0xff] 0.0
          %549 = vst [vmem:[#allocation3 + $0x100] sm:$0xff] 0.0
          %550 = vst [vmem:[#allocation3 + $0x108] sm:$0xff] 0.0
          %551 = vst [vmem:[#allocation3 + $0x110] sm:$0xff] 0.0
        $region96: #{tpu_custom_call.1} parent=55 // pred_fallthru
          _
        %v552 = vld [vmem:[%s408] sm:$0xf]
        %v553 = vld [vmem:[%s408 + $0x4] sm:$0xf]
        %v554 = vld [vmem:[%s408 + $0x8] sm:$0xf]
        %v555 = vld [vmem:[%s408 + $0xc] sm:$0xf]
        %v556 = vld [vmem:[%s408 + $0x10] sm:$0xf]
        %v557 = vld [vmem:[%s408 + $0x14] sm:$0xf]
        %v558 = vld [vmem:[%s408 + $0x18] sm:$0xf]
        %v559 = vld [vmem:[%s408 + $0x1c] sm:$0xf]
        %v560 = vld [vmem:[%s408 + $0x20] sm:$0xf]
        %v561 = vld [vmem:[%s408 + $0x24] sm:$0xf]
        %v562 = vld [vmem:[%s408 + $0x28] sm:$0xf]
        %v563 = vld [vmem:[%s408 + $0x2c] sm:$0xf]
        %v564 = vld [vmem:[%s408 + $0x30] sm:$0xf]
        %v565 = vld [vmem:[%s408 + $0x34] sm:$0xf]
        %v566 = vld [vmem:[%s408 + $0x38] sm:$0xf]
        %v567 = vld [vmem:[%s408 + $0x3c] sm:$0xf]
        %v568 = vld [vmem:[%s408 + $0x40] sm:$0xf]
        %v569 = vld [vmem:[%s408 + $0x44] sm:$0xf]
        %v570 = vld [vmem:[%s408 + $0x48] sm:$0xf]
        %v571 = vld [vmem:[%s408 + $0x4c] sm:$0xf]
        %v572 = vld [vmem:[%s408 + $0x50] sm:$0xf]
        %v573 = vld [vmem:[%s408 + $0x54] sm:$0xf]
        %v574 = vld [vmem:[%s408 + $0x58] sm:$0xf]
        %v575 = vld [vmem:[%s408 + $0x5c] sm:$0xf]
        %v576 = vld [vmem:[%s408 + $0x60] sm:$0xf]
        %v577 = vld [vmem:[%s408 + $0x64] sm:$0xf]
        %v578 = vld [vmem:[%s408 + $0x68] sm:$0xf]
        %v579 = vld [vmem:[%s408 + $0x6c] sm:$0xf]
        %v580 = vld [vmem:[%s408 + $0x70] sm:$0xf]
        %v581 = vld [vmem:[%s408 + $0x74] sm:$0xf]
        %v582 = vld [vmem:[%s408 + $0x78] sm:$0xf]
        %v583 = vld [vmem:[%s408 + $0x7c] sm:$0xf]
        %v584 = vld [vmem:[%s408 + $0x80] sm:$0xf]
        %v585 = vld [vmem:[%s408 + $0x84] sm:$0xf]
        %v586 = vld [vmem:[%s408 + $0x88] sm:$0xf]
        %v587 = vld [vmem:[#allocation2] sm:$0xf]
        %v588 = vld [vmem:[#allocation2 + $0x4] sm:$0xf]
        %v589 = vld [vmem:[#allocation2 + $0x8] sm:$0xf]
        %v590 = vld [vmem:[#allocation2 + $0xc] sm:$0xf]
        %v591 = vld [vmem:[#allocation2 + $0x10] sm:$0xf]
        %v592 = vld [vmem:[#allocation2 + $0x14] sm:$0xf]
        %v593 = vld [vmem:[#allocation2 + $0x18] sm:$0xf]
        %v594 = vld [vmem:[#allocation2 + $0x1c] sm:$0xf]
        %v595 = vld [vmem:[#allocation2 + $0x20] sm:$0xf]
        %v596 = vld [vmem:[#allocation2 + $0x24] sm:$0xf]
        %v597 = vld [vmem:[#allocation2 + $0x28] sm:$0xf]
        %v598 = vld [vmem:[#allocation2 + $0x2c] sm:$0xf]
        %v599 = vld [vmem:[#allocation2 + $0x30] sm:$0xf]
        %v600 = vld [vmem:[#allocation2 + $0x34] sm:$0xf]
        %v601 = vld [vmem:[#allocation2 + $0x38] sm:$0xf]
        %v602 = vld [vmem:[#allocation2 + $0x3c] sm:$0xf]
        %v603 = vld [vmem:[#allocation2 + $0x40] sm:$0xf]
        %v604 = vld [vmem:[#allocation2 + $0x44] sm:$0xf]
        %v605 = vld [vmem:[#allocation2 + $0x48] sm:$0xf]
        %v606 = vld [vmem:[#allocation2 + $0x4c] sm:$0xf]
        %v607 = vld [vmem:[#allocation2 + $0x50] sm:$0xf]
        %v608 = vld [vmem:[#allocation2 + $0x54] sm:$0xf]
        %v609 = vld [vmem:[#allocation2 + $0x58] sm:$0xf]
        %v610 = vld [vmem:[#allocation2 + $0x5c] sm:$0xf]
        %v611 = vld [vmem:[#allocation2 + $0x60] sm:$0xf]
        %v612 = vld [vmem:[#allocation2 + $0x64] sm:$0xf]
        %v613 = vld [vmem:[#allocation2 + $0x68] sm:$0xf]
        %v614 = vld [vmem:[#allocation2 + $0x6c] sm:$0xf]
        %v615 = vld [vmem:[#allocation2 + $0x70] sm:$0xf]
        %v616 = vld [vmem:[#allocation2 + $0x74] sm:$0xf]
        %v617 = vld [vmem:[#allocation2 + $0x78] sm:$0xf]
        %v618 = vld [vmem:[#allocation2 + $0x7c] sm:$0xf]
        %v619 = vld [vmem:[#allocation2 + $0x80] sm:$0xf]
        %v620 = vld [vmem:[#allocation2 + $0x84] sm:$0xf]
        %v621 = vld [vmem:[#allocation2 + $0x88] sm:$0xf]
        %v657 = vunpack.c.l.b16 %v552
        %v658 = vunpack.c.l.b16 %v553
        %v659 = vunpack.c.l.b16 %v554
        %v660 = vunpack.c.l.b16 %v555
        %v661 = vunpack.c.l.b16 %v556
        %v662 = vunpack.c.l.b16 %v557
        %v663 = vunpack.c.l.b16 %v558
        %v664 = vunpack.c.l.b16 %v559
        %v665 = vunpack.c.l.b16 %v560
        %v666 = vunpack.c.l.b16 %v561
        %v667 = vunpack.c.l.b16 %v562
        %v668 = vunpack.c.l.b16 %v563
        %v669 = vunpack.c.l.b16 %v564
        %v670 = vunpack.c.l.b16 %v565
        %v671 = vunpack.c.l.b16 %v566
        %v672 = vunpack.c.l.b16 %v567
        %v673 = vunpack.c.l.b16 %v568
        %v674 = vunpack.c.l.b16 %v569
        %v675 = vunpack.c.l.b16 %v570
        %v676 = vunpack.c.l.b16 %v571
        %v677 = vunpack.c.l.b16 %v572
        %v678 = vunpack.c.l.b16 %v573
        %v679 = vunpack.c.l.b16 %v574
        %v680 = vunpack.c.l.b16 %v575
        %v681 = vunpack.c.l.b16 %v576
        %v682 = vunpack.c.l.b16 %v577
        %v683 = vunpack.c.l.b16 %v578
        %v684 = vunpack.c.l.b16 %v579
        %v685 = vunpack.c.l.b16 %v580
        %v686 = vunpack.c.l.b16 %v581
        %v687 = vunpack.c.l.b16 %v582
        %v688 = vunpack.c.l.b16 %v583
        %v689 = vunpack.c.l.b16 %v584
        %v690 = vunpack.c.l.b16 %v585
        %v691 = vunpack.c.l.b16 %v586
        %v692 = vpack.c.b16 %v658, %v657
        %v693 = vpack.c.b16 %v660, %v659
        %v694 = vpack.c.b16 %v662, %v661
        %v695 = vpack.c.b16 %v664, %v663
        %v696 = vpack.c.b16 %v666, %v665
        %v697 = vpack.c.b16 %v668, %v667
        %v698 = vpack.c.b16 %v670, %v669
        %v699 = vpack.c.b16 %v672, %v671
        %v700 = vpack.c.b16 %v674, %v673
        %v701 = vpack.c.b16 %v676, %v675
        %v702 = vpack.c.b16 %v678, %v677
        %v703 = vpack.c.b16 %v680, %v679
        %v704 = vpack.c.b16 %v682, %v681
        %v705 = vpack.c.b16 %v684, %v683
        %v706 = vpack.c.b16 %v686, %v685
        %v707 = vpack.c.b16 %v688, %v687
        %v708 = vpack.c.b16 %v690, %v689
        %v709 = vpack.c.b16 %v691, %v691
        %v763 = vunpack.c.l.b16 %v587
        %v764 = vunpack.c.l.b16 %v588
        %v765 = vunpack.c.l.b16 %v589
        %v766 = vunpack.c.l.b16 %v590
        %v767 = vunpack.c.l.b16 %v591
        %v768 = vunpack.c.l.b16 %v592
        %v769 = vunpack.c.l.b16 %v593
        %v770 = vunpack.c.l.b16 %v594
        %v771 = vunpack.c.l.b16 %v595
        %v772 = vunpack.c.l.b16 %v596
        %v773 = vunpack.c.l.b16 %v597
        %v774 = vunpack.c.l.b16 %v598
        %v775 = vunpack.c.l.b16 %v599
        %v776 = vunpack.c.l.b16 %v600
        %v777 = vunpack.c.l.b16 %v601
        %v778 = vunpack.c.l.b16 %v602
        %v779 = vunpack.c.l.b16 %v603
        %v780 = vunpack.c.l.b16 %v604
        %v781 = vunpack.c.l.b16 %v605
        %v782 = vunpack.c.l.b16 %v606
        %v783 = vunpack.c.l.b16 %v607
        %v784 = vunpack.c.l.b16 %v608
        %v785 = vunpack.c.l.b16 %v609
        %v786 = vunpack.c.l.b16 %v610
        %v787 = vunpack.c.l.b16 %v611
        %v788 = vunpack.c.l.b16 %v612
        %v789 = vunpack.c.l.b16 %v613
        %v790 = vunpack.c.l.b16 %v614
        %v791 = vunpack.c.l.b16 %v615
        %v792 = vunpack.c.l.b16 %v616
        %v793 = vunpack.c.l.b16 %v617
        %v794 = vunpack.c.l.b16 %v618
        %v795 = vunpack.c.l.b16 %v619
        %v796 = vunpack.c.l.b16 %v620
        %v797 = vunpack.c.l.b16 %v621
        %v798 = vpack.c.b16 %v764, %v763
        %v799 = vpack.c.b16 %v766, %v765
        %v800 = vpack.c.b16 %v768, %v767
        %v801 = vpack.c.b16 %v770, %v769
        %v802 = vpack.c.b16 %v772, %v771
        %v803 = vpack.c.b16 %v774, %v773
        %v804 = vpack.c.b16 %v776, %v775
        %v805 = vpack.c.b16 %v778, %v777
        %v806 = vpack.c.b16 %v780, %v779
        %v807 = vpack.c.b16 %v782, %v781
        %v808 = vpack.c.b16 %v784, %v783
        %v809 = vpack.c.b16 %v786, %v785
        %v810 = vpack.c.b16 %v788, %v787
        %v811 = vpack.c.b16 %v790, %v789
        %v812 = vpack.c.b16 %v792, %v791
        %v813 = vpack.c.b16 %v794, %v793
        %v814 = vpack.c.b16 %v796, %v795
        %v815 = vpack.c.b16 %v797, %v797
        %v834 = vld [vmem:[#allocation8] sm:$0xff]
        %v835 = vld [vmem:[#allocation8 + $0x8] sm:$0xff]
        %v836 = vld [vmem:[#allocation8 + $0x10] sm:$0xff]
        %v837 = vld [vmem:[#allocation8 + $0x18] sm:$0xff]
        %v838 = vld [vmem:[#allocation8 + $0x20] sm:$0xff]
        %v839 = vld [vmem:[#allocation8 + $0x28] sm:$0xff]
        %v840 = vld [vmem:[#allocation8 + $0x30] sm:$0xff]
        %v841 = vld [vmem:[#allocation8 + $0x38] sm:$0xff]
        %v842 = vld [vmem:[#allocation8 + $0x40] sm:$0xff]
        %v843 = vld [vmem:[#allocation8 + $0x48] sm:$0xff]
        %v844 = vld [vmem:[#allocation8 + $0x50] sm:$0xff]
        %v845 = vld [vmem:[#allocation8 + $0x58] sm:$0xff]
        %v846 = vld [vmem:[#allocation8 + $0x60] sm:$0xff]
        %v847 = vld [vmem:[#allocation8 + $0x68] sm:$0xff]
        %v848 = vld [vmem:[#allocation8 + $0x70] sm:$0xff]
        %v849 = vld [vmem:[#allocation8 + $0x78] sm:$0xff]
        %v850 = vld [vmem:[#allocation8 + $0x80] sm:$0xff]
        %v851 = vld [vmem:[#allocation8 + $0x88] sm:$0xff]
        %v852 = vld [vmem:[#allocation8 + $0x90] sm:$0xff]
        %v853 = vld [vmem:[#allocation8 + $0x98] sm:$0xff]
        %v854 = vld [vmem:[#allocation8 + $0xa0] sm:$0xff]
        %v855 = vld [vmem:[#allocation8 + $0xa8] sm:$0xff]
        %v856 = vld [vmem:[#allocation8 + $0xb0] sm:$0xff]
        %v857 = vld [vmem:[#allocation8 + $0xb8] sm:$0xff]
        %v858 = vld [vmem:[#allocation8 + $0xc0] sm:$0xff]
        %v859 = vld [vmem:[#allocation8 + $0xc8] sm:$0xff]
        %v860 = vld [vmem:[#allocation8 + $0xd0] sm:$0xff]
        %v861 = vld [vmem:[#allocation8 + $0xd8] sm:$0xff]
        %v862 = vld [vmem:[#allocation8 + $0xe0] sm:$0xff]
        %v863 = vld [vmem:[#allocation8 + $0xe8] sm:$0xff]
        %v864 = vld [vmem:[#allocation8 + $0xf0] sm:$0xff]
        %v865 = vld [vmem:[#allocation8 + $0xf8] sm:$0xff]
        %v866 = vld [vmem:[#allocation8 + $0x100] sm:$0xff]
        %v867 = vld [vmem:[#allocation8 + $0x108] sm:$0xff]
        %v868 = vld [vmem:[#allocation8 + $0x110] sm:$0xff]
        %v869 = vld [vmem:[#allocation8 + $0x118] sm:$0xff]
        %v870 = vld [vmem:[#allocation8 + $0x120] sm:$0xff]
        %v871 = vld [vmem:[#allocation8 + $0x128] sm:$0xff]
        %v872 = vld [vmem:[#allocation8 + $0x130] sm:$0xff]
        %v873 = vld [vmem:[#allocation8 + $0x138] sm:$0xff]
        %v874 = vld [vmem:[#allocation8 + $0x140] sm:$0xff]
        %v875 = vld [vmem:[#allocation8 + $0x148] sm:$0xff]
        %v876 = vld [vmem:[#allocation8 + $0x150] sm:$0xff]
        %v877 = vld [vmem:[#allocation8 + $0x158] sm:$0xff]
        %v878 = vld [vmem:[#allocation8 + $0x160] sm:$0xff]
        %v879 = vld [vmem:[#allocation8 + $0x168] sm:$0xff]
        %v880 = vld [vmem:[#allocation8 + $0x170] sm:$0xff]
        %v881 = vld [vmem:[#allocation8 + $0x178] sm:$0xff]
        %v882 = vld [vmem:[#allocation8 + $0x180] sm:$0xff]
        %v883 = vld [vmem:[#allocation8 + $0x188] sm:$0xff]
        %v884 = vld [vmem:[#allocation8 + $0x190] sm:$0xff]
        %v885 = vld [vmem:[#allocation8 + $0x198] sm:$0xff]
        %v886 = vld [vmem:[#allocation8 + $0x1a0] sm:$0xff]
        %v887 = vld [vmem:[#allocation8 + $0x1a8] sm:$0xff]
        %v888 = vld [vmem:[#allocation8 + $0x1b0] sm:$0xff]
        %v889 = vld [vmem:[#allocation8 + $0x1b8] sm:$0xff]
        %v890 = vld [vmem:[#allocation8 + $0x1c0] sm:$0xff]
        %v891 = vld [vmem:[#allocation8 + $0x1c8] sm:$0xff]
        %v892 = vld [vmem:[#allocation8 + $0x1d0] sm:$0xff]
        %v893 = vld [vmem:[#allocation8 + $0x1d8] sm:$0xff]
        %v894 = vld [vmem:[#allocation8 + $0x1e0] sm:$0xff]
        %v895 = vld [vmem:[#allocation8 + $0x1e8] sm:$0xff]
        %v896 = vld [vmem:[#allocation8 + $0x1f0] sm:$0xff]
        %v897 = vld [vmem:[#allocation8 + $0x1f8] sm:$0xff]
        %v898 = vld [vmem:[#allocation10] sm:$0xf]
        %v900 = vlaneseq
        %v901 = vshrl.u32 %v900, 7
        %v902 = vsub.s32 0, %v901
        %v903 = vrot.slane %v898, %v902
        %v904 = vlaneseq
        %v905 = vshrl.u32 %v904, 7
        %v906 = vsub.s32 1, %v905
        %v907 = vrot.slane %v898, %v906
        %v908 = vlaneseq
        %v909 = vshrl.u32 %v908, 7
        %v910 = vsub.s32 2, %v909
        %v911 = vrot.slane %v898, %v910
        %v912 = vlaneseq
        %v913 = vshrl.u32 %v912, 7
        %v914 = vsub.s32 3, %v913
        %v915 = vrot.slane %v898, %v914
        %v984 = vunpack.c.l.b16 %v834
        %v985 = vunpack.c.h.b16 %v834
        %v986 = vunpack.c.l.b16 %v835
        %v987 = vunpack.c.h.b16 %v835
        %v988 = vunpack.c.l.b16 %v836
        %v989 = vunpack.c.h.b16 %v836
        %v990 = vunpack.c.l.b16 %v837
        %v991 = vunpack.c.h.b16 %v837
        %v992 = vunpack.c.l.b16 %v838
        %v993 = vunpack.c.h.b16 %v838
        %v994 = vunpack.c.l.b16 %v839
        %v995 = vunpack.c.h.b16 %v839
        %v996 = vunpack.c.l.b16 %v840
        %v997 = vunpack.c.h.b16 %v840
        %v998 = vunpack.c.l.b16 %v841
        %v999 = vunpack.c.h.b16 %v841
        %v1000 = vunpack.c.l.b16 %v842
        %v1001 = vunpack.c.h.b16 %v842
        %v1002 = vunpack.c.l.b16 %v843
        %v1003 = vunpack.c.h.b16 %v843
        %v1004 = vunpack.c.l.b16 %v844
        %v1005 = vunpack.c.h.b16 %v844
        %v1006 = vunpack.c.l.b16 %v845
        %v1007 = vunpack.c.h.b16 %v845
        %v1008 = vunpack.c.l.b16 %v846
        %v1009 = vunpack.c.h.b16 %v846
        %v1010 = vunpack.c.l.b16 %v847
        %v1011 = vunpack.c.h.b16 %v847
        %v1012 = vunpack.c.l.b16 %v848
        %v1013 = vunpack.c.h.b16 %v848
        %v1014 = vunpack.c.l.b16 %v849
        %v1015 = vunpack.c.h.b16 %v849
        %v1016 = vunpack.c.l.b16 %v850
        %v1017 = vunpack.c.h.b16 %v850
        %v1018 = vunpack.c.l.b16 %v851
        %v1019 = vunpack.c.h.b16 %v851
        %v1020 = vunpack.c.l.b16 %v852
        %v1021 = vunpack.c.h.b16 %v852
        %v1022 = vunpack.c.l.b16 %v853
        %v1023 = vunpack.c.h.b16 %v853
        %v1024 = vunpack.c.l.b16 %v854
        %v1025 = vunpack.c.h.b16 %v854
        %v1026 = vunpack.c.l.b16 %v855
        %v1027 = vunpack.c.h.b16 %v855
        %v1028 = vunpack.c.l.b16 %v856
        %v1029 = vunpack.c.h.b16 %v856
        %v1030 = vunpack.c.l.b16 %v857
        %v1031 = vunpack.c.h.b16 %v857
        %v1032 = vunpack.c.l.b16 %v858
        %v1033 = vunpack.c.h.b16 %v858
        %v1034 = vunpack.c.l.b16 %v859
        %v1035 = vunpack.c.h.b16 %v859
        %v1036 = vunpack.c.l.b16 %v860
        %v1037 = vunpack.c.h.b16 %v860
        %v1038 = vunpack.c.l.b16 %v861
        %v1039 = vunpack.c.h.b16 %v861
        %v1040 = vunpack.c.l.b16 %v862
        %v1041 = vunpack.c.h.b16 %v862
        %v1042 = vunpack.c.l.b16 %v863
        %v1043 = vunpack.c.h.b16 %v863
        %v1044 = vunpack.c.l.b16 %v864
        %v1045 = vunpack.c.h.b16 %v864
        %v1046 = vunpack.c.l.b16 %v865
        %v1047 = vunpack.c.h.b16 %v865
        %v1048 = vunpack.c.l.b16 %v866
        %v1049 = vunpack.c.h.b16 %v866
        %v1050 = vunpack.c.l.b16 %v867
        %v1051 = vunpack.c.h.b16 %v867
        %v1052 = vunpack.c.l.b16 %v868
        %v1053 = vunpack.c.h.b16 %v868
        %v1054 = vunpack.c.l.b16 %v869
        %v1055 = vunpack.c.h.b16 %v869
        %v1056 = vunpack.c.l.b16 %v870
        %v1057 = vunpack.c.h.b16 %v870
        %v1058 = vunpack.c.l.b16 %v871
        %v1059 = vunpack.c.h.b16 %v871
        %v1060 = vunpack.c.l.b16 %v872
        %v1061 = vunpack.c.h.b16 %v872
        %v1062 = vunpack.c.l.b16 %v873
        %v1063 = vunpack.c.h.b16 %v873
        %v1064 = vunpack.c.l.b16 %v874
        %v1065 = vunpack.c.h.b16 %v874
        %v1066 = vunpack.c.l.b16 %v875
        %v1067 = vunpack.c.h.b16 %v875
        %v1068 = vunpack.c.l.b16 %v876
        %v1069 = vunpack.c.h.b16 %v876
        %v1070 = vunpack.c.l.b16 %v877
        %v1071 = vunpack.c.h.b16 %v877
        %v1072 = vunpack.c.l.b16 %v878
        %v1073 = vunpack.c.h.b16 %v878
        %v1074 = vunpack.c.l.b16 %v879
        %v1075 = vunpack.c.h.b16 %v879
        %v1076 = vunpack.c.l.b16 %v880
        %v1077 = vunpack.c.h.b16 %v880
        %v1078 = vunpack.c.l.b16 %v881
        %v1079 = vunpack.c.h.b16 %v881
        %v1080 = vunpack.c.l.b16 %v882
        %v1081 = vunpack.c.h.b16 %v882
        %v1082 = vunpack.c.l.b16 %v883
        %v1083 = vunpack.c.h.b16 %v883
        %v1084 = vunpack.c.l.b16 %v884
        %v1085 = vunpack.c.h.b16 %v884
        %v1086 = vunpack.c.l.b16 %v885
        %v1087 = vunpack.c.h.b16 %v885
        %v1088 = vunpack.c.l.b16 %v886
        %v1089 = vunpack.c.h.b16 %v886
        %v1090 = vunpack.c.l.b16 %v887
        %v1091 = vunpack.c.h.b16 %v887
        %v1092 = vunpack.c.l.b16 %v888
        %v1093 = vunpack.c.h.b16 %v888
        %v1094 = vunpack.c.l.b16 %v889
        %v1095 = vunpack.c.h.b16 %v889
        %v1096 = vunpack.c.l.b16 %v890
        %v1097 = vunpack.c.h.b16 %v890
        %v1098 = vunpack.c.l.b16 %v891
        %v1099 = vunpack.c.h.b16 %v891
        %v1100 = vunpack.c.l.b16 %v892
        %v1101 = vunpack.c.h.b16 %v892
        %v1102 = vunpack.c.l.b16 %v893
        %v1103 = vunpack.c.h.b16 %v893
        %v1104 = vunpack.c.l.b16 %v894
        %v1105 = vunpack.c.h.b16 %v894
        %v1106 = vunpack.c.l.b16 %v895
        %v1107 = vunpack.c.h.b16 %v895
        %v1108 = vunpack.c.l.b16 %v896
        %v1109 = vunpack.c.h.b16 %v896
        %v1110 = vunpack.c.l.b16 %v897
        %v1111 = vunpack.c.h.b16 %v897
        %v1112 = vpack.c.b16 %v988, %v984
        %v1113 = vpack.c.b16 %v989, %v985
        %v1114 = vpack.c.b16 %v990, %v986
        %v1115 = vpack.c.b16 %v991, %v987
        %v1116 = vpack.c.b16 %v996, %v992
        %v1117 = vpack.c.b16 %v997, %v993
        %v1118 = vpack.c.b16 %v998, %v994
        %v1119 = vpack.c.b16 %v999, %v995
        %v1120 = vpack.c.b16 %v1004, %v1000
        %v1121 = vpack.c.b16 %v1005, %v1001
        %v1122 = vpack.c.b16 %v1006, %v1002
        %v1123 = vpack.c.b16 %v1007, %v1003
        %v1124 = vpack.c.b16 %v1012, %v1008
        %v1125 = vpack.c.b16 %v1013, %v1009
        %v1126 = vpack.c.b16 %v1014, %v1010
        %v1127 = vpack.c.b16 %v1015, %v1011
        %v1128 = vpack.c.b16 %v1020, %v1016
        %v1129 = vpack.c.b16 %v1021, %v1017
        %v1130 = vpack.c.b16 %v1022, %v1018
        %v1131 = vpack.c.b16 %v1023, %v1019
        %v1132 = vpack.c.b16 %v1028, %v1024
        %v1133 = vpack.c.b16 %v1029, %v1025
        %v1134 = vpack.c.b16 %v1030, %v1026
        %v1135 = vpack.c.b16 %v1031, %v1027
        %v1136 = vpack.c.b16 %v1036, %v1032
        %v1137 = vpack.c.b16 %v1037, %v1033
        %v1138 = vpack.c.b16 %v1038, %v1034
        %v1139 = vpack.c.b16 %v1039, %v1035
        %v1140 = vpack.c.b16 %v1044, %v1040
        %v1141 = vpack.c.b16 %v1045, %v1041
        %v1142 = vpack.c.b16 %v1046, %v1042
        %v1143 = vpack.c.b16 %v1047, %v1043
        %v1144 = vpack.c.b16 %v1052, %v1048
        %v1145 = vpack.c.b16 %v1053, %v1049
        %v1146 = vpack.c.b16 %v1054, %v1050
        %v1147 = vpack.c.b16 %v1055, %v1051
        %v1148 = vpack.c.b16 %v1060, %v1056
        %v1149 = vpack.c.b16 %v1061, %v1057
        %v1150 = vpack.c.b16 %v1062, %v1058
        %v1151 = vpack.c.b16 %v1063, %v1059
        %v1152 = vpack.c.b16 %v1068, %v1064
        %v1153 = vpack.c.b16 %v1069, %v1065
        %v1154 = vpack.c.b16 %v1070, %v1066
        %v1155 = vpack.c.b16 %v1071, %v1067
        %v1156 = vpack.c.b16 %v1076, %v1072
        %v1157 = vpack.c.b16 %v1077, %v1073
        %v1158 = vpack.c.b16 %v1078, %v1074
        %v1159 = vpack.c.b16 %v1079, %v1075
        %v1160 = vpack.c.b16 %v1084, %v1080
        %v1161 = vpack.c.b16 %v1085, %v1081
        %v1162 = vpack.c.b16 %v1086, %v1082
        %v1163 = vpack.c.b16 %v1087, %v1083
        %v1164 = vpack.c.b16 %v1092, %v1088
        %v1165 = vpack.c.b16 %v1093, %v1089
        %v1166 = vpack.c.b16 %v1094, %v1090
        %v1167 = vpack.c.b16 %v1095, %v1091
        %v1168 = vpack.c.b16 %v1100, %v1096
        %v1169 = vpack.c.b16 %v1101, %v1097
        %v1170 = vpack.c.b16 %v1102, %v1098
        %v1171 = vpack.c.b16 %v1103, %v1099
        %v1172 = vpack.c.b16 %v1108, %v1104
        %v1173 = vpack.c.b16 %v1109, %v1105
        %v1174 = vpack.c.b16 %v1110, %v1106
        %v1175 = vpack.c.b16 %v1111, %v1107
        %1240 = vmatprep.subr.bf16.mxu0 %v1113
        %1241 = vmatpush1.bf16.msra.mxu0 %v1112
        %1242 = vmatprep.subr.bf16.mxu0 %v1117
        %1243 = vmatpush1.bf16.msra.mxu0 %v1116
        %1244 = vmatprep.subr.bf16.mxu0 %v1121
        %1245 = vmatpush1.bf16.msra.mxu0 %v1120
        %1246 = vmatprep.subr.bf16.mxu0 %v1125
        %1247 = vmatpush1.bf16.msra.mxu0 %v1124
        %1248 = vmatprep.subr.bf16.mxu0 %v1129
        %1249 = vmatpush1.bf16.msra.mxu0 %v1128
        %1250 = vmatprep.subr.bf16.mxu0 %v1133
        %1251 = vmatpush1.bf16.msra.mxu0 %v1132
        %1252 = vmatprep.subr.bf16.mxu0 %v1137
        %1253 = vmatpush1.bf16.msra.mxu0 %v1136
        %1254 = vmatprep.subr.bf16.mxu0 %v1141
        %1255 = vmatpush1.bf16.msra.mxu0 %v1140
        %1256 = vmatprep.subr.bf16.mxu0 %v1145
        %1257 = vmatpush1.bf16.msra.mxu0 %v1144
        %1258 = vmatprep.subr.bf16.mxu0 %v1149
        %1259 = vmatpush1.bf16.msra.mxu0 %v1148
        %1260 = vmatprep.subr.bf16.mxu0 %v1153
        %1261 = vmatpush1.bf16.msra.mxu0 %v1152
        %1262 = vmatprep.subr.bf16.mxu0 %v1157
        %1263 = vmatpush1.bf16.msra.mxu0 %v1156
        %1264 = vmatprep.subr.bf16.mxu0 %v1161
        %1265 = vmatpush1.bf16.msra.mxu0 %v1160
        %1266 = vmatprep.subr.bf16.mxu0 %v1165
        %1267 = vmatpush1.bf16.msra.mxu0 %v1164
        %1268 = vmatprep.subr.bf16.mxu0 %v1169
        %1269 = vmatpush1.bf16.msra.mxu0 %v1168
        %1270 = vmatprep.subr.bf16.mxu0 %v1173
        %1271 = vmatpush1.bf16.msra.mxu0 %v1172
        %1272 = vmatprep.mubr.bf16.mxu0 %v798
        %1273 = vmatmul.mubr.bf16.gmra.mrb[0].mxu0 %v692
        %v1274 = vpop.f32.mrb[0].mxu0
        %v1275 = vadd.f32 %v903, %v1274
        %v1276 = vpop.f32.mrb[0].mxu0
        %v1277 = vadd.f32 %v907, %v1276
        %v1278 = vpop.f32.mrb[0].mxu0
        %v1279 = vadd.f32 %v903, %v1278
        %v1280 = vpop.f32.mrb[0].mxu0
        %v1281 = vadd.f32 %v907, %v1280
        %1282 = vmatprep.mubr.bf16.mxu0 %v799
        %1283 = vmatmul.mubr.bf16.gmra.mrb[0].mxu0 %v693
        %v1284 = vpop.f32.mrb[0].mxu0
        %v1285 = vadd.f32 %v903, %v1284
        %v1286 = vpop.f32.mrb[0].mxu0
        %v1287 = vadd.f32 %v907, %v1286
        %v1288 = vpop.f32.mrb[0].mxu0
        %v1289 = vadd.f32 %v903, %v1288
        %v1290 = vpop.f32.mrb[0].mxu0
        %v1291 = vadd.f32 %v907, %v1290
        %1292 = vmatprep.mubr.bf16.mxu0 %v800
        %1293 = vmatmul.mubr.bf16.gmra.mrb[0].mxu0 %v694
        %v1294 = vpop.f32.mrb[0].mxu0
        %v1295 = vadd.f32 %v903, %v1294
        %v1296 = vpop.f32.mrb[0].mxu0
        %v1297 = vadd.f32 %v907, %v1296
        %v1298 = vpop.f32.mrb[0].mxu0
        %v1299 = vadd.f32 %v903, %v1298
        %v1300 = vpop.f32.mrb[0].mxu0
        %v1301 = vadd.f32 %v907, %v1300
        %1302 = vmatprep.mubr.bf16.mxu0 %v801
        %1303 = vmatmul.mubr.bf16.gmra.mrb[0].mxu0 %v695
        %v1304 = vpop.f32.mrb[0].mxu0
        %v1305 = vadd.f32 %v903, %v1304
        %v1306 = vpop.f32.mrb[0].mxu0
        %v1307 = vadd.f32 %v907, %v1306
        %v1308 = vpop.f32.mrb[0].mxu0
        %v1309 = vadd.f32 %v903, %v1308
        %v1310 = vpop.f32.mrb[0].mxu0
        %v1311 = vadd.f32 %v907, %v1310
        %1312 = vmatprep.mubr.bf16.mxu0 %v802
        %1313 = vmatmul.mubr.bf16.gmra.mrb[0].mxu0 %v696
        %v1314 = vpop.f32.mrb[0].mxu0
        %v1315 = vadd.f32 %v903, %v1314
        %v1316 = vpop.f32.mrb[0].mxu0
        %v1317 = vadd.f32 %v907, %v1316
        %v1318 = vpop.f32.mrb[0].mxu0
        %v1319 = vadd.f32 %v903, %v1318
        %v1320 = vpop.f32.mrb[0].mxu0
        %v1321 = vadd.f32 %v907, %v1320
        %1322 = vmatprep.mubr.bf16.mxu0 %v803
        %1323 = vmatmul.mubr.bf16.gmra.mrb[0].mxu0 %v697
        %v1324 = vpop.f32.mrb[0].mxu0
        %v1325 = vadd.f32 %v903, %v1324
        %v1326 = vpop.f32.mrb[0].mxu0
        %v1327 = vadd.f32 %v907, %v1326
        %v1328 = vpop.f32.mrb[0].mxu0
        %v1329 = vadd.f32 %v903, %v1328
        %v1330 = vpop.f32.mrb[0].mxu0
        %v1331 = vadd.f32 %v907, %v1330
        %1332 = vmatprep.mubr.bf16.mxu0 %v804
        %1333 = vmatmul.mubr.bf16.gmra.mrb[0].mxu0 %v698
        %v1334 = vpop.f32.mrb[0].mxu0
        %v1335 = vadd.f32 %v903, %v1334
        %v1336 = vpop.f32.mrb[0].mxu0
        %v1337 = vadd.f32 %v907, %v1336
        %v1338 = vpop.f32.mrb[0].mxu0
        %v1339 = vadd.f32 %v903, %v1338
        %v1340 = vpop.f32.mrb[0].mxu0
        %v1341 = vadd.f32 %v907, %v1340
        %1342 = vmatprep.mubr.bf16.mxu0 %v805
        %1343 = vmatmul.mubr.bf16.gmra.mrb[0].mxu0 %v699
        %v1344 = vpop.f32.mrb[0].mxu0
        %v1345 = vadd.f32 %v903, %v1344
        %v1346 = vpop.f32.mrb[0].mxu0
        %v1347 = vadd.f32 %v907, %v1346
        %v1348 = vpop.f32.mrb[0].mxu0
        %v1349 = vadd.f32 %v903, %v1348
        %v1350 = vpop.f32.mrb[0].mxu0
        %v1351 = vadd.f32 %v907, %v1350
        %1352 = vmatprep.mubr.bf16.mxu0 %v806
        %1353 = vmatmul.mubr.bf16.gmra.mrb[0].mxu0 %v700
        %v1354 = vpop.f32.mrb[0].mxu0
        %v1355 = vadd.f32 %v903, %v1354
        %v1356 = vpop.f32.mrb[0].mxu0
        %v1357 = vadd.f32 %v907, %v1356
        %v1358 = vpop.f32.mrb[0].mxu0
        %v1359 = vadd.f32 %v903, %v1358
        %v1360 = vpop.f32.mrb[0].mxu0
        %v1361 = vadd.f32 %v907, %v1360
        %1362 = vmatprep.mubr.bf16.mxu0 %v807
        %1363 = vmatmul.mubr.bf16.gmra.mrb[0].mxu0 %v701
        %v1364 = vpop.f32.mrb[0].mxu0
        %v1365 = vadd.f32 %v903, %v1364
        %v1366 = vpop.f32.mrb[0].mxu0
        %v1367 = vadd.f32 %v907, %v1366
        %v1368 = vpop.f32.mrb[0].mxu0
        %v1369 = vadd.f32 %v903, %v1368
        %v1370 = vpop.f32.mrb[0].mxu0
        %v1371 = vadd.f32 %v907, %v1370
        %1372 = vmatprep.mubr.bf16.mxu0 %v808
        %1373 = vmatmul.mubr.bf16.gmra.mrb[0].mxu0 %v702
        %v1374 = vpop.f32.mrb[0].mxu0
        %v1375 = vadd.f32 %v903, %v1374
        %v1376 = vpop.f32.mrb[0].mxu0
        %v1377 = vadd.f32 %v907, %v1376
        %v1378 = vpop.f32.mrb[0].mxu0
        %v1379 = vadd.f32 %v903, %v1378
        %v1380 = vpop.f32.mrb[0].mxu0
        %v1381 = vadd.f32 %v907, %v1380
        %1382 = vmatprep.mubr.bf16.mxu0 %v809
        %1383 = vmatmul.mubr.bf16.gmra.mrb[0].mxu0 %v703
        %v1384 = vpop.f32.mrb[0].mxu0
        %v1385 = vadd.f32 %v903, %v1384
        %v1386 = vpop.f32.mrb[0].mxu0
        %v1387 = vadd.f32 %v907, %v1386
        %v1388 = vpop.f32.mrb[0].mxu0
        %v1389 = vadd.f32 %v903, %v1388
        %v1390 = vpop.f32.mrb[0].mxu0
        %v1391 = vadd.f32 %v907, %v1390
        %1392 = vmatprep.mubr.bf16.mxu0 %v810
        %1393 = vmatmul.mubr.bf16.gmra.mrb[0].mxu0 %v704
        %v1394 = vpop.f32.mrb[0].mxu0
        %v1395 = vadd.f32 %v903, %v1394
        %v1396 = vpop.f32.mrb[0].mxu0
        %v1397 = vadd.f32 %v907, %v1396
        %v1398 = vpop.f32.mrb[0].mxu0
        %v1399 = vadd.f32 %v903, %v1398
        %v1400 = vpop.f32.mrb[0].mxu0
        %v1401 = vadd.f32 %v907, %v1400
        %1402 = vmatprep.mubr.bf16.mxu0 %v811
        %1403 = vmatmul.mubr.bf16.gmra.mrb[0].mxu0 %v705
        %v1404 = vpop.f32.mrb[0].mxu0
        %v1405 = vadd.f32 %v903, %v1404
        %v1406 = vpop.f32.mrb[0].mxu0
        %v1407 = vadd.f32 %v907, %v1406
        %v1408 = vpop.f32.mrb[0].mxu0
        %v1409 = vadd.f32 %v903, %v1408
        %v1410 = vpop.f32.mrb[0].mxu0
        %v1411 = vadd.f32 %v907, %v1410
        %1412 = vmatprep.mubr.bf16.mxu0 %v812
        %1413 = vmatmul.mubr.bf16.gmra.mrb[0].mxu0 %v706
        %v1414 = vpop.f32.mrb[0].mxu0
        %v1415 = vadd.f32 %v903, %v1414
        %v1416 = vpop.f32.mrb[0].mxu0
        %v1417 = vadd.f32 %v907, %v1416
        %v1418 = vpop.f32.mrb[0].mxu0
        %v1419 = vadd.f32 %v903, %v1418
        %v1420 = vpop.f32.mrb[0].mxu0
        %v1421 = vadd.f32 %v907, %v1420
        %1422 = vmatprep.mubr.bf16.mxu0 %v813
        %1423 = vmatmul.mubr.bf16.gmra.mrb[0].mxu0 %v707
        %v1424 = vpop.f32.mrb[0].mxu0
        %v1425 = vadd.f32 %v903, %v1424
        %v1426 = vpop.f32.mrb[0].mxu0
        %v1427 = vadd.f32 %v907, %v1426
        %v1428 = vpop.f32.mrb[0].mxu0
        %v1429 = vadd.f32 %v903, %v1428
        %v1430 = vpop.f32.mrb[0].mxu0
        %v1431 = vadd.f32 %v907, %v1430
        %1432 = vmatprep.mubr.bf16.mxu0 %v814
        %1433 = vmatmul.mubr.bf16.gmra.mrb[0].mxu0 %v708
        %v1434 = vpop.f32.mrb[0].mxu0
        %v1435 = vadd.f32 %v903, %v1434
        %v1436 = vpop.f32.mrb[0].mxu0
        %v1437 = vadd.f32 %v907, %v1436
        %v1438 = vpop.f32.mrb[0].mxu0
        %v1439 = vadd.f32 %v903, %v1438
        %v1440 = vpop.f32.mrb[0].mxu0
        %v1441 = vadd.f32 %v907, %v1440
        %1442 = vmatprep.mubr.bf16.mxu0 %v815
        %1443 = vmatmul.mubr.bf16.gmra.mrb[0].mxu0 %v709
        %v1444 = vpop.f32.mrb[0].mxu0
        %v1445 = vadd.f32 %v903, %v1444
        %v1446 = vpop.f32.mrb[0].mxu0
        %v1447 = vadd.f32 %v907, %v1446
        %v1448 = vpop.f32.mrb[0].mxu0
        %v1449 = vpop.f32.mrb[0].mxu0
        %1450 = vdwg.mxu0
        %1451 = vmatprep.subr.bf16.mxu0 %v1115
        %1452 = vmatpush1.bf16.msra.mxu0 %v1114
        %1453 = vmatprep.subr.bf16.mxu0 %v1119
        %1454 = vmatpush1.bf16.msra.mxu0 %v1118
        %1455 = vmatprep.subr.bf16.mxu0 %v1123
        %1456 = vmatpush1.bf16.msra.mxu0 %v1122
        %1457 = vmatprep.subr.bf16.mxu0 %v1127
        %1458 = vmatpush1.bf16.msra.mxu0 %v1126
        %1459 = vmatprep.subr.bf16.mxu0 %v1131
        %1460 = vmatpush1.bf16.msra.mxu0 %v1130
        %1461 = vmatprep.subr.bf16.mxu0 %v1135
        %1462 = vmatpush1.bf16.msra.mxu0 %v1134
        %1463 = vmatprep.subr.bf16.mxu0 %v1139
        %1464 = vmatpush1.bf16.msra.mxu0 %v1138
        %1465 = vmatprep.subr.bf16.mxu0 %v1143
        %1466 = vmatpush1.bf16.msra.mxu0 %v1142
        %1467 = vmatprep.subr.bf16.mxu0 %v1147
        %1468 = vmatpush1.bf16.msra.mxu0 %v1146
        %1469 = vmatprep.subr.bf16.mxu0 %v1151
        %1470 = vmatpush1.bf16.msra.mxu0 %v1150
        %1471 = vmatprep.subr.bf16.mxu0 %v1155
        %1472 = vmatpush1.bf16.msra.mxu0 %v1154
        %1473 = vmatprep.subr.bf16.mxu0 %v1159
        %1474 = vmatpush1.bf16.msra.mxu0 %v1158
        %1475 = vmatprep.subr.bf16.mxu0 %v1163
        %1476 = vmatpush1.bf16.msra.mxu0 %v1162
        %1477 = vmatprep.subr.bf16.mxu0 %v1167
        %1478 = vmatpush1.bf16.msra.mxu0 %v1166
        %1479 = vmatprep.subr.bf16.mxu0 %v1171
        %1480 = vmatpush1.bf16.msra.mxu0 %v1170
        %1481 = vmatprep.subr.bf16.mxu0 %v1175
        %1482 = vmatpush1.bf16.msra.mxu0 %v1174
        %1483 = vmatprep.mubr.bf16.mxu0 %v798
        %1484 = vmatmul.mubr.bf16.gmra.mrb[0].mxu0 %v692
        %v1485 = vpop.f32.mrb[0].mxu0
        %v1486 = vadd.f32 %v911, %v1485
        %v1487 = vpop.f32.mrb[0].mxu0
        %v1488 = vadd.f32 %v915, %v1487
        %v1489 = vpop.f32.mrb[0].mxu0
        %v1490 = vadd.f32 %v911, %v1489
        %v1491 = vpop.f32.mrb[0].mxu0
        %v1492 = vadd.f32 %v915, %v1491
        %1493 = vmatprep.mubr.bf16.mxu0 %v799
        %1494 = vmatmul.mubr.bf16.gmra.mrb[0].mxu0 %v693
        %v1495 = vpop.f32.mrb[0].mxu0
        %v1496 = vadd.f32 %v911, %v1495
        %v1497 = vpop.f32.mrb[0].mxu0
        %v1498 = vadd.f32 %v915, %v1497
        %v1499 = vpop.f32.mrb[0].mxu0
        %v1500 = vadd.f32 %v911, %v1499
        %v1501 = vpop.f32.mrb[0].mxu0
        %v1502 = vadd.f32 %v915, %v1501
        %1503 = vmatprep.mubr.bf16.mxu0 %v800
        %1504 = vmatmul.mubr.bf16.gmra.mrb[0].mxu0 %v694
        %v1505 = vpop.f32.mrb[0].mxu0
        %v1506 = vadd.f32 %v911, %v1505
        %v1507 = vpop.f32.mrb[0].mxu0
        %v1508 = vadd.f32 %v915, %v1507
        %v1509 = vpop.f32.mrb[0].mxu0
        %v1510 = vadd.f32 %v911, %v1509
        %v1511 = vpop.f32.mrb[0].mxu0
        %v1512 = vadd.f32 %v915, %v1511
        %1513 = vmatprep.mubr.bf16.mxu0 %v801
        %1514 = vmatmul.mubr.bf16.gmra.mrb[0].mxu0 %v695
        %v1515 = vpop.f32.mrb[0].mxu0
        %v1516 = vadd.f32 %v911, %v1515
        %v1517 = vpop.f32.mrb[0].mxu0
        %v1518 = vadd.f32 %v915, %v1517
        %v1519 = vpop.f32.mrb[0].mxu0
        %v1520 = vadd.f32 %v911, %v1519
        %v1521 = vpop.f32.mrb[0].mxu0
        %v1522 = vadd.f32 %v915, %v1521
        %1523 = vmatprep.mubr.bf16.mxu0 %v802
        %1524 = vmatmul.mubr.bf16.gmra.mrb[0].mxu0 %v696
        %v1525 = vpop.f32.mrb[0].mxu0
        %v1526 = vadd.f32 %v911, %v1525
        %v1527 = vpop.f32.mrb[0].mxu0
        %v1528 = vadd.f32 %v915, %v1527
        %v1529 = vpop.f32.mrb[0].mxu0
        %v1530 = vadd.f32 %v911, %v1529
        %v1531 = vpop.f32.mrb[0].mxu0
        %v1532 = vadd.f32 %v915, %v1531
        %1533 = vmatprep.mubr.bf16.mxu0 %v803
        %1534 = vmatmul.mubr.bf16.gmra.mrb[0].mxu0 %v697
        %v1535 = vpop.f32.mrb[0].mxu0
        %v1536 = vadd.f32 %v911, %v1535
        %v1537 = vpop.f32.mrb[0].mxu0
        %v1538 = vadd.f32 %v915, %v1537
        %v1539 = vpop.f32.mrb[0].mxu0
        %v1540 = vadd.f32 %v911, %v1539
        %v1541 = vpop.f32.mrb[0].mxu0
        %v1542 = vadd.f32 %v915, %v1541
        %1543 = vmatprep.mubr.bf16.mxu0 %v804
        %1544 = vmatmul.mubr.bf16.gmra.mrb[0].mxu0 %v698
        %v1545 = vpop.f32.mrb[0].mxu0
        %v1546 = vadd.f32 %v911, %v1545
        %v1547 = vpop.f32.mrb[0].mxu0
        %v1548 = vadd.f32 %v915, %v1547
        %v1549 = vpop.f32.mrb[0].mxu0
        %v1550 = vadd.f32 %v911, %v1549
        %v1551 = vpop.f32.mrb[0].mxu0
        %v1552 = vadd.f32 %v915, %v1551
        %1553 = vmatprep.mubr.bf16.mxu0 %v805
        %1554 = vmatmul.mubr.bf16.gmra.mrb[0].mxu0 %v699
        %v1555 = vpop.f32.mrb[0].mxu0
        %v1556 = vadd.f32 %v911, %v1555
        %v1557 = vpop.f32.mrb[0].mxu0
        %v1558 = vadd.f32 %v915, %v1557
        %v1559 = vpop.f32.mrb[0].mxu0
        %v1560 = vadd.f32 %v911, %v1559
        %v1561 = vpop.f32.mrb[0].mxu0
        %v1562 = vadd.f32 %v915, %v1561
        %1563 = vmatprep.mubr.bf16.mxu0 %v806
        %1564 = vmatmul.mubr.bf16.gmra.mrb[0].mxu0 %v700
        %v1565 = vpop.f32.mrb[0].mxu0
        %v1566 = vadd.f32 %v911, %v1565
        %v1567 = vpop.f32.mrb[0].mxu0
        %v1568 = vadd.f32 %v915, %v1567
        %v1569 = vpop.f32.mrb[0].mxu0
        %v1570 = vadd.f32 %v911, %v1569
        %v1571 = vpop.f32.mrb[0].mxu0
        %v1572 = vadd.f32 %v915, %v1571
        %1573 = vmatprep.mubr.bf16.mxu0 %v807
        %1574 = vmatmul.mubr.bf16.gmra.mrb[0].mxu0 %v701
        %v1575 = vpop.f32.mrb[0].mxu0
        %v1576 = vadd.f32 %v911, %v1575
        %v1577 = vpop.f32.mrb[0].mxu0
        %v1578 = vadd.f32 %v915, %v1577
        %v1579 = vpop.f32.mrb[0].mxu0
        %v1580 = vadd.f32 %v911, %v1579
        %v1581 = vpop.f32.mrb[0].mxu0
        %v1582 = vadd.f32 %v915, %v1581
        %1583 = vmatprep.mubr.bf16.mxu0 %v808
        %1584 = vmatmul.mubr.bf16.gmra.mrb[0].mxu0 %v702
        %v1585 = vpop.f32.mrb[0].mxu0
        %v1586 = vadd.f32 %v911, %v1585
        %v1587 = vpop.f32.mrb[0].mxu0
        %v1588 = vadd.f32 %v915, %v1587
        %v1589 = vpop.f32.mrb[0].mxu0
        %v1590 = vadd.f32 %v911, %v1589
        %v1591 = vpop.f32.mrb[0].mxu0
        %v1592 = vadd.f32 %v915, %v1591
        %1593 = vmatprep.mubr.bf16.mxu0 %v809
        %1594 = vmatmul.mubr.bf16.gmra.mrb[0].mxu0 %v703
        %v1595 = vpop.f32.mrb[0].mxu0
        %v1596 = vadd.f32 %v911, %v1595
        %v1597 = vpop.f32.mrb[0].mxu0
        %v1598 = vadd.f32 %v915, %v1597
        %v1599 = vpop.f32.mrb[0].mxu0
        %v1600 = vadd.f32 %v911, %v1599
        %v1601 = vpop.f32.mrb[0].mxu0
        %v1602 = vadd.f32 %v915, %v1601
        %1603 = vmatprep.mubr.bf16.mxu0 %v810
        %1604 = vmatmul.mubr.bf16.gmra.mrb[0].mxu0 %v704
        %v1605 = vpop.f32.mrb[0].mxu0
        %v1606 = vadd.f32 %v911, %v1605
        %v1607 = vpop.f32.mrb[0].mxu0
        %v1608 = vadd.f32 %v915, %v1607
        %v1609 = vpop.f32.mrb[0].mxu0
        %v1610 = vadd.f32 %v911, %v1609
        %v1611 = vpop.f32.mrb[0].mxu0
        %v1612 = vadd.f32 %v915, %v1611
        %1613 = vmatprep.mubr.bf16.mxu0 %v811
        %1614 = vmatmul.mubr.bf16.gmra.mrb[0].mxu0 %v705
        %v1615 = vpop.f32.mrb[0].mxu0
        %v1616 = vadd.f32 %v911, %v1615
        %v1617 = vpop.f32.mrb[0].mxu0
        %v1618 = vadd.f32 %v915, %v1617
        %v1619 = vpop.f32.mrb[0].mxu0
        %v1620 = vadd.f32 %v911, %v1619
        %v1621 = vpop.f32.mrb[0].mxu0
        %v1622 = vadd.f32 %v915, %v1621
        %1623 = vmatprep.mubr.bf16.mxu0 %v812
        %1624 = vmatmul.mubr.bf16.gmra.mrb[0].mxu0 %v706
        %v1625 = vpop.f32.mrb[0].mxu0
        %v1626 = vadd.f32 %v911, %v1625
        %v1627 = vpop.f32.mrb[0].mxu0
        %v1628 = vadd.f32 %v915, %v1627
        %v1629 = vpop.f32.mrb[0].mxu0
        %v1630 = vadd.f32 %v911, %v1629
        %v1631 = vpop.f32.mrb[0].mxu0
        %v1632 = vadd.f32 %v915, %v1631
        %1633 = vmatprep.mubr.bf16.mxu0 %v813
        %1634 = vmatmul.mubr.bf16.gmra.mrb[0].mxu0 %v707
        %v1635 = vpop.f32.mrb[0].mxu0
        %v1636 = vadd.f32 %v911, %v1635
        %v1637 = vpop.f32.mrb[0].mxu0
        %v1638 = vadd.f32 %v915, %v1637
        %v1639 = vpop.f32.mrb[0].mxu0
        %v1640 = vadd.f32 %v911, %v1639
        %v1641 = vpop.f32.mrb[0].mxu0
        %v1642 = vadd.f32 %v915, %v1641
        %1643 = vmatprep.mubr.bf16.mxu0 %v814
        %1644 = vmatmul.mubr.bf16.gmra.mrb[0].mxu0 %v708
        %v1645 = vpop.f32.mrb[0].mxu0
        %v1646 = vadd.f32 %v911, %v1645
        %v1647 = vpop.f32.mrb[0].mxu0
        %v1648 = vadd.f32 %v915, %v1647
        %v1649 = vpop.f32.mrb[0].mxu0
        %v1650 = vadd.f32 %v911, %v1649
        %v1651 = vpop.f32.mrb[0].mxu0
        %v1652 = vadd.f32 %v915, %v1651
        %1653 = vmatprep.mubr.bf16.mxu0 %v815
        %1654 = vmatmul.mubr.bf16.gmra.mrb[0].mxu0 %v709
        %v1655 = vpop.f32.mrb[0].mxu0
        %v1656 = vadd.f32 %v911, %v1655
        %v1657 = vpop.f32.mrb[0].mxu0
        %v1658 = vadd.f32 %v915, %v1657
        %v1659 = vpop.f32.mrb[0].mxu0
        %v1660 = vpop.f32.mrb[0].mxu0
        %1661 = vdwg.mxu0
        %v1662 = vpack.c.bf16 %v1279, %v1275
        %v1663 = vpack.c.bf16 %v1281, %v1277
        %v1664 = vpack.c.bf16 %v1490, %v1486
        %v1665 = vpack.c.bf16 %v1492, %v1488
        %v1666 = vpack.c.bf16 %v1289, %v1285
        %v1667 = vpack.c.bf16 %v1291, %v1287
        %v1668 = vpack.c.bf16 %v1500, %v1496
        %v1669 = vpack.c.bf16 %v1502, %v1498
        %v1670 = vpack.c.bf16 %v1299, %v1295
        %v1671 = vpack.c.bf16 %v1301, %v1297
        %v1672 = vpack.c.bf16 %v1510, %v1506
        %v1673 = vpack.c.bf16 %v1512, %v1508
        %v1674 = vpack.c.bf16 %v1309, %v1305
        %v1675 = vpack.c.bf16 %v1311, %v1307
        %v1676 = vpack.c.bf16 %v1520, %v1516
        %v1677 = vpack.c.bf16 %v1522, %v1518
        %v1678 = vpack.c.bf16 %v1319, %v1315
        %v1679 = vpack.c.bf16 %v1321, %v1317
        %v1680 = vpack.c.bf16 %v1530, %v1526
        %v1681 = vpack.c.bf16 %v1532, %v1528
        %v1682 = vpack.c.bf16 %v1329, %v1325
        %v1683 = vpack.c.bf16 %v1331, %v1327
        %v1684 = vpack.c.bf16 %v1540, %v1536
        %v1685 = vpack.c.bf16 %v1542, %v1538
        %v1686 = vpack.c.bf16 %v1339, %v1335
        %v1687 = vpack.c.bf16 %v1341, %v1337
        %v1688 = vpack.c.bf16 %v1550, %v1546
        %v1689 = vpack.c.bf16 %v1552, %v1548
        %v1690 = vpack.c.bf16 %v1349, %v1345
        %v1691 = vpack.c.bf16 %v1351, %v1347
        %v1692 = vpack.c.bf16 %v1560, %v1556
        %v1693 = vpack.c.bf16 %v1562, %v1558
        %v1694 = vpack.c.bf16 %v1359, %v1355
        %v1695 = vpack.c.bf16 %v1361, %v1357
        %v1696 = vpack.c.bf16 %v1570, %v1566
        %v1697 = vpack.c.bf16 %v1572, %v1568
        %v1698 = vpack.c.bf16 %v1369, %v1365
        %v1699 = vpack.c.bf16 %v1371, %v1367
        %v1700 = vpack.c.bf16 %v1580, %v1576
        %v1701 = vpack.c.bf16 %v1582, %v1578
        %v1702 = vpack.c.bf16 %v1379, %v1375
        %v1703 = vpack.c.bf16 %v1381, %v1377
        %v1704 = vpack.c.bf16 %v1590, %v1586
        %v1705 = vpack.c.bf16 %v1592, %v1588
        %v1706 = vpack.c.bf16 %v1389, %v1385
        %v1707 = vpack.c.bf16 %v1391, %v1387
        %v1708 = vpack.c.bf16 %v1600, %v1596
        %v1709 = vpack.c.bf16 %v1602, %v1598
        %v1710 = vpack.c.bf16 %v1399, %v1395
        %v1711 = vpack.c.bf16 %v1401, %v1397
        %v1712 = vpack.c.bf16 %v1610, %v1606
        %v1713 = vpack.c.bf16 %v1612, %v1608
        %v1714 = vpack.c.bf16 %v1409, %v1405
        %v1715 = vpack.c.bf16 %v1411, %v1407
        %v1716 = vpack.c.bf16 %v1620, %v1616
        %v1717 = vpack.c.bf16 %v1622, %v1618
        %v1718 = vpack.c.bf16 %v1419, %v1415
        %v1719 = vpack.c.bf16 %v1421, %v1417
        %v1720 = vpack.c.bf16 %v1630, %v1626
        %v1721 = vpack.c.bf16 %v1632, %v1628
        %v1722 = vpack.c.bf16 %v1429, %v1425
        %v1723 = vpack.c.bf16 %v1431, %v1427
        %v1724 = vpack.c.bf16 %v1640, %v1636
        %v1725 = vpack.c.bf16 %v1642, %v1638
        %v1726 = vpack.c.bf16 %v1439, %v1435
        %v1727 = vpack.c.bf16 %v1441, %v1437
        %v1728 = vpack.c.bf16 %v1650, %v1646
        %v1729 = vpack.c.bf16 %v1652, %v1648
        %v1730 = vpack.c.bf16 %v1445, %v1445
        %v1731 = vpack.c.bf16 %v1447, %v1447
        %v1732 = vpack.c.bf16 %v1656, %v1656
        %v1733 = vpack.c.bf16 %v1658, %v1658
        %v1734 = vxor.u32 %v1662, 2147516416
        %v1735 = vxor.u32 %v1666, 2147516416
        %v1736 = vxor.u32 %v1670, 2147516416
        %v1737 = vxor.u32 %v1674, 2147516416
        %v1738 = vxor.u32 %v1678, 2147516416
        %v1739 = vxor.u32 %v1682, 2147516416
        %v1740 = vxor.u32 %v1686, 2147516416
        %v1741 = vxor.u32 %v1690, 2147516416
        %v1742 = vxor.u32 %v1694, 2147516416
        %v1743 = vxor.u32 %v1698, 2147516416
        %v1744 = vxor.u32 %v1702, 2147516416
        %v1745 = vxor.u32 %v1706, 2147516416
        %v1746 = vxor.u32 %v1710, 2147516416
        %v1747 = vxor.u32 %v1714, 2147516416
        %v1748 = vxor.u32 %v1718, 2147516416
        %v1749 = vxor.u32 %v1722, 2147516416
        %v1750 = vxor.u32 %v1726, 2147516416
        %v1751 = vxor.u32 %v1730, 2147516416
        %v1753 = vmul.bf16 %v1734, 1069105081
        %v1754 = vpow.bf16.pop %v1753
        %v1756 = vmul.bf16 %v1735, 1069105081
        %v1757 = vpow.bf16.pop %v1756
        %v1759 = vmul.bf16 %v1736, 1069105081
        %v1760 = vpow.bf16.pop %v1759
        %v1762 = vmul.bf16 %v1737, 1069105081
        %v1763 = vpow.bf16.pop %v1762
        %v1765 = vmul.bf16 %v1738, 1069105081
        %v1766 = vpow.bf16.pop %v1765
        %v1768 = vmul.bf16 %v1739, 1069105081
        %v1769 = vpow.bf16.pop %v1768
        %v1771 = vmul.bf16 %v1740, 1069105081
        %v1772 = vpow.bf16.pop %v1771
        %v1774 = vmul.bf16 %v1741, 1069105081
        %v1775 = vpow.bf16.pop %v1774
        %v1777 = vmul.bf16 %v1742, 1069105081
        %v1778 = vpow.bf16.pop %v1777
        %v1780 = vmul.bf16 %v1743, 1069105081
        %v1781 = vpow.bf16.pop %v1780
        %v1783 = vmul.bf16 %v1744, 1069105081
        %v1784 = vpow.bf16.pop %v1783
        %v1786 = vmul.bf16 %v1745, 1069105081
        %v1787 = vpow.bf16.pop %v1786
        %v1789 = vmul.bf16 %v1746, 1069105081
        %v1790 = vpow.bf16.pop %v1789
        %v1792 = vmul.bf16 %v1747, 1069105081
        %v1793 = vpow.bf16.pop %v1792
        %v1795 = vmul.bf16 %v1748, 1069105081
        %v1796 = vpow.bf16.pop %v1795
        %v1798 = vmul.bf16 %v1749, 1069105081
        %v1799 = vpow.bf16.pop %v1798
        %v1801 = vmul.bf16 %v1750, 1069105081
        %v1802 = vpow.bf16.pop %v1801
        %v1804 = vmul.bf16 %v1751, 1069105081
        %v1805 = vpow.bf16.pop %v1804
        %v1806 = vadd.bf16 %v1754, 1065369472
        %v1807 = vadd.bf16 %v1757, 1065369472
        %v1808 = vadd.bf16 %v1760, 1065369472
        %v1809 = vadd.bf16 %v1763, 1065369472
        %v1810 = vadd.bf16 %v1766, 1065369472
        %v1811 = vadd.bf16 %v1769, 1065369472
        %v1812 = vadd.bf16 %v1772, 1065369472
        %v1813 = vadd.bf16 %v1775, 1065369472
        %v1814 = vadd.bf16 %v1778, 1065369472
        %v1815 = vadd.bf16 %v1781, 1065369472
        %v1816 = vadd.bf16 %v1784, 1065369472
        %v1817 = vadd.bf16 %v1787, 1065369472
        %v1818 = vadd.bf16 %v1790, 1065369472
        %v1819 = vadd.bf16 %v1793, 1065369472
        %v1820 = vadd.bf16 %v1796, 1065369472
        %v1821 = vadd.bf16 %v1799, 1065369472
        %v1822 = vadd.bf16 %v1802, 1065369472
        %v1823 = vadd.bf16 %v1805, 1065369472
        %v1824 = vrcp.bf16.pop %v1806
        %v1825 = vmul.bf16 1065369472, %v1824
        %v1826 = vrcp.bf16.pop %v1807
        %v1827 = vmul.bf16 1065369472, %v1826
        %v1828 = vrcp.bf16.pop %v1808
        %v1829 = vmul.bf16 1065369472, %v1828
        %v1830 = vrcp.bf16.pop %v1809
        %v1831 = vmul.bf16 1065369472, %v1830
        %v1832 = vrcp.bf16.pop %v1810
        %v1833 = vmul.bf16 1065369472, %v1832
        %v1834 = vrcp.bf16.pop %v1811
        %v1835 = vmul.bf16 1065369472, %v1834
        %v1836 = vrcp.bf16.pop %v1812
        %v1837 = vmul.bf16 1065369472, %v1836
        %v1838 = vrcp.bf16.pop %v1813
        %v1839 = vmul.bf16 1065369472, %v1838
        %v1840 = vrcp.bf16.pop %v1814
        %v1841 = vmul.bf16 1065369472, %v1840
        %v1842 = vrcp.bf16.pop %v1815
        %v1843 = vmul.bf16 1065369472, %v1842
        %v1844 = vrcp.bf16.pop %v1816
        %v1845 = vmul.bf16 1065369472, %v1844
        %v1846 = vrcp.bf16.pop %v1817
        %v1847 = vmul.bf16 1065369472, %v1846
        %v1848 = vrcp.bf16.pop %v1818
        %v1849 = vmul.bf16 1065369472, %v1848
        %v1850 = vrcp.bf16.pop %v1819
        %v1851 = vmul.bf16 1065369472, %v1850
        %v1852 = vrcp.bf16.pop %v1820
        %v1853 = vmul.bf16 1065369472, %v1852
        %v1854 = vrcp.bf16.pop %v1821
        %v1855 = vmul.bf16 1065369472, %v1854
        %v1856 = vrcp.bf16.pop %v1822
        %v1857 = vmul.bf16 1065369472, %v1856
        %v1858 = vrcp.bf16.pop %v1823
        %v1859 = vmul.bf16 1065369472, %v1858
        %v1860 = vxor.u32 %v1663, 2147516416
        %v1861 = vxor.u32 %v1667, 2147516416
        %v1862 = vxor.u32 %v1671, 2147516416
        %v1863 = vxor.u32 %v1675, 2147516416
        %v1864 = vxor.u32 %v1679, 2147516416
        %v1865 = vxor.u32 %v1683, 2147516416
        %v1866 = vxor.u32 %v1687, 2147516416
        %v1867 = vxor.u32 %v1691, 2147516416
        %v1868 = vxor.u32 %v1695, 2147516416
        %v1869 = vxor.u32 %v1699, 2147516416
        %v1870 = vxor.u32 %v1703, 2147516416
        %v1871 = vxor.u32 %v1707, 2147516416
        %v1872 = vxor.u32 %v1711, 2147516416
        %v1873 = vxor.u32 %v1715, 2147516416
        %v1874 = vxor.u32 %v1719, 2147516416
        %v1875 = vxor.u32 %v1723, 2147516416
        %v1876 = vxor.u32 %v1727, 2147516416
        %v1877 = vxor.u32 %v1731, 2147516416
        %v1879 = vmul.bf16 %v1860, 1069105081
        %v1880 = vpow.bf16.pop %v1879
        %v1882 = vmul.bf16 %v1861, 1069105081
        %v1883 = vpow.bf16.pop %v1882
        %v1885 = vmul.bf16 %v1862, 1069105081
        %v1886 = vpow.bf16.pop %v1885
        %v1888 = vmul.bf16 %v1863, 1069105081
        %v1889 = vpow.bf16.pop %v1888
        %v1891 = vmul.bf16 %v1864, 1069105081
        %v1892 = vpow.bf16.pop %v1891
        %v1894 = vmul.bf16 %v1865, 1069105081
        %v1895 = vpow.bf16.pop %v1894
        %v1897 = vmul.bf16 %v1866, 1069105081
        %v1898 = vpow.bf16.pop %v1897
        %v1900 = vmul.bf16 %v1867, 1069105081
        %v1901 = vpow.bf16.pop %v1900
        %v1903 = vmul.bf16 %v1868, 1069105081
        %v1904 = vpow.bf16.pop %v1903
        %v1906 = vmul.bf16 %v1869, 1069105081
        %v1907 = vpow.bf16.pop %v1906
        %v1909 = vmul.bf16 %v1870, 1069105081
        %v1910 = vpow.bf16.pop %v1909
        %v1912 = vmul.bf16 %v1871, 1069105081
        %v1913 = vpow.bf16.pop %v1912
        %v1915 = vmul.bf16 %v1872, 1069105081
        %v1916 = vpow.bf16.pop %v1915
        %v1918 = vmul.bf16 %v1873, 1069105081
        %v1919 = vpow.bf16.pop %v1918
        %v1921 = vmul.bf16 %v1874, 1069105081
        %v1922 = vpow.bf16.pop %v1921
        %v1924 = vmul.bf16 %v1875, 1069105081
        %v1925 = vpow.bf16.pop %v1924
        %v1927 = vmul.bf16 %v1876, 1069105081
        %v1928 = vpow.bf16.pop %v1927
        %v1930 = vmul.bf16 %v1877, 1069105081
        %v1931 = vpow.bf16.pop %v1930
        %v1932 = vadd.bf16 %v1880, 1065369472
        %v1933 = vadd.bf16 %v1883, 1065369472
        %v1934 = vadd.bf16 %v1886, 1065369472
        %v1935 = vadd.bf16 %v1889, 1065369472
        %v1936 = vadd.bf16 %v1892, 1065369472
        %v1937 = vadd.bf16 %v1895, 1065369472
        %v1938 = vadd.bf16 %v1898, 1065369472
        %v1939 = vadd.bf16 %v1901, 1065369472
        %v1940 = vadd.bf16 %v1904, 1065369472
        %v1941 = vadd.bf16 %v1907, 1065369472
        %v1942 = vadd.bf16 %v1910, 1065369472
        %v1943 = vadd.bf16 %v1913, 1065369472
        %v1944 = vadd.bf16 %v1916, 1065369472
        %v1945 = vadd.bf16 %v1919, 1065369472
        %v1946 = vadd.bf16 %v1922, 1065369472
        %v1947 = vadd.bf16 %v1925, 1065369472
        %v1948 = vadd.bf16 %v1928, 1065369472
        %v1949 = vadd.bf16 %v1931, 1065369472
        %v1950 = vrcp.bf16.pop %v1932
        %v1951 = vmul.bf16 1065369472, %v1950
        %v1952 = vrcp.bf16.pop %v1933
        %v1953 = vmul.bf16 1065369472, %v1952
        %v1954 = vrcp.bf16.pop %v1934
        %v1955 = vmul.bf16 1065369472, %v1954
        %v1956 = vrcp.bf16.pop %v1935
        %v1957 = vmul.bf16 1065369472, %v1956
        %v1958 = vrcp.bf16.pop %v1936
        %v1959 = vmul.bf16 1065369472, %v1958
        %v1960 = vrcp.bf16.pop %v1937
        %v1961 = vmul.bf16 1065369472, %v1960
        %v1962 = vrcp.bf16.pop %v1938
        %v1963 = vmul.bf16 1065369472, %v1962
        %v1964 = vrcp.bf16.pop %v1939
        %v1965 = vmul.bf16 1065369472, %v1964
        %v1966 = vrcp.bf16.pop %v1940
        %v1967 = vmul.bf16 1065369472, %v1966
        %v1968 = vrcp.bf16.pop %v1941
        %v1969 = vmul.bf16 1065369472, %v1968
        %v1970 = vrcp.bf16.pop %v1942
        %v1971 = vmul.bf16 1065369472, %v1970
        %v1972 = vrcp.bf16.pop %v1943
        %v1973 = vmul.bf16 1065369472, %v1972
        %v1974 = vrcp.bf16.pop %v1944
        %v1975 = vmul.bf16 1065369472, %v1974
        %v1976 = vrcp.bf16.pop %v1945
        %v1977 = vmul.bf16 1065369472, %v1976
        %v1978 = vrcp.bf16.pop %v1946
        %v1979 = vmul.bf16 1065369472, %v1978
        %v1980 = vrcp.bf16.pop %v1947
        %v1981 = vmul.bf16 1065369472, %v1980
        %v1982 = vrcp.bf16.pop %v1948
        %v1983 = vmul.bf16 1065369472, %v1982
        %v1984 = vrcp.bf16.pop %v1949
        %v1985 = vmul.bf16 1065369472, %v1984
        %v1986 = vxor.u32 %v1664, 2147516416
        %v1987 = vxor.u32 %v1668, 2147516416
        %v1988 = vxor.u32 %v1672, 2147516416
        %v1989 = vxor.u32 %v1676, 2147516416
        %v1990 = vxor.u32 %v1680, 2147516416
        %v1991 = vxor.u32 %v1684, 2147516416
        %v1992 = vxor.u32 %v1688, 2147516416
        %v1993 = vxor.u32 %v1692, 2147516416
        %v1994 = vxor.u32 %v1696, 2147516416
        %v1995 = vxor.u32 %v1700, 2147516416
        %v1996 = vxor.u32 %v1704, 2147516416
        %v1997 = vxor.u32 %v1708, 2147516416
        %v1998 = vxor.u32 %v1712, 2147516416
        %v1999 = vxor.u32 %v1716, 2147516416
        %v2000 = vxor.u32 %v1720, 2147516416
        %v2001 = vxor.u32 %v1724, 2147516416
        %v2002 = vxor.u32 %v1728, 2147516416
        %v2003 = vxor.u32 %v1732, 2147516416
        %v2005 = vmul.bf16 %v1986, 1069105081
        %v2006 = vpow.bf16.pop %v2005
        %v2008 = vmul.bf16 %v1987, 1069105081
        %v2009 = vpow.bf16.pop %v2008
        %v2011 = vmul.bf16 %v1988, 1069105081
        %v2012 = vpow.bf16.pop %v2011
        %v2014 = vmul.bf16 %v1989, 1069105081
        %v2015 = vpow.bf16.pop %v2014
        %v2017 = vmul.bf16 %v1990, 1069105081
        %v2018 = vpow.bf16.pop %v2017
        %v2020 = vmul.bf16 %v1991, 1069105081
        %v2021 = vpow.bf16.pop %v2020
        %v2023 = vmul.bf16 %v1992, 1069105081
        %v2024 = vpow.bf16.pop %v2023
        %v2026 = vmul.bf16 %v1993, 1069105081
        %v2027 = vpow.bf16.pop %v2026
        %v2029 = vmul.bf16 %v1994, 1069105081
        %v2030 = vpow.bf16.pop %v2029
        %v2032 = vmul.bf16 %v1995, 1069105081
        %v2033 = vpow.bf16.pop %v2032
        %v2035 = vmul.bf16 %v1996, 1069105081
        %v2036 = vpow.bf16.pop %v2035
        %v2038 = vmul.bf16 %v1997, 1069105081
        %v2039 = vpow.bf16.pop %v2038
        %v2041 = vmul.bf16 %v1998, 1069105081
        %v2042 = vpow.bf16.pop %v2041
        %v2044 = vmul.bf16 %v1999, 1069105081
        %v2045 = vpow.bf16.pop %v2044
        %v2047 = vmul.bf16 %v2000, 1069105081
        %v2048 = vpow.bf16.pop %v2047
        %v2050 = vmul.bf16 %v2001, 1069105081
        %v2051 = vpow.bf16.pop %v2050
        %v2053 = vmul.bf16 %v2002, 1069105081
        %v2054 = vpow.bf16.pop %v2053
        %v2056 = vmul.bf16 %v2003, 1069105081
        %v2057 = vpow.bf16.pop %v2056
        %v2058 = vadd.bf16 %v2006, 1065369472
        %v2059 = vadd.bf16 %v2009, 1065369472
        %v2060 = vadd.bf16 %v2012, 1065369472
        %v2061 = vadd.bf16 %v2015, 1065369472
        %v2062 = vadd.bf16 %v2018, 1065369472
        %v2063 = vadd.bf16 %v2021, 1065369472
        %v2064 = vadd.bf16 %v2024, 1065369472
        %v2065 = vadd.bf16 %v2027, 1065369472
        %v2066 = vadd.bf16 %v2030, 1065369472
        %v2067 = vadd.bf16 %v2033, 1065369472
        %v2068 = vadd.bf16 %v2036, 1065369472
        %v2069 = vadd.bf16 %v2039, 1065369472
        %v2070 = vadd.bf16 %v2042, 1065369472
        %v2071 = vadd.bf16 %v2045, 1065369472
        %v2072 = vadd.bf16 %v2048, 1065369472
        %v2073 = vadd.bf16 %v2051, 1065369472
        %v2074 = vadd.bf16 %v2054, 1065369472
        %v2075 = vadd.bf16 %v2057, 1065369472
        %v2076 = vrcp.bf16.pop %v2058
        %v2077 = vmul.bf16 1065369472, %v2076
        %v2078 = vrcp.bf16.pop %v2059
        %v2079 = vmul.bf16 1065369472, %v2078
        %v2080 = vrcp.bf16.pop %v2060
        %v2081 = vmul.bf16 1065369472, %v2080
        %v2082 = vrcp.bf16.pop %v2061
        %v2083 = vmul.bf16 1065369472, %v2082
        %v2084 = vrcp.bf16.pop %v2062
        %v2085 = vmul.bf16 1065369472, %v2084
        %v2086 = vrcp.bf16.pop %v2063
        %v2087 = vmul.bf16 1065369472, %v2086
        %v2088 = vrcp.bf16.pop %v2064
        %v2089 = vmul.bf16 1065369472, %v2088
        %v2090 = vrcp.bf16.pop %v2065
        %v2091 = vmul.bf16 1065369472, %v2090
        %v2092 = vrcp.bf16.pop %v2066
        %v2093 = vmul.bf16 1065369472, %v2092
        %v2094 = vrcp.bf16.pop %v2067
        %v2095 = vmul.bf16 1065369472, %v2094
        %v2096 = vrcp.bf16.pop %v2068
        %v2097 = vmul.bf16 1065369472, %v2096
        %v2098 = vrcp.bf16.pop %v2069
        %v2099 = vmul.bf16 1065369472, %v2098
        %v2100 = vrcp.bf16.pop %v2070
        %v2101 = vmul.bf16 1065369472, %v2100
        %v2102 = vrcp.bf16.pop %v2071
        %v2103 = vmul.bf16 1065369472, %v2102
        %v2104 = vrcp.bf16.pop %v2072
        %v2105 = vmul.bf16 1065369472, %v2104
        %v2106 = vrcp.bf16.pop %v2073
        %v2107 = vmul.bf16 1065369472, %v2106
        %v2108 = vrcp.bf16.pop %v2074
        %v2109 = vmul.bf16 1065369472, %v2108
        %v2110 = vrcp.bf16.pop %v2075
        %v2111 = vmul.bf16 1065369472, %v2110
        %v2112 = vtanh.bf16.pop %v1665
        %v2113 = vtanh.bf16.pop %v1669
        %v2114 = vtanh.bf16.pop %v1673
        %v2115 = vtanh.bf16.pop %v1677
        %v2116 = vtanh.bf16.pop %v1681
        %v2117 = vtanh.bf16.pop %v1685
        %v2118 = vtanh.bf16.pop %v1689
        %v2119 = vtanh.bf16.pop %v1693
        %v2120 = vtanh.bf16.pop %v1697
        %v2121 = vtanh.bf16.pop %v1701
        %v2122 = vtanh.bf16.pop %v1705
        %v2123 = vtanh.bf16.pop %v1709
        %v2124 = vtanh.bf16.pop %v1713
        %v2125 = vtanh.bf16.pop %v1717
        %v2126 = vtanh.bf16.pop %v1721
        %v2127 = vtanh.bf16.pop %v1725
        %v2128 = vtanh.bf16.pop %v1729
        %v2129 = vtanh.bf16.pop %v1733
        %v2130 = vunpack.c.l.bf16 %v1951
        %v2131 = vunpack.c.h.bf16 %v1951
        %v2132 = vunpack.c.l.bf16 %v1953
        %v2133 = vunpack.c.h.bf16 %v1953
        %v2134 = vunpack.c.l.bf16 %v1955
        %v2135 = vunpack.c.h.bf16 %v1955
        %v2136 = vunpack.c.l.bf16 %v1957
        %v2137 = vunpack.c.h.bf16 %v1957
        %v2138 = vunpack.c.l.bf16 %v1959
        %v2139 = vunpack.c.h.bf16 %v1959
        %v2140 = vunpack.c.l.bf16 %v1961
        %v2141 = vunpack.c.h.bf16 %v1961
        %v2142 = vunpack.c.l.bf16 %v1963
        %v2143 = vunpack.c.h.bf16 %v1963
        %v2144 = vunpack.c.l.bf16 %v1965
        %v2145 = vunpack.c.h.bf16 %v1965
        %v2146 = vunpack.c.l.bf16 %v1967
        %v2147 = vunpack.c.h.bf16 %v1967
        %v2148 = vunpack.c.l.bf16 %v1969
        %v2149 = vunpack.c.h.bf16 %v1969
        %v2150 = vunpack.c.l.bf16 %v1971
        %v2151 = vunpack.c.h.bf16 %v1971
        %v2152 = vunpack.c.l.bf16 %v1973
        %v2153 = vunpack.c.h.bf16 %v1973
        %v2154 = vunpack.c.l.bf16 %v1975
        %v2155 = vunpack.c.h.bf16 %v1975
        %v2156 = vunpack.c.l.bf16 %v1977
        %v2157 = vunpack.c.h.bf16 %v1977
        %v2158 = vunpack.c.l.bf16 %v1979
        %v2159 = vunpack.c.h.bf16 %v1979
        %v2160 = vunpack.c.l.bf16 %v1981
        %v2161 = vunpack.c.h.bf16 %v1981
        %v2162 = vunpack.c.l.bf16 %v1983
        %v2163 = vunpack.c.h.bf16 %v1983
        %v2164 = vunpack.c.l.bf16 %v1985
        %v2165 = vld [vmem:[#allocation3] sm:$0xff]
        %v2166 = vld [vmem:[#allocation3 + $0x8] sm:$0xff]
        %v2167 = vld [vmem:[#allocation3 + $0x10] sm:$0xff]
        %v2168 = vld [vmem:[#allocation3 + $0x18] sm:$0xff]
        %v2169 = vld [vmem:[#allocation3 + $0x20] sm:$0xff]
        %v2170 = vld [vmem:[#allocation3 + $0x28] sm:$0xff]
        %v2171 = vld [vmem:[#allocation3 + $0x30] sm:$0xff]
        %v2172 = vld [vmem:[#allocation3 + $0x38] sm:$0xff]
        %v2173 = vld [vmem:[#allocation3 + $0x40] sm:$0xff]
        %v2174 = vld [vmem:[#allocation3 + $0x48] sm:$0xff]
        %v2175 = vld [vmem:[#allocation3 + $0x50] sm:$0xff]
        %v2176 = vld [vmem:[#allocation3 + $0x58] sm:$0xff]
        %v2177 = vld [vmem:[#allocation3 + $0x60] sm:$0xff]
        %v2178 = vld [vmem:[#allocation3 + $0x68] sm:$0xff]
        %v2179 = vld [vmem:[#allocation3 + $0x70] sm:$0xff]
        %v2180 = vld [vmem:[#allocation3 + $0x78] sm:$0xff]
        %v2181 = vld [vmem:[#allocation3 + $0x80] sm:$0xff]
        %v2182 = vld [vmem:[#allocation3 + $0x88] sm:$0xff]
        %v2183 = vld [vmem:[#allocation3 + $0x90] sm:$0xff]
        %v2184 = vld [vmem:[#allocation3 + $0x98] sm:$0xff]
        %v2185 = vld [vmem:[#allocation3 + $0xa0] sm:$0xff]
        %v2186 = vld [vmem:[#allocation3 + $0xa8] sm:$0xff]
        %v2187 = vld [vmem:[#allocation3 + $0xb0] sm:$0xff]
        %v2188 = vld [vmem:[#allocation3 + $0xb8] sm:$0xff]
        %v2189 = vld [vmem:[#allocation3 + $0xc0] sm:$0xff]
        %v2190 = vld [vmem:[#allocation3 + $0xc8] sm:$0xff]
        %v2191 = vld [vmem:[#allocation3 + $0xd0] sm:$0xff]
        %v2192 = vld [vmem:[#allocation3 + $0xd8] sm:$0xff]
        %v2193 = vld [vmem:[#allocation3 + $0xe0] sm:$0xff]
        %v2194 = vld [vmem:[#allocation3 + $0xe8] sm:$0xff]
        %v2195 = vld [vmem:[#allocation3 + $0xf0] sm:$0xff]
        %v2196 = vld [vmem:[#allocation3 + $0xf8] sm:$0xff]
        %v2197 = vld [vmem:[#allocation3 + $0x100] sm:$0xff]
        %v2198 = vld [vmem:[#allocation3 + $0x108] sm:$0xff]
        %v2199 = vld [vmem:[#allocation3 + $0x110] sm:$0xff]
        %v2200 = vmul.f32 %v2130, %v2165
        %v2201 = vmul.f32 %v2131, %v2166
        %v2202 = vmul.f32 %v2132, %v2167
        %v2203 = vmul.f32 %v2133, %v2168
        %v2204 = vmul.f32 %v2134, %v2169
        %v2205 = vmul.f32 %v2135, %v2170
        %v2206 = vmul.f32 %v2136, %v2171
        %v2207 = vmul.f32 %v2137, %v2172
        %v2208 = vmul.f32 %v2138, %v2173
        %v2209 = vmul.f32 %v2139, %v2174
        %v2210 = vmul.f32 %v2140, %v2175
        %v2211 = vmul.f32 %v2141, %v2176
        %v2212 = vmul.f32 %v2142, %v2177
        %v2213 = vmul.f32 %v2143, %v2178
        %v2214 = vmul.f32 %v2144, %v2179
        %v2215 = vmul.f32 %v2145, %v2180
        %v2216 = vmul.f32 %v2146, %v2181
        %v2217 = vmul.f32 %v2147, %v2182
        %v2218 = vmul.f32 %v2148, %v2183
        %v2219 = vmul.f32 %v2149, %v2184
        %v2220 = vmul.f32 %v2150, %v2185
        %v2221 = vmul.f32 %v2151, %v2186
        %v2222 = vmul.f32 %v2152, %v2187
        %v2223 = vmul.f32 %v2153, %v2188
        %v2224 = vmul.f32 %v2154, %v2189
        %v2225 = vmul.f32 %v2155, %v2190
        %v2226 = vmul.f32 %v2156, %v2191
        %v2227 = vmul.f32 %v2157, %v2192
        %v2228 = vmul.f32 %v2158, %v2193
        %v2229 = vmul.f32 %v2159, %v2194
        %v2230 = vmul.f32 %v2160, %v2195
        %v2231 = vmul.f32 %v2161, %v2196
        %v2232 = vmul.f32 %v2162, %v2197
        %v2233 = vmul.f32 %v2163, %v2198
        %v2234 = vmul.f32 %v2164, %v2199
        %v2235 = vmul.bf16 %v1825, %v2112
        %v2236 = vmul.bf16 %v1827, %v2113
        %v2237 = vmul.bf16 %v1829, %v2114
        %v2238 = vmul.bf16 %v1831, %v2115
        %v2239 = vmul.bf16 %v1833, %v2116
        %v2240 = vmul.bf16 %v1835, %v2117
        %v2241 = vmul.bf16 %v1837, %v2118
        %v2242 = vmul.bf16 %v1839, %v2119
        %v2243 = vmul.bf16 %v1841, %v2120
        %v2244 = vmul.bf16 %v1843, %v2121
        %v2245 = vmul.bf16 %v1845, %v2122
        %v2246 = vmul.bf16 %v1847, %v2123
        %v2247 = vmul.bf16 %v1849, %v2124
        %v2248 = vmul.bf16 %v1851, %v2125
        %v2249 = vmul.bf16 %v1853, %v2126
        %v2250 = vmul.bf16 %v1855, %v2127
        %v2251 = vmul.bf16 %v1857, %v2128
        %v2252 = vmul.bf16 %v1859, %v2129
        %v2253 = vunpack.c.l.bf16 %v2235
        %v2254 = vunpack.c.h.bf16 %v2235
        %v2255 = vunpack.c.l.bf16 %v2236
        %v2256 = vunpack.c.h.bf16 %v2236
        %v2257 = vunpack.c.l.bf16 %v2237
        %v2258 = vunpack.c.h.bf16 %v2237
        %v2259 = vunpack.c.l.bf16 %v2238
        %v2260 = vunpack.c.h.bf16 %v2238
        %v2261 = vunpack.c.l.bf16 %v2239
        %v2262 = vunpack.c.h.bf16 %v2239
        %v2263 = vunpack.c.l.bf16 %v2240
        %v2264 = vunpack.c.h.bf16 %v2240
        %v2265 = vunpack.c.l.bf16 %v2241
        %v2266 = vunpack.c.h.bf16 %v2241
        %v2267 = vunpack.c.l.bf16 %v2242
        %v2268 = vunpack.c.h.bf16 %v2242
        %v2269 = vunpack.c.l.bf16 %v2243
        %v2270 = vunpack.c.h.bf16 %v2243
        %v2271 = vunpack.c.l.bf16 %v2244
        %v2272 = vunpack.c.h.bf16 %v2244
        %v2273 = vunpack.c.l.bf16 %v2245
        %v2274 = vunpack.c.h.bf16 %v2245
        %v2275 = vunpack.c.l.bf16 %v2246
        %v2276 = vunpack.c.h.bf16 %v2246
        %v2277 = vunpack.c.l.bf16 %v2247
        %v2278 = vunpack.c.h.bf16 %v2247
        %v2279 = vunpack.c.l.bf16 %v2248
        %v2280 = vunpack.c.h.bf16 %v2248
        %v2281 = vunpack.c.l.bf16 %v2249
        %v2282 = vunpack.c.h.bf16 %v2249
        %v2283 = vunpack.c.l.bf16 %v2250
        %v2284 = vunpack.c.h.bf16 %v2250
        %v2285 = vunpack.c.l.bf16 %v2251
        %v2286 = vunpack.c.h.bf16 %v2251
        %v2287 = vunpack.c.l.bf16 %v2252
        %v2288 = vadd.f32 %v2200, %v2253
        %v2289 = vadd.f32 %v2201, %v2254
        %v2290 = vadd.f32 %v2202, %v2255
        %v2291 = vadd.f32 %v2203, %v2256
        %v2292 = vadd.f32 %v2204, %v2257
        %v2293 = vadd.f32 %v2205, %v2258
        %v2294 = vadd.f32 %v2206, %v2259
        %v2295 = vadd.f32 %v2207, %v2260
        %v2296 = vadd.f32 %v2208, %v2261
        %v2297 = vadd.f32 %v2209, %v2262
        %v2298 = vadd.f32 %v2210, %v2263
        %v2299 = vadd.f32 %v2211, %v2264
        %v2300 = vadd.f32 %v2212, %v2265
        %v2301 = vadd.f32 %v2213, %v2266
        %v2302 = vadd.f32 %v2214, %v2267
        %v2303 = vadd.f32 %v2215, %v2268
        %v2304 = vadd.f32 %v2216, %v2269
        %v2305 = vadd.f32 %v2217, %v2270
        %v2306 = vadd.f32 %v2218, %v2271
        %v2307 = vadd.f32 %v2219, %v2272
        %v2308 = vadd.f32 %v2220, %v2273
        %v2309 = vadd.f32 %v2221, %v2274
        %v2310 = vadd.f32 %v2222, %v2275
        %v2311 = vadd.f32 %v2223, %v2276
        %v2312 = vadd.f32 %v2224, %v2277
        %v2313 = vadd.f32 %v2225, %v2278
        %v2314 = vadd.f32 %v2226, %v2279
        %v2315 = vadd.f32 %v2227, %v2280
        %v2316 = vadd.f32 %v2228, %v2281
        %v2317 = vadd.f32 %v2229, %v2282
        %v2318 = vadd.f32 %v2230, %v2283
        %v2319 = vadd.f32 %v2231, %v2284
        %v2320 = vadd.f32 %v2232, %v2285
        %v2321 = vadd.f32 %v2233, %v2286
        %v2322 = vadd.f32 %v2234, %v2287
        %v2323 = vpack.c.bf16 %v2289, %v2288
        %v2324 = vpack.c.bf16 %v2291, %v2290
        %v2325 = vpack.c.bf16 %v2293, %v2292
        %v2326 = vpack.c.bf16 %v2295, %v2294
        %v2327 = vpack.c.bf16 %v2297, %v2296
        %v2328 = vpack.c.bf16 %v2299, %v2298
        %v2329 = vpack.c.bf16 %v2301, %v2300
        %v2330 = vpack.c.bf16 %v2303, %v2302
        %v2331 = vpack.c.bf16 %v2305, %v2304
        %v2332 = vpack.c.bf16 %v2307, %v2306
        %v2333 = vpack.c.bf16 %v2309, %v2308
        %v2334 = vpack.c.bf16 %v2311, %v2310
        %v2335 = vpack.c.bf16 %v2313, %v2312
        %v2336 = vpack.c.bf16 %v2315, %v2314
        %v2337 = vpack.c.bf16 %v2317, %v2316
        %v2338 = vpack.c.bf16 %v2319, %v2318
        %v2339 = vpack.c.bf16 %v2321, %v2320
        %v2340 = vpack.c.bf16 %v2322, %v2322
        %v2341 = vtanh.bf16.pop %v2323
        %v2342 = vtanh.bf16.pop %v2324
        %v2343 = vtanh.bf16.pop %v2325
        %v2344 = vtanh.bf16.pop %v2326
        %v2345 = vtanh.bf16.pop %v2327
        %v2346 = vtanh.bf16.pop %v2328
        %v2347 = vtanh.bf16.pop %v2329
        %v2348 = vtanh.bf16.pop %v2330
        %v2349 = vtanh.bf16.pop %v2331
        %v2350 = vtanh.bf16.pop %v2332
        %v2351 = vtanh.bf16.pop %v2333
        %v2352 = vtanh.bf16.pop %v2334
        %v2353 = vtanh.bf16.pop %v2335
        %v2354 = vtanh.bf16.pop %v2336
        %v2355 = vtanh.bf16.pop %v2337
        %v2356 = vtanh.bf16.pop %v2338
        %v2357 = vtanh.bf16.pop %v2339
        %v2358 = vtanh.bf16.pop %v2340
        %v2359 = vmul.bf16 %v2077, %v2341
        %v2360 = vmul.bf16 %v2079, %v2342
        %v2361 = vmul.bf16 %v2081, %v2343
        %v2362 = vmul.bf16 %v2083, %v2344
        %v2363 = vmul.bf16 %v2085, %v2345
        %v2364 = vmul.bf16 %v2087, %v2346
        %v2365 = vmul.bf16 %v2089, %v2347
        %v2366 = vmul.bf16 %v2091, %v2348
        %v2367 = vmul.bf16 %v2093, %v2349
        %v2368 = vmul.bf16 %v2095, %v2350
        %v2369 = vmul.bf16 %v2097, %v2351
        %v2370 = vmul.bf16 %v2099, %v2352
        %v2371 = vmul.bf16 %v2101, %v2353
        %v2372 = vmul.bf16 %v2103, %v2354
        %v2373 = vmul.bf16 %v2105, %v2355
        %v2374 = vmul.bf16 %v2107, %v2356
        %v2375 = vmul.bf16 %v2109, %v2357
        %v2376 = vmul.bf16 %v2111, %v2358
        %2377 = vst [vmem:[#allocation3] sm:$0xff] %v2288
        %2378 = vst [vmem:[#allocation3 + $0x8] sm:$0xff] %v2289
        %2379 = vst [vmem:[#allocation3 + $0x10] sm:$0xff] %v2290
        %2380 = vst [vmem:[#allocation3 + $0x18] sm:$0xff] %v2291
        %2381 = vst [vmem:[#allocation3 + $0x20] sm:$0xff] %v2292
        %2382 = vst [vmem:[#allocation3 + $0x28] sm:$0xff] %v2293
        %2383 = vst [vmem:[#allocation3 + $0x30] sm:$0xff] %v2294
        %2384 = vst [vmem:[#allocation3 + $0x38] sm:$0xff] %v2295
        %2385 = vst [vmem:[#allocation3 + $0x40] sm:$0xff] %v2296
        %2386 = vst [vmem:[#allocation3 + $0x48] sm:$0xff] %v2297
        %2387 = vst [vmem:[#allocation3 + $0x50] sm:$0xff] %v2298
        %2388 = vst [vmem:[#allocation3 + $0x58] sm:$0xff] %v2299
        %2389 = vst [vmem:[#allocation3 + $0x60] sm:$0xff] %v2300
        %2390 = vst [vmem:[#allocation3 + $0x68] sm:$0xff] %v2301
        %2391 = vst [vmem:[#allocation3 + $0x70] sm:$0xff] %v2302
        %2392 = vst [vmem:[#allocation3 + $0x78] sm:$0xff] %v2303
        %2393 = vst [vmem:[#allocation3 + $0x80] sm:$0xff] %v2304
        %2394 = vst [vmem:[#allocation3 + $0x88] sm:$0xff] %v2305
        %2395 = vst [vmem:[#allocation3 + $0x90] sm:$0xff] %v2306
        %2396 = vst [vmem:[#allocation3 + $0x98] sm:$0xff] %v2307
        %2397 = vst [vmem:[#allocation3 + $0xa0] sm:$0xff] %v2308
        %2398 = vst [vmem:[#allocation3 + $0xa8] sm:$0xff] %v2309
        %2399 = vst [vmem:[#allocation3 + $0xb0] sm:$0xff] %v2310
        %2400 = vst [vmem:[#allocation3 + $0xb8] sm:$0xff] %v2311
        %2401 = vst [vmem:[#allocation3 + $0xc0] sm:$0xff] %v2312
        %2402 = vst [vmem:[#allocation3 + $0xc8] sm:$0xff] %v2313
        %2403 = vst [vmem:[#allocation3 + $0xd0] sm:$0xff] %v2314
        %2404 = vst [vmem:[#allocation3 + $0xd8] sm:$0xff] %v2315
        %2405 = vst [vmem:[#allocation3 + $0xe0] sm:$0xff] %v2316
        %2406 = vst [vmem:[#allocation3 + $0xe8] sm:$0xff] %v2317
        %2407 = vst [vmem:[#allocation3 + $0xf0] sm:$0xff] %v2318
        %2408 = vst [vmem:[#allocation3 + $0xf8] sm:$0xff] %v2319
        %2409 = vst [vmem:[#allocation3 + $0x100] sm:$0xff] %v2320
        %2410 = vst [vmem:[#allocation3 + $0x108] sm:$0xff] %v2321
        %2411 = vst [vmem:[#allocation3 + $0x110] sm:$0xff] %v2322
        %v2430 = vunpack.c.l.b16 %v2359
        %v2431 = vunpack.c.h.b16 %v2359
        %v2432 = vunpack.c.l.b16 %v2360
        %v2433 = vunpack.c.h.b16 %v2360
        %v2434 = vunpack.c.l.b16 %v2361
        %v2435 = vunpack.c.h.b16 %v2361
        %v2436 = vunpack.c.l.b16 %v2362
        %v2437 = vunpack.c.h.b16 %v2362
        %v2438 = vunpack.c.l.b16 %v2363
        %v2439 = vunpack.c.h.b16 %v2363
        %v2440 = vunpack.c.l.b16 %v2364
        %v2441 = vunpack.c.h.b16 %v2364
        %v2442 = vunpack.c.l.b16 %v2365
        %v2443 = vunpack.c.h.b16 %v2365
        %v2444 = vunpack.c.l.b16 %v2366
        %v2445 = vunpack.c.h.b16 %v2366
        %v2446 = vunpack.c.l.b16 %v2367
        %v2447 = vunpack.c.h.b16 %v2367
        %v2448 = vunpack.c.l.b16 %v2368
        %v2449 = vunpack.c.h.b16 %v2368
        %v2450 = vunpack.c.l.b16 %v2369
        %v2451 = vunpack.c.h.b16 %v2369
        %v2452 = vunpack.c.l.b16 %v2370
        %v2453 = vunpack.c.h.b16 %v2370
        %v2454 = vunpack.c.l.b16 %v2371
        %v2455 = vunpack.c.h.b16 %v2371
        %v2456 = vunpack.c.l.b16 %v2372
        %v2457 = vunpack.c.h.b16 %v2372
        %v2458 = vunpack.c.l.b16 %v2373
        %v2459 = vunpack.c.h.b16 %v2373
        %v2460 = vunpack.c.l.b16 %v2374
        %v2461 = vunpack.c.h.b16 %v2374
        %v2462 = vunpack.c.l.b16 %v2375
        %v2463 = vunpack.c.h.b16 %v2375
        %v2464 = vunpack.c.l.b16 %v2376
        %v2465 = vpack.c.b16 %v2430, %v2430
        %v2466 = vpack.c.b16 %v2431, %v2431
        %v2467 = vpack.c.b16 %v2432, %v2432
        %v2468 = vpack.c.b16 %v2433, %v2433
        %v2469 = vpack.c.b16 %v2434, %v2434
        %v2470 = vpack.c.b16 %v2435, %v2435
        %v2471 = vpack.c.b16 %v2436, %v2436
        %v2472 = vpack.c.b16 %v2437, %v2437
        %v2473 = vpack.c.b16 %v2438, %v2438
        %v2474 = vpack.c.b16 %v2439, %v2439
        %v2475 = vpack.c.b16 %v2440, %v2440
        %v2476 = vpack.c.b16 %v2441, %v2441
        %v2477 = vpack.c.b16 %v2442, %v2442
        %v2478 = vpack.c.b16 %v2443, %v2443
        %v2479 = vpack.c.b16 %v2444, %v2444
        %v2480 = vpack.c.b16 %v2445, %v2445
        %v2481 = vpack.c.b16 %v2446, %v2446
        %v2482 = vpack.c.b16 %v2447, %v2447
        %v2483 = vpack.c.b16 %v2448, %v2448
        %v2484 = vpack.c.b16 %v2449, %v2449
        %v2485 = vpack.c.b16 %v2450, %v2450
        %v2486 = vpack.c.b16 %v2451, %v2451
        %v2487 = vpack.c.b16 %v2452, %v2452
        %v2488 = vpack.c.b16 %v2453, %v2453
        %v2489 = vpack.c.b16 %v2454, %v2454
        %v2490 = vpack.c.b16 %v2455, %v2455
        %v2491 = vpack.c.b16 %v2456, %v2456
        %v2492 = vpack.c.b16 %v2457, %v2457
        %v2493 = vpack.c.b16 %v2458, %v2458
        %v2494 = vpack.c.b16 %v2459, %v2459
        %v2495 = vpack.c.b16 %v2460, %v2460
        %v2496 = vpack.c.b16 %v2461, %v2461
        %v2497 = vpack.c.b16 %v2462, %v2462
        %v2498 = vpack.c.b16 %v2463, %v2463
        %v2499 = vpack.c.b16 %v2464, %v2464
        %2535 = vst [vmem:[#allocation2] sm:$0xf] %v2465
        %2536 = vst [vmem:[#allocation2 + $0x4] sm:$0xf] %v2466
        %2537 = vst [vmem:[#allocation2 + $0x8] sm:$0xf] %v2467
        %2538 = vst [vmem:[#allocation2 + $0xc] sm:$0xf] %v2468
        %2539 = vst [vmem:[#allocation2 + $0x10] sm:$0xf] %v2469
        %2540 = vst [vmem:[#allocation2 + $0x14] sm:$0xf] %v2470
        %2541 = vst [vmem:[#allocation2 + $0x18] sm:$0xf] %v2471
        %2542 = vst [vmem:[#allocation2 + $0x1c] sm:$0xf] %v2472
        %2543 = vst [vmem:[#allocation2 + $0x20] sm:$0xf] %v2473
        %2544 = vst [vmem:[#allocation2 + $0x24] sm:$0xf] %v2474
        %2545 = vst [vmem:[#allocation2 + $0x28] sm:$0xf] %v2475
        %2546 = vst [vmem:[#allocation2 + $0x2c] sm:$0xf] %v2476
        %2547 = vst [vmem:[#allocation2 + $0x30] sm:$0xf] %v2477
        %2548 = vst [vmem:[#allocation2 + $0x34] sm:$0xf] %v2478
        %2549 = vst [vmem:[#allocation2 + $0x38] sm:$0xf] %v2479
        %2550 = vst [vmem:[#allocation2 + $0x3c] sm:$0xf] %v2480
        %2551 = vst [vmem:[#allocation2 + $0x40] sm:$0xf] %v2481
        %2552 = vst [vmem:[#allocation2 + $0x44] sm:$0xf] %v2482
        %2553 = vst [vmem:[#allocation2 + $0x48] sm:$0xf] %v2483
        %2554 = vst [vmem:[#allocation2 + $0x4c] sm:$0xf] %v2484
        %2555 = vst [vmem:[#allocation2 + $0x50] sm:$0xf] %v2485
        %2556 = vst [vmem:[#allocation2 + $0x54] sm:$0xf] %v2486
        %2557 = vst [vmem:[#allocation2 + $0x58] sm:$0xf] %v2487
        %2558 = vst [vmem:[#allocation2 + $0x5c] sm:$0xf] %v2488
        %2559 = vst [vmem:[#allocation2 + $0x60] sm:$0xf] %v2489
        %2560 = vst [vmem:[#allocation2 + $0x64] sm:$0xf] %v2490
        %2561 = vst [vmem:[#allocation2 + $0x68] sm:$0xf] %v2491
        %2562 = vst [vmem:[#allocation2 + $0x6c] sm:$0xf] %v2492
        %2563 = vst [vmem:[#allocation2 + $0x70] sm:$0xf] %v2493
        %2564 = vst [vmem:[#allocation2 + $0x74] sm:$0xf] %v2494
        %2565 = vst [vmem:[#allocation2 + $0x78] sm:$0xf] %v2495
        %2566 = vst [vmem:[#allocation2 + $0x7c] sm:$0xf] %v2496
        %2567 = vst [vmem:[#allocation2 + $0x80] sm:$0xf] %v2497
        %2568 = vst [vmem:[#allocation2 + $0x84] sm:$0xf] %v2498
        %2569 = vst [vmem:[#allocation2 + $0x88] sm:$0xf] %v2499
        %v2570 = vpack.c.b16 %v2431, %v2430
        %v2571 = vpack.c.b16 %v2433, %v2432
        %v2572 = vpack.c.b16 %v2436, %v2435
        %v2573 = vpack.c.b16 %v2438, %v2437
        %v2574 = vpack.c.b16 %v2441, %v2440
        %v2575 = vpack.c.b16 %v2443, %v2442
        %v2576 = vpack.c.b16 %v2446, %v2445
        %v2577 = vpack.c.b16 %v2448, %v2447
        %v2578 = vpack.c.b16 %v2451, %v2450
        %v2579 = vpack.c.b16 %v2453, %v2452
        %v2580 = vpack.c.b16 %v2456, %v2455
        %v2581 = vpack.c.b16 %v2458, %v2457
        %v2582 = vpack.c.b16 %v2461, %v2460
        %v2583 = vpack.c.b16 %v2463, %v2462
        %v2598 = vmax.bf16 %v2570, %v2571
        %vm2599 = vcmask 1043456
        %v2602 = vsel %vm2599, %v2469, 4286644096
        %v2604 = vmax.bf16 %v2598, %v2602
        %v2605 = vunpack.i.l.bf16 %v2604
        %v2606 = vunpack.i.h.bf16 %v2604
        %v2607 = vmax.f32 %v2605, %v2606
        %v2608 = vrot.slane %v2607, 4
        %v2609 = vmax.f32 %v2607, %v2608
        %v2610 = vrot.slane %v2609, 2
        %v2611 = vmax.f32 %v2609, %v2610
        %v2612 = vrot.slane %v2611, 1
        %v2613 = vmax.f32 %v2611, %v2612
        %v2614 = vpack.i.bf16 %v2613, %v2613
        %v2615 = vmax.bf16 %v2572, %v2573
        %v2617 = vsel %vm2599, %v2474, 4286644096
        %v2619 = vmax.bf16 %v2615, %v2617
        %v2620 = vunpack.i.l.bf16 %v2619
        %v2621 = vunpack.i.h.bf16 %v2619
        %v2622 = vmax.f32 %v2620, %v2621
        %v2623 = vrot.slane %v2622, 4
        %v2624 = vmax.f32 %v2622, %v2623
        %v2625 = vrot.slane %v2624, 2
        %v2626 = vmax.f32 %v2624, %v2625
        %v2627 = vrot.slane %v2626, 1
        %v2628 = vmax.f32 %v2626, %v2627
        %v2629 = vpack.i.bf16 %v2628, %v2628
        %v2630 = vmax.bf16 %v2574, %v2575
        %v2632 = vsel %vm2599, %v2479, 4286644096
        %v2634 = vmax.bf16 %v2630, %v2632
        %v2635 = vunpack.i.l.bf16 %v2634
        %v2636 = vunpack.i.h.bf16 %v2634
        %v2637 = vmax.f32 %v2635, %v2636
        %v2638 = vrot.slane %v2637, 4
        %v2639 = vmax.f32 %v2637, %v2638
        %v2640 = vrot.slane %v2639, 2
        %v2641 = vmax.f32 %v2639, %v2640
        %v2642 = vrot.slane %v2641, 1
        %v2643 = vmax.f32 %v2641, %v2642
        %v2644 = vpack.i.bf16 %v2643, %v2643
        %v2645 = vmax.bf16 %v2576, %v2577
        %v2647 = vsel %vm2599, %v2484, 4286644096
        %v2649 = vmax.bf16 %v2645, %v2647
        %v2650 = vunpack.i.l.bf16 %v2649
        %v2651 = vunpack.i.h.bf16 %v2649
        %v2652 = vmax.f32 %v2650, %v2651
        %v2653 = vrot.slane %v2652, 4
        %v2654 = vmax.f32 %v2652, %v2653
        %v2655 = vrot.slane %v2654, 2
        %v2656 = vmax.f32 %v2654, %v2655
        %v2657 = vrot.slane %v2656, 1
        %v2658 = vmax.f32 %v2656, %v2657
        %v2659 = vpack.i.bf16 %v2658, %v2658
        %v2660 = vmax.bf16 %v2578, %v2579
        %v2662 = vsel %vm2599, %v2489, 4286644096
        %v2664 = vmax.bf16 %v2660, %v2662
        %v2665 = vunpack.i.l.bf16 %v2664
        %v2666 = vunpack.i.h.bf16 %v2664
        %v2667 = vmax.f32 %v2665, %v2666
        %v2668 = vrot.slane %v2667, 4
        %v2669 = vmax.f32 %v2667, %v2668
        %v2670 = vrot.slane %v2669, 2
        %v2671 = vmax.f32 %v2669, %v2670
        %v2672 = vrot.slane %v2671, 1
        %v2673 = vmax.f32 %v2671, %v2672
        %v2674 = vpack.i.bf16 %v2673, %v2673
        %v2675 = vmax.bf16 %v2580, %v2581
        %v2677 = vsel %vm2599, %v2494, 4286644096
        %v2679 = vmax.bf16 %v2675, %v2677
        %v2680 = vunpack.i.l.bf16 %v2679
        %v2681 = vunpack.i.h.bf16 %v2679
        %v2682 = vmax.f32 %v2680, %v2681
        %v2683 = vrot.slane %v2682, 4
        %v2684 = vmax.f32 %v2682, %v2683
        %v2685 = vrot.slane %v2684, 2
        %v2686 = vmax.f32 %v2684, %v2685
        %v2687 = vrot.slane %v2686, 1
        %v2688 = vmax.f32 %v2686, %v2687
        %v2689 = vpack.i.bf16 %v2688, %v2688
        %v2690 = vmax.bf16 %v2582, %v2583
        %v2692 = vsel %vm2599, %v2499, 4286644096
        %v2694 = vmax.bf16 %v2690, %v2692
        %v2695 = vunpack.i.l.bf16 %v2694
        %v2696 = vunpack.i.h.bf16 %v2694
        %v2697 = vmax.f32 %v2695, %v2696
        %v2698 = vrot.slane %v2697, 4
        %v2699 = vmax.f32 %v2697, %v2698
        %v2700 = vrot.slane %v2699, 2
        %v2701 = vmax.f32 %v2699, %v2700
        %v2702 = vrot.slane %v2701, 1
        %v2703 = vmax.f32 %v2701, %v2702
        %v2704 = vpack.i.bf16 %v2703, %v2703
        %v2712 = vunpack.c.l.b16 %v2614
        %v2713 = vunpack.c.l.b16 %v2629
        %v2714 = vunpack.c.l.b16 %v2644
        %v2715 = vunpack.c.l.b16 %v2659
        %v2716 = vunpack.c.l.b16 %v2674
        %v2717 = vunpack.c.l.b16 %v2689
        %v2718 = vunpack.c.l.b16 %v2704
        %v2719 = vpack.c.b16 %v2712, %v2712
        %v2720 = vpack.c.b16 %v2713, %v2713
        %v2721 = vpack.c.b16 %v2714, %v2714
        %v2722 = vpack.c.b16 %v2715, %v2715
        %v2723 = vpack.c.b16 %v2716, %v2716
        %v2724 = vpack.c.b16 %v2717, %v2717
        %v2725 = vpack.c.b16 %v2718, %v2718
        %v2726 = vunpack.c.l.b16 %v2719
        %v2727 = vunpack.c.l.b16 %v2720
        %v2728 = vunpack.c.l.b16 %v2721
        %v2729 = vunpack.c.l.b16 %v2722
        %v2730 = vunpack.c.l.b16 %v2723
        %v2731 = vunpack.c.l.b16 %v2724
        %v2732 = vunpack.c.l.b16 %v2725
        %vm2733 = vcmask 1041409
        %v2734 = vsel %vm2733, %v2727, %v2726
        %vm2735 = vcmask 1042434
        %v2736 = vsel %vm2735, %v2728, %v2734
        %vm2737 = vcmask 1043459
        %v2738 = vsel %vm2737, %v2729, %v2736
        %vm2739 = vcmask 1044484
        %v2740 = vsel %vm2739, %v2730, %v2738
        %vm2741 = vcmask 1045509
        %v2742 = vsel %vm2741, %v2731, %v2740
        %vm2743 = vcmask 1046534
        %v2744 = vsel %vm2743, %v2732, %v2742
        %v2745 = vpack.c.b16 %v2744, %v2744
        %s2747 = smul.addr %s35, 4
        %s2748 = scalar_lea.vmem [#allocation4], %s2747
        %vm2749 = vcmask 1043456
        %vm2750 = vsmask.f32 3328
        %vm2751 = vmand %vm2749, %vm2750
        %v2752 = vld [vmem:[%s2748] sm:$0xf]
        %v2753 = vsel %vm2751, %v2745, %v2752
        %2754 = vst [vmem:[%s2748] sm:$0xf] %v2753
        %p2755 = scmp.eq.s32.totalorder %s35, 7
        // Predicated region
        $region97: #{tpu_custom_call.1} parent=55 // pred_check
          %p2756 = pneg %p2755
        $region98: #{tpu_custom_call.1} parent=55 // pred_check_branch
          %2758 = sbr.rel (%p2756) target = $region100
        $region99: #{tpu_custom_call.1} parent=55 // pred_region
          %v2759 = vld [vmem:[#allocation4] sm:$0xf]
          %v2760 = vld [vmem:[#allocation4 + $0x4] sm:$0xf]
          %v2761 = vld [vmem:[#allocation4 + $0x8] sm:$0xf]
          %v2762 = vld [vmem:[#allocation4 + $0xc] sm:$0xf]
          %v2763 = vld [vmem:[#allocation4 + $0x10] sm:$0xf]
          %v2764 = vld [vmem:[#allocation4 + $0x14] sm:$0xf]
          %v2765 = vld [vmem:[#allocation4 + $0x18] sm:$0xf]
          %v2766 = vld [vmem:[#allocation4 + $0x1c] sm:$0xf]
          %v2767 = vcombine.low %v2759, %v2763
          %v2769 = vunpack.c.l.s4 1983009808
          %v2770 = vunpack.c.0.s8 %v2769
          %v2771 = vlaneseq
          %v2772 = vshrl.u32 %v2771, 7
          %v2773 = vsub.s32 %v2770, %v2772
          %v2774 = vrot.slane %v2767, %v2773
          %v2775 = vcombine.low %v2761, %v2765
          %v2777 = vunpack.c.l.s4 1983009808
          %v2778 = vunpack.c.0.s8 %v2777
          %v2779 = vlaneseq
          %v2780 = vshrl.u32 %v2779, 7
          %v2781 = vsub.s32 %v2778, %v2780
          %v2782 = vrot.slane %v2775, %v2781
          %v2783 = vcombine.low %v2774, %v2782
          %v2784 = vcombine.high %v2774, %v2782
          %v2786 = vunpack.c.l.s4 1934713408
          %v2787 = vunpack.c.0.s8 %v2786
          %v2788 = vlaneseq
          %v2789 = vshrl.u32 %v2788, 7
          %v2790 = vsub.s32 %v2787, %v2789
          %v2791 = vrot.slane %v2783, %v2790
          %v2793 = vunpack.c.l.s4 1934713408
          %v2794 = vunpack.c.0.s8 %v2793
          %v2795 = vlaneseq
          %v2796 = vshrl.u32 %v2795, 7
          %v2797 = vsub.s32 %v2794, %v2796
          %v2798 = vrot.slane %v2784, %v2797
          %v2799 = vcombine.high %v2791, 0
          %v2800 = vcombine.high %v2798, 0
          %v2801 = vcombine.low %v2760, %v2764
          %v2803 = vunpack.c.l.s4 1983009808
          %v2804 = vunpack.c.0.s8 %v2803
          %v2805 = vlaneseq
          %v2806 = vshrl.u32 %v2805, 7
          %v2807 = vsub.s32 %v2804, %v2806
          %v2808 = vrot.slane %v2801, %v2807
          %v2809 = vcombine.low %v2762, %v2766
          %v2811 = vunpack.c.l.s4 1983009808
          %v2812 = vunpack.c.0.s8 %v2811
          %v2813 = vlaneseq
          %v2814 = vshrl.u32 %v2813, 7
          %v2815 = vsub.s32 %v2812, %v2814
          %v2816 = vrot.slane %v2809, %v2815
          %v2817 = vcombine.low %v2808, %v2816
          %v2818 = vcombine.high %v2808, %v2816
          %v2820 = vunpack.c.l.s4 1934713408
          %v2821 = vunpack.c.0.s8 %v2820
          %v2822 = vlaneseq
          %v2823 = vshrl.u32 %v2822, 7
          %v2824 = vsub.s32 %v2821, %v2823
          %v2825 = vrot.slane %v2817, %v2824
          %v2827 = vunpack.c.l.s4 1934713408
          %v2828 = vunpack.c.0.s8 %v2827
          %v2829 = vlaneseq
          %v2830 = vshrl.u32 %v2829, 7
          %v2831 = vsub.s32 %v2828, %v2830
          %v2832 = vrot.slane %v2818, %v2831
          %v2833 = vcombine.high %v2825, 0
          %v2834 = vcombine.high %v2832, 0
          %v2837 = vpack.i.b16 %v2825, %v2791
          %v2839 = vshrl.u32 %v2791, 16
          %v2840 = vshrl.u32 %v2825, 16
          %v2841 = vpack.i.b16 %v2840, %v2839
          %v2845 = vpack.i.b16 %v2833, %v2799
          %v2847 = vshrl.u32 %v2799, 16
          %v2848 = vshrl.u32 %v2833, 16
          %v2849 = vpack.i.b16 %v2848, %v2847
          %v2853 = vpack.i.b16 %v2832, %v2798
          %v2855 = vshrl.u32 %v2798, 16
          %v2856 = vshrl.u32 %v2832, 16
          %v2857 = vpack.i.b16 %v2856, %v2855
          %v2861 = vpack.i.b16 %v2834, %v2800
          %v2863 = vld [vmem:[#allocation11] sm:$0xff]
          %v2864 = vld [vmem:[#allocation11 + $0x8] sm:$0xff]
          %v2865 = vld [vmem:[#allocation11 + $0x10] sm:$0xff]
          %v2866 = vld [vmem:[#allocation11 + $0x18] sm:$0xff]
          %v2867 = vld [vmem:[#allocation11 + $0x20] sm:$0xff]
          %v2868 = vld [vmem:[#allocation11 + $0x28] sm:$0xff]
          %v2869 = vld [vmem:[#allocation11 + $0x30] sm:$0xff]
          %v2870 = vld [vmem:[#allocation11 + $0x38] sm:$0xff]
          %v2871 = vld [vmem:[#allocation11 + $0x40] sm:$0xff]
          %v2872 = vld [vmem:[#allocation11 + $0x48] sm:$0xff]
          %v2873 = vld [vmem:[#allocation11 + $0x50] sm:$0xff]
          %v2874 = vld [vmem:[#allocation11 + $0x58] sm:$0xff]
          %v2875 = vld [vmem:[#allocation11 + $0x60] sm:$0xff]
          %v2876 = vld [vmem:[#allocation11 + $0x68] sm:$0xff]
          %v2877 = vld [vmem:[#allocation11 + $0x70] sm:$0xff]
          %v2878 = vld [vmem:[#allocation11 + $0x78] sm:$0xff]
          %v2879 = vld [vmem:[#allocation11 + $0x80] sm:$0xff]
          %v2880 = vld [vmem:[#allocation11 + $0x88] sm:$0xff]
          %v2881 = vld [vmem:[#allocation11 + $0x90] sm:$0xff]
          %v2882 = vld [vmem:[#allocation11 + $0x98] sm:$0xff]
          %v2883 = vld [vmem:[#allocation11 + $0xa0] sm:$0xff]
          %v2884 = vld [vmem:[#allocation11 + $0xa8] sm:$0xff]
          %v2885 = vld [vmem:[#allocation11 + $0xb0] sm:$0xff]
          %v2886 = vld [vmem:[#allocation11 + $0xb8] sm:$0xff]
          %v2887 = vld [vmem:[#allocation11 + $0xc0] sm:$0xff]
          %v2888 = vld [vmem:[#allocation11 + $0xc8] sm:$0xff]
          %v2889 = vld [vmem:[#allocation11 + $0xd0] sm:$0xff]
          %v2890 = vld [vmem:[#allocation11 + $0xd8] sm:$0xff]
          %v2891 = vld [vmem:[#allocation11 + $0xe0] sm:$0xff]
          %v2892 = vld [vmem:[#allocation11 + $0xe8] sm:$0xff]
          %v2893 = vld [vmem:[#allocation11 + $0xf0] sm:$0xff]
          %v2894 = vld [vmem:[#allocation11 + $0xf8] sm:$0xff]
          %v2895 = vld [vmem:[#allocation11 + $0x100] sm:$0xff]
          %v2896 = vld [vmem:[#allocation11 + $0x108] sm:$0xff]
          %v2897 = vld [vmem:[#allocation11 + $0x110] sm:$0xff]
          %v2898 = vld [vmem:[#allocation11 + $0x118] sm:$0xff]
          %v2899 = vld [vmem:[#allocation11 + $0x120] sm:$0xff]
          %v2900 = vld [vmem:[#allocation11 + $0x128] sm:$0xff]
          %v2901 = vld [vmem:[#allocation11 + $0x130] sm:$0xff]
          %v2902 = vld [vmem:[#allocation11 + $0x138] sm:$0xff]
          %v2903 = vld [vmem:[#allocation11 + $0x140] sm:$0xff]
          %v2904 = vld [vmem:[#allocation11 + $0x148] sm:$0xff]
          %v2905 = vld [vmem:[#allocation11 + $0x150] sm:$0xff]
          %v2906 = vld [vmem:[#allocation11 + $0x158] sm:$0xff]
          %v2907 = vld [vmem:[#allocation11 + $0x160] sm:$0xff]
          %v2908 = vld [vmem:[#allocation11 + $0x168] sm:$0xff]
          %v2909 = vld [vmem:[#allocation11 + $0x170] sm:$0xff]
          %v2910 = vld [vmem:[#allocation11 + $0x178] sm:$0xff]
          %v2911 = vld [vmem:[#allocation11 + $0x180] sm:$0xff]
          %v2912 = vld [vmem:[#allocation11 + $0x188] sm:$0xff]
          %v2913 = vld [vmem:[#allocation11 + $0x190] sm:$0xff]
          %v2914 = vld [vmem:[#allocation11 + $0x198] sm:$0xff]
          %v2915 = vld [vmem:[#allocation11 + $0x1a0] sm:$0xff]
          %v2916 = vld [vmem:[#allocation11 + $0x1a8] sm:$0xff]
          %v2917 = vld [vmem:[#allocation11 + $0x1b0] sm:$0xff]
          %v2918 = vld [vmem:[#allocation11 + $0x1b8] sm:$0xff]
          %v2919 = vld [vmem:[#allocation11 + $0x1c0] sm:$0xff]
          %v2920 = vld [vmem:[#allocation11 + $0x1c8] sm:$0xff]
          %v2921 = vld [vmem:[#allocation11 + $0x1d0] sm:$0xff]
          %v2922 = vld [vmem:[#allocation11 + $0x1d8] sm:$0xff]
          %v2923 = vld [vmem:[#allocation11 + $0x1e0] sm:$0xff]
          %v2924 = vld [vmem:[#allocation11 + $0x1e8] sm:$0xff]
          %v2925 = vld [vmem:[#allocation11 + $0x1f0] sm:$0xff]
          %v2926 = vld [vmem:[#allocation11 + $0x1f8] sm:$0xff]
          %v2927 = vld [vmem:[#allocation11 + $0x200] sm:$0xff]
          %v2928 = vld [vmem:[#allocation11 + $0x208] sm:$0xff]
          %v2929 = vld [vmem:[#allocation11 + $0x210] sm:$0xff]
          %v2930 = vld [vmem:[#allocation11 + $0x218] sm:$0xff]
          %v2931 = vld [vmem:[#allocation11 + $0x220] sm:$0xff]
          %v2932 = vld [vmem:[#allocation11 + $0x228] sm:$0xff]
          %v2933 = vld [vmem:[#allocation11 + $0x230] sm:$0xff]
          %v2934 = vld [vmem:[#allocation11 + $0x238] sm:$0xff]
          %v2935 = vld [vmem:[#allocation11 + $0x240] sm:$0xff]
          %v2936 = vld [vmem:[#allocation11 + $0x248] sm:$0xff]
          %v2937 = vld [vmem:[#allocation11 + $0x250] sm:$0xff]
          %v2938 = vld [vmem:[#allocation11 + $0x258] sm:$0xff]
          %v2939 = vld [vmem:[#allocation11 + $0x260] sm:$0xff]
          %v2940 = vld [vmem:[#allocation11 + $0x268] sm:$0xff]
          %v2941 = vld [vmem:[#allocation11 + $0x270] sm:$0xff]
          %v2942 = vld [vmem:[#allocation11 + $0x278] sm:$0xff]
          %v2943 = vld [vmem:[#allocation11 + $0x280] sm:$0xff]
          %v2944 = vld [vmem:[#allocation11 + $0x288] sm:$0xff]
          %v2945 = vld [vmem:[#allocation11 + $0x290] sm:$0xff]
          %v2946 = vld [vmem:[#allocation11 + $0x298] sm:$0xff]
          %v2947 = vld [vmem:[#allocation11 + $0x2a0] sm:$0xff]
          %v2948 = vld [vmem:[#allocation11 + $0x2a8] sm:$0xff]
          %v2949 = vld [vmem:[#allocation11 + $0x2b0] sm:$0xff]
          %v2950 = vld [vmem:[#allocation11 + $0x2b8] sm:$0xff]
          %v2951 = vld [vmem:[#allocation11 + $0x2c0] sm:$0xff]
          %v2952 = vld [vmem:[#allocation11 + $0x2c8] sm:$0xff]
          %v2953 = vld [vmem:[#allocation11 + $0x2d0] sm:$0xff]
          %v2954 = vld [vmem:[#allocation11 + $0x2d8] sm:$0xff]
          %v2955 = vld [vmem:[#allocation11 + $0x2e0] sm:$0xff]
          %v2956 = vld [vmem:[#allocation11 + $0x2e8] sm:$0xff]
          %v2957 = vld [vmem:[#allocation11 + $0x2f0] sm:$0xff]
          %v2958 = vld [vmem:[#allocation11 + $0x2f8] sm:$0xff]
          %v2959 = vld [vmem:[#allocation11 + $0x300] sm:$0xff]
          %v2960 = vld [vmem:[#allocation11 + $0x308] sm:$0xff]
          %v2961 = vld [vmem:[#allocation11 + $0x310] sm:$0xff]
          %v2962 = vld [vmem:[#allocation11 + $0x318] sm:$0xff]
          %v2963 = vld [vmem:[#allocation11 + $0x320] sm:$0xff]
          %v2964 = vld [vmem:[#allocation11 + $0x328] sm:$0xff]
          %v2965 = vld [vmem:[#allocation11 + $0x330] sm:$0xff]
          %v2966 = vld [vmem:[#allocation11 + $0x338] sm:$0xff]
          %v2967 = vld [vmem:[#allocation11 + $0x340] sm:$0xff]
          %v2968 = vld [vmem:[#allocation11 + $0x348] sm:$0xff]
          %v2969 = vld [vmem:[#allocation11 + $0x350] sm:$0xff]
          %v2970 = vld [vmem:[#allocation11 + $0x358] sm:$0xff]
          %v2971 = vld [vmem:[#allocation11 + $0x360] sm:$0xff]
          %v2972 = vld [vmem:[#allocation11 + $0x368] sm:$0xff]
          %v2973 = vld [vmem:[#allocation11 + $0x370] sm:$0xff]
          %v2974 = vld [vmem:[#allocation11 + $0x378] sm:$0xff]
          %v2975 = vld [vmem:[#allocation13] sm:$0x3]
          %v2977 = vlaneseq
          %v2978 = vshrl.u32 %v2977, 7
          %v2979 = vsub.s32 0, %v2978
          %v2980 = vrot.slane %v2975, %v2979
          %v2981 = vlaneseq
          %v2982 = vshrl.u32 %v2981, 7
          %v2983 = vsub.s32 1, %v2982
          %v2984 = vrot.slane %v2975, %v2983
          %v3099 = vunpack.c.l.b16 %v2863
          %v3100 = vunpack.c.h.b16 %v2863
          %v3101 = vunpack.c.l.b16 %v2864
          %v3102 = vunpack.c.h.b16 %v2864
          %v3103 = vunpack.c.l.b16 %v2865
          %v3104 = vunpack.c.h.b16 %v2865
          %v3105 = vunpack.c.l.b16 %v2866
          %v3106 = vunpack.c.h.b16 %v2866
          %v3107 = vunpack.c.l.b16 %v2867
          %v3108 = vunpack.c.h.b16 %v2867
          %v3109 = vunpack.c.l.b16 %v2868
          %v3110 = vunpack.c.h.b16 %v2868
          %v3111 = vunpack.c.l.b16 %v2869
          %v3112 = vunpack.c.h.b16 %v2869
          %v3113 = vunpack.c.l.b16 %v2870
          %v3114 = vunpack.c.h.b16 %v2870
          %v3115 = vunpack.c.l.b16 %v2871
          %v3116 = vunpack.c.h.b16 %v2871
          %v3117 = vunpack.c.l.b16 %v2872
          %v3118 = vunpack.c.h.b16 %v2872
          %v3119 = vunpack.c.l.b16 %v2873
          %v3120 = vunpack.c.h.b16 %v2873
          %v3121 = vunpack.c.l.b16 %v2874
          %v3122 = vunpack.c.h.b16 %v2874
          %v3123 = vunpack.c.l.b16 %v2875
          %v3124 = vunpack.c.h.b16 %v2875
          %v3125 = vunpack.c.l.b16 %v2876
          %v3126 = vunpack.c.h.b16 %v2876
          %v3127 = vunpack.c.l.b16 %v2877
          %v3128 = vunpack.c.h.b16 %v2877
          %v3129 = vunpack.c.l.b16 %v2878
          %v3130 = vunpack.c.h.b16 %v2878
          %v3131 = vunpack.c.l.b16 %v2879
          %v3132 = vunpack.c.h.b16 %v2879
          %v3133 = vunpack.c.l.b16 %v2880
          %v3134 = vunpack.c.h.b16 %v2880
          %v3135 = vunpack.c.l.b16 %v2881
          %v3136 = vunpack.c.h.b16 %v2881
          %v3137 = vunpack.c.l.b16 %v2882
          %v3138 = vunpack.c.h.b16 %v2882
          %v3139 = vunpack.c.l.b16 %v2883
          %v3140 = vunpack.c.h.b16 %v2883
          %v3141 = vunpack.c.l.b16 %v2884
          %v3142 = vunpack.c.h.b16 %v2884
          %v3143 = vunpack.c.l.b16 %v2885
          %v3144 = vunpack.c.h.b16 %v2885
          %v3145 = vunpack.c.l.b16 %v2886
          %v3146 = vunpack.c.h.b16 %v2886
          %v3147 = vunpack.c.l.b16 %v2887
          %v3148 = vunpack.c.h.b16 %v2887
          %v3149 = vunpack.c.l.b16 %v2888
          %v3150 = vunpack.c.h.b16 %v2888
          %v3151 = vunpack.c.l.b16 %v2889
          %v3152 = vunpack.c.h.b16 %v2889
          %v3153 = vunpack.c.l.b16 %v2890
          %v3154 = vunpack.c.h.b16 %v2890
          %v3155 = vunpack.c.l.b16 %v2891
          %v3156 = vunpack.c.h.b16 %v2891
          %v3157 = vunpack.c.l.b16 %v2892
          %v3158 = vunpack.c.h.b16 %v2892
          %v3159 = vunpack.c.l.b16 %v2893
          %v3160 = vunpack.c.h.b16 %v2893
          %v3161 = vunpack.c.l.b16 %v2894
          %v3162 = vunpack.c.h.b16 %v2894
          %v3163 = vunpack.c.l.b16 %v2895
          %v3164 = vunpack.c.h.b16 %v2895
          %v3165 = vunpack.c.l.b16 %v2896
          %v3166 = vunpack.c.h.b16 %v2896
          %v3167 = vunpack.c.l.b16 %v2897
          %v3168 = vunpack.c.h.b16 %v2897
          %v3169 = vunpack.c.l.b16 %v2898
          %v3170 = vunpack.c.h.b16 %v2898
          %v3171 = vunpack.c.l.b16 %v2899
          %v3172 = vunpack.c.h.b16 %v2899
          %v3173 = vunpack.c.l.b16 %v2900
          %v3174 = vunpack.c.h.b16 %v2900
          %v3175 = vunpack.c.l.b16 %v2901
          %v3176 = vunpack.c.h.b16 %v2901
          %v3177 = vunpack.c.l.b16 %v2902
          %v3178 = vunpack.c.h.b16 %v2902
          %v3179 = vunpack.c.l.b16 %v2903
          %v3180 = vunpack.c.h.b16 %v2903
          %v3181 = vunpack.c.l.b16 %v2904
          %v3182 = vunpack.c.h.b16 %v2904
          %v3183 = vunpack.c.l.b16 %v2905
          %v3184 = vunpack.c.h.b16 %v2905
          %v3185 = vunpack.c.l.b16 %v2906
          %v3186 = vunpack.c.h.b16 %v2906
          %v3187 = vunpack.c.l.b16 %v2907
          %v3188 = vunpack.c.h.b16 %v2907
          %v3189 = vunpack.c.l.b16 %v2908
          %v3190 = vunpack.c.h.b16 %v2908
          %v3191 = vunpack.c.l.b16 %v2909
          %v3192 = vunpack.c.h.b16 %v2909
          %v3193 = vunpack.c.l.b16 %v2910
          %v3194 = vunpack.c.h.b16 %v2910
          %v3195 = vunpack.c.l.b16 %v2911
          %v3196 = vunpack.c.h.b16 %v2911
          %v3197 = vunpack.c.l.b16 %v2912
          %v3198 = vunpack.c.h.b16 %v2912
          %v3199 = vunpack.c.l.b16 %v2913
          %v3200 = vunpack.c.h.b16 %v2913
          %v3201 = vunpack.c.l.b16 %v2914
          %v3202 = vunpack.c.h.b16 %v2914
          %v3203 = vunpack.c.l.b16 %v2915
          %v3204 = vunpack.c.h.b16 %v2915
          %v3205 = vunpack.c.l.b16 %v2916
          %v3206 = vunpack.c.h.b16 %v2916
          %v3207 = vunpack.c.l.b16 %v2917
          %v3208 = vunpack.c.h.b16 %v2917
          %v3209 = vunpack.c.l.b16 %v2918
          %v3210 = vunpack.c.h.b16 %v2918
          %v3211 = vunpack.c.l.b16 %v2919
          %v3212 = vunpack.c.h.b16 %v2919
          %v3213 = vunpack.c.l.b16 %v2920
          %v3214 = vunpack.c.h.b16 %v2920
          %v3215 = vunpack.c.l.b16 %v2921
          %v3216 = vunpack.c.h.b16 %v2921
          %v3217 = vunpack.c.l.b16 %v2922
          %v3218 = vunpack.c.h.b16 %v2922
          %v3219 = vunpack.c.l.b16 %v2923
          %v3220 = vunpack.c.h.b16 %v2923
          %v3221 = vunpack.c.l.b16 %v2924
          %v3222 = vunpack.c.h.b16 %v2924
          %v3223 = vunpack.c.l.b16 %v2925
          %v3224 = vunpack.c.h.b16 %v2925
          %v3225 = vunpack.c.l.b16 %v2926
          %v3226 = vunpack.c.h.b16 %v2926
          %v3227 = vunpack.c.l.b16 %v2927
          %v3228 = vunpack.c.h.b16 %v2927
          %v3229 = vunpack.c.l.b16 %v2928
          %v3230 = vunpack.c.h.b16 %v2928
          %v3231 = vunpack.c.l.b16 %v2929
          %v3232 = vunpack.c.h.b16 %v2929
          %v3233 = vunpack.c.l.b16 %v2930
          %v3234 = vunpack.c.h.b16 %v2930
          %v3235 = vunpack.c.l.b16 %v2931
          %v3236 = vunpack.c.h.b16 %v2931
          %v3237 = vunpack.c.l.b16 %v2932
          %v3238 = vunpack.c.h.b16 %v2932
          %v3239 = vunpack.c.l.b16 %v2933
          %v3240 = vunpack.c.h.b16 %v2933
          %v3241 = vunpack.c.l.b16 %v2934
          %v3242 = vunpack.c.h.b16 %v2934
          %v3243 = vunpack.c.l.b16 %v2935
          %v3244 = vunpack.c.h.b16 %v2935
          %v3245 = vunpack.c.l.b16 %v2936
          %v3246 = vunpack.c.h.b16 %v2936
          %v3247 = vunpack.c.l.b16 %v2937
          %v3248 = vunpack.c.h.b16 %v2937
          %v3249 = vunpack.c.l.b16 %v2938
          %v3250 = vunpack.c.h.b16 %v2938
          %v3251 = vunpack.c.l.b16 %v2939
          %v3252 = vunpack.c.h.b16 %v2939
          %v3253 = vunpack.c.l.b16 %v2940
          %v3254 = vunpack.c.h.b16 %v2940
          %v3255 = vunpack.c.l.b16 %v2941
          %v3256 = vunpack.c.h.b16 %v2941
          %v3257 = vunpack.c.l.b16 %v2942
          %v3258 = vunpack.c.h.b16 %v2942
          %v3259 = vunpack.c.l.b16 %v2943
          %v3260 = vunpack.c.h.b16 %v2943
          %v3261 = vunpack.c.l.b16 %v2944
          %v3262 = vunpack.c.h.b16 %v2944
          %v3263 = vunpack.c.l.b16 %v2945
          %v3264 = vunpack.c.h.b16 %v2945
          %v3265 = vunpack.c.l.b16 %v2946
          %v3266 = vunpack.c.h.b16 %v2946
          %v3267 = vunpack.c.l.b16 %v2947
          %v3268 = vunpack.c.h.b16 %v2947
          %v3269 = vunpack.c.l.b16 %v2948
          %v3270 = vunpack.c.h.b16 %v2948
          %v3271 = vunpack.c.l.b16 %v2949
          %v3272 = vunpack.c.h.b16 %v2949
          %v3273 = vunpack.c.l.b16 %v2950
          %v3274 = vunpack.c.h.b16 %v2950
          %v3275 = vunpack.c.l.b16 %v2951
          %v3276 = vunpack.c.h.b16 %v2951
          %v3277 = vunpack.c.l.b16 %v2952
          %v3278 = vunpack.c.h.b16 %v2952
          %v3279 = vunpack.c.l.b16 %v2953
          %v3280 = vunpack.c.h.b16 %v2953
          %v3281 = vunpack.c.l.b16 %v2954
          %v3282 = vunpack.c.h.b16 %v2954
          %v3283 = vunpack.c.l.b16 %v2955
          %v3284 = vunpack.c.h.b16 %v2955
          %v3285 = vunpack.c.l.b16 %v2956
          %v3286 = vunpack.c.h.b16 %v2956
          %v3287 = vunpack.c.l.b16 %v2957
          %v3288 = vunpack.c.h.b16 %v2957
          %v3289 = vunpack.c.l.b16 %v2958
          %v3290 = vunpack.c.h.b16 %v2958
          %v3291 = vunpack.c.l.b16 %v2959
          %v3292 = vunpack.c.h.b16 %v2959
          %v3293 = vunpack.c.l.b16 %v2960
          %v3294 = vunpack.c.h.b16 %v2960
          %v3295 = vunpack.c.l.b16 %v2961
          %v3296 = vunpack.c.h.b16 %v2961
          %v3297 = vunpack.c.l.b16 %v2962
          %v3298 = vunpack.c.h.b16 %v2962
          %v3299 = vunpack.c.l.b16 %v2963
          %v3300 = vunpack.c.h.b16 %v2963
          %v3301 = vunpack.c.l.b16 %v2964
          %v3302 = vunpack.c.h.b16 %v2964
          %v3303 = vunpack.c.l.b16 %v2965
          %v3304 = vunpack.c.h.b16 %v2965
          %v3305 = vunpack.c.l.b16 %v2966
          %v3306 = vunpack.c.h.b16 %v2966
          %v3307 = vunpack.c.l.b16 %v2967
          %v3308 = vunpack.c.h.b16 %v2967
          %v3309 = vunpack.c.l.b16 %v2968
          %v3310 = vunpack.c.h.b16 %v2968
          %v3311 = vunpack.c.l.b16 %v2969
          %v3312 = vunpack.c.h.b16 %v2969
          %v3313 = vunpack.c.l.b16 %v2970
          %v3314 = vunpack.c.h.b16 %v2970
          %v3315 = vunpack.c.l.b16 %v2971
          %v3316 = vunpack.c.h.b16 %v2971
          %v3317 = vunpack.c.l.b16 %v2972
          %v3318 = vunpack.c.h.b16 %v2972
          %v3319 = vunpack.c.l.b16 %v2973
          %v3320 = vunpack.c.h.b16 %v2973
          %v3321 = vunpack.c.l.b16 %v2974
          %v3322 = vunpack.c.h.b16 %v2974
          %v3323 = vpack.c.b16 %v3101, %v3099
          %v3324 = vpack.c.b16 %v3102, %v3100
          %v3325 = vpack.c.b16 %v3105, %v3103
          %v3326 = vpack.c.b16 %v3106, %v3104
          %v3327 = vpack.c.b16 %v3109, %v3107
          %v3328 = vpack.c.b16 %v3110, %v3108
          %v3329 = vpack.c.b16 %v3113, %v3111
          %v3330 = vpack.c.b16 %v3114, %v3112
          %v3331 = vpack.c.b16 %v3117, %v3115
          %v3332 = vpack.c.b16 %v3118, %v3116
          %v3333 = vpack.c.b16 %v3121, %v3119
          %v3334 = vpack.c.b16 %v3122, %v3120
          %v3335 = vpack.c.b16 %v3125, %v3123
          %v3336 = vpack.c.b16 %v3126, %v3124
          %v3337 = vpack.c.b16 %v3129, %v3127
          %v3338 = vpack.c.b16 %v3130, %v3128
          %v3339 = vpack.c.b16 %v3133, %v3131
          %v3340 = vpack.c.b16 %v3134, %v3132
          %v3341 = vpack.c.b16 %v3137, %v3135
          %v3342 = vpack.c.b16 %v3138, %v3136
          %v3343 = vpack.c.b16 %v3141, %v3139
          %v3344 = vpack.c.b16 %v3142, %v3140
          %v3345 = vpack.c.b16 %v3145, %v3143
          %v3346 = vpack.c.b16 %v3146, %v3144
          %v3347 = vpack.c.b16 %v3149, %v3147
          %v3348 = vpack.c.b16 %v3150, %v3148
          %v3349 = vpack.c.b16 %v3153, %v3151
          %v3350 = vpack.c.b16 %v3154, %v3152
          %v3351 = vpack.c.b16 %v3157, %v3155
          %v3352 = vpack.c.b16 %v3158, %v3156
          %v3353 = vpack.c.b16 %v3161, %v3159
          %v3354 = vpack.c.b16 %v3162, %v3160
          %v3355 = vpack.c.b16 %v3165, %v3163
          %v3356 = vpack.c.b16 %v3166, %v3164
          %v3357 = vpack.c.b16 %v3169, %v3167
          %v3358 = vpack.c.b16 %v3170, %v3168
          %v3359 = vpack.c.b16 %v3173, %v3171
          %v3360 = vpack.c.b16 %v3174, %v3172
          %v3361 = vpack.c.b16 %v3177, %v3175
          %v3362 = vpack.c.b16 %v3178, %v3176
          %v3363 = vpack.c.b16 %v3181, %v3179
          %v3364 = vpack.c.b16 %v3182, %v3180
          %v3365 = vpack.c.b16 %v3185, %v3183
          %v3366 = vpack.c.b16 %v3186, %v3184
          %v3367 = vpack.c.b16 %v3189, %v3187
          %v3368 = vpack.c.b16 %v3190, %v3188
          %v3369 = vpack.c.b16 %v3193, %v3191
          %v3370 = vpack.c.b16 %v3194, %v3192
          %v3371 = vpack.c.b16 %v3197, %v3195
          %v3372 = vpack.c.b16 %v3198, %v3196
          %v3373 = vpack.c.b16 %v3201, %v3199
          %v3374 = vpack.c.b16 %v3202, %v3200
          %v3375 = vpack.c.b16 %v3205, %v3203
          %v3376 = vpack.c.b16 %v3206, %v3204
          %v3377 = vpack.c.b16 %v3209, %v3207
          %v3378 = vpack.c.b16 %v3210, %v3208
          %v3379 = vpack.c.b16 %v3213, %v3211
          %v3380 = vpack.c.b16 %v3214, %v3212
          %v3381 = vpack.c.b16 %v3217, %v3215
          %v3382 = vpack.c.b16 %v3218, %v3216
          %v3383 = vpack.c.b16 %v3221, %v3219
          %v3384 = vpack.c.b16 %v3222, %v3220
          %v3385 = vpack.c.b16 %v3225, %v3223
          %v3386 = vpack.c.b16 %v3226, %v3224
          %v3387 = vpack.c.b16 %v3229, %v3227
          %v3388 = vpack.c.b16 %v3230, %v3228
          %v3389 = vpack.c.b16 %v3233, %v3231
          %v3390 = vpack.c.b16 %v3234, %v3232
          %v3391 = vpack.c.b16 %v3237, %v3235
          %v3392 = vpack.c.b16 %v3238, %v3236
          %v3393 = vpack.c.b16 %v3241, %v3239
          %v3394 = vpack.c.b16 %v3242, %v3240
          %v3395 = vpack.c.b16 %v3245, %v3243
          %v3396 = vpack.c.b16 %v3246, %v3244
          %v3397 = vpack.c.b16 %v3249, %v3247
          %v3398 = vpack.c.b16 %v3250, %v3248
          %v3399 = vpack.c.b16 %v3253, %v3251
          %v3400 = vpack.c.b16 %v3254, %v3252
          %v3401 = vpack.c.b16 %v3257, %v3255
          %v3402 = vpack.c.b16 %v3258, %v3256
          %v3403 = vpack.c.b16 %v3261, %v3259
          %v3404 = vpack.c.b16 %v3262, %v3260
          %v3405 = vpack.c.b16 %v3265, %v3263
          %v3406 = vpack.c.b16 %v3266, %v3264
          %v3407 = vpack.c.b16 %v3269, %v3267
          %v3408 = vpack.c.b16 %v3270, %v3268
          %v3409 = vpack.c.b16 %v3273, %v3271
          %v3410 = vpack.c.b16 %v3274, %v3272
          %v3411 = vpack.c.b16 %v3277, %v3275
          %v3412 = vpack.c.b16 %v3278, %v3276
          %v3413 = vpack.c.b16 %v3281, %v3279
          %v3414 = vpack.c.b16 %v3282, %v3280
          %v3415 = vpack.c.b16 %v3285, %v3283
          %v3416 = vpack.c.b16 %v3286, %v3284
          %v3417 = vpack.c.b16 %v3289, %v3287
          %v3418 = vpack.c.b16 %v3290, %v3288
          %v3419 = vpack.c.b16 %v3293, %v3291
          %v3420 = vpack.c.b16 %v3294, %v3292
          %v3421 = vpack.c.b16 %v3297, %v3295
          %v3422 = vpack.c.b16 %v3298, %v3296
          %v3423 = vpack.c.b16 %v3301, %v3299
          %v3424 = vpack.c.b16 %v3302, %v3300
          %v3425 = vpack.c.b16 %v3305, %v3303
          %v3426 = vpack.c.b16 %v3306, %v3304
          %v3427 = vpack.c.b16 %v3309, %v3307
          %v3428 = vpack.c.b16 %v3310, %v3308
          %v3429 = vpack.c.b16 %v3313, %v3311
          %v3430 = vpack.c.b16 %v3314, %v3312
          %v3431 = vpack.c.b16 %v3317, %v3315
          %v3432 = vpack.c.b16 %v3318, %v3316
          %v3433 = vpack.c.b16 %v3321, %v3319
          %v3434 = vpack.c.b16 %v3322, %v3320
          %3547 = vmatprep.subr.bf16.mxu0 %v3324
          %3548 = vmatpush1.bf16.msra.mxu0 %v3323
          %3549 = vmatprep.subr.bf16.mxu0 %v3326
          %3550 = vmatpush1.bf16.msra.mxu0 %v3325
          %3551 = vmatprep.subr.bf16.mxu0 %v3328
          %3552 = vmatpush1.bf16.msra.mxu0 %v3327
          %3553 = vmatprep.subr.bf16.mxu0 %v3330
          %3554 = vmatpush1.bf16.msra.mxu0 %v3329
          %3555 = vmatprep.subr.bf16.mxu0 %v3332
          %3556 = vmatpush1.bf16.msra.mxu0 %v3331
          %3557 = vmatprep.subr.bf16.mxu0 %v3334
          %3558 = vmatpush1.bf16.msra.mxu0 %v3333
          %3559 = vmatprep.subr.bf16.mxu0 %v3336
          %3560 = vmatpush1.bf16.msra.mxu0 %v3335
          %3561 = vmatprep.subr.bf16.mxu0 %v3338
          %3562 = vmatpush1.bf16.msra.mxu0 %v3337
          %3563 = vmatprep.subr.bf16.mxu0 %v3340
          %3564 = vmatpush1.bf16.msra.mxu0 %v3339
          %3565 = vmatprep.subr.bf16.mxu0 %v3342
          %3566 = vmatpush1.bf16.msra.mxu0 %v3341
          %3567 = vmatprep.subr.bf16.mxu0 %v3344
          %3568 = vmatpush1.bf16.msra.mxu0 %v3343
          %3569 = vmatprep.subr.bf16.mxu0 %v3346
          %3570 = vmatpush1.bf16.msra.mxu0 %v3345
          %3571 = vmatprep.subr.bf16.mxu0 %v3348
          %3572 = vmatpush1.bf16.msra.mxu0 %v3347
          %3573 = vmatprep.subr.bf16.mxu0 %v3350
          %3574 = vmatpush1.bf16.msra.mxu0 %v3349
          %3575 = vmatprep.subr.bf16.mxu0 %v3352
          %3576 = vmatpush1.bf16.msra.mxu0 %v3351
          %3577 = vmatprep.subr.bf16.mxu0 %v3354
          %3578 = vmatpush1.bf16.msra.mxu0 %v3353
          %3579 = vmatprep.mubr.bf16.mxu0 %v2841
          %3580 = vmatmul.mubr.bf16.gmra.mrb[0].mxu0 %v2837
          %v3581 = vpop.f32.mrb[0].mxu0
          %v3582 = vadd.f32 %v2980, %v3581
          %v3583 = vpop.f32.mrb[0].mxu0
          %v3584 = vadd.f32 %v2984, %v3583
          %v3585 = vpop.f32.mrb[0].mxu0
          %v3586 = vpop.f32.mrb[0].mxu0
          %3587 = vdwg.mxu0
          %3588 = vmatprep.subr.bf16.mxu0 %v3356
          %3589 = vmatpush1.bf16.msra.mxu0 %v3355
          %3590 = vmatprep.subr.bf16.mxu0 %v3358
          %3591 = vmatpush1.bf16.msra.mxu0 %v3357
          %3592 = vmatprep.subr.bf16.mxu0 %v3360
          %3593 = vmatpush1.bf16.msra.mxu0 %v3359
          %3594 = vmatprep.subr.bf16.mxu0 %v3362
          %3595 = vmatpush1.bf16.msra.mxu0 %v3361
          %3596 = vmatprep.subr.bf16.mxu0 %v3364
          %3597 = vmatpush1.bf16.msra.mxu0 %v3363
          %3598 = vmatprep.subr.bf16.mxu0 %v3366
          %3599 = vmatpush1.bf16.msra.mxu0 %v3365
          %3600 = vmatprep.subr.bf16.mxu0 %v3368
          %3601 = vmatpush1.bf16.msra.mxu0 %v3367
          %3602 = vmatprep.subr.bf16.mxu0 %v3370
          %3603 = vmatpush1.bf16.msra.mxu0 %v3369
          %3604 = vmatprep.subr.bf16.mxu0 %v3372
          %3605 = vmatpush1.bf16.msra.mxu0 %v3371
          %3606 = vmatprep.subr.bf16.mxu0 %v3374
          %3607 = vmatpush1.bf16.msra.mxu0 %v3373
          %3608 = vmatprep.subr.bf16.mxu0 %v3376
          %3609 = vmatpush1.bf16.msra.mxu0 %v3375
          %3610 = vmatprep.subr.bf16.mxu0 %v3378
          %3611 = vmatpush1.bf16.msra.mxu0 %v3377
          %3612 = vmatprep.subr.bf16.mxu0 %v3380
          %3613 = vmatpush1.bf16.msra.mxu0 %v3379
          %3614 = vmatprep.subr.bf16.mxu0 %v3382
          %3615 = vmatpush1.bf16.msra.mxu0 %v3381
          %3616 = vmatprep.subr.bf16.mxu0 %v3384
          %3617 = vmatpush1.bf16.msra.mxu0 %v3383
          %3618 = vmatprep.subr.bf16.mxu0 %v3386
          %3619 = vmatpush1.bf16.msra.mxu0 %v3385
          %3620 = vmatprep.mubr.bf16.mxu0 %v2849
          %3621 = vmatmul.mubr.bf16.gmra.mrb[0].mxu0 %v2845
          %v3622 = vpop.f32.mrb[0].mxu0
          %v3623 = vadd.f32 %v3582, %v3622
          %v3624 = vpop.f32.mrb[0].mxu0
          %v3625 = vadd.f32 %v3584, %v3624
          %v3626 = vpop.f32.mrb[0].mxu0
          %v3627 = vpop.f32.mrb[0].mxu0
          %3628 = vdwg.mxu0
          %3629 = vmatprep.subr.bf16.mxu0 %v3388
          %3630 = vmatpush1.bf16.msra.mxu0 %v3387
          %3631 = vmatprep.subr.bf16.mxu0 %v3390
          %3632 = vmatpush1.bf16.msra.mxu0 %v3389
          %3633 = vmatprep.subr.bf16.mxu0 %v3392
          %3634 = vmatpush1.bf16.msra.mxu0 %v3391
          %3635 = vmatprep.subr.bf16.mxu0 %v3394
          %3636 = vmatpush1.bf16.msra.mxu0 %v3393
          %3637 = vmatprep.subr.bf16.mxu0 %v3396
          %3638 = vmatpush1.bf16.msra.mxu0 %v3395
          %3639 = vmatprep.subr.bf16.mxu0 %v3398
          %3640 = vmatpush1.bf16.msra.mxu0 %v3397
          %3641 = vmatprep.subr.bf16.mxu0 %v3400
          %3642 = vmatpush1.bf16.msra.mxu0 %v3399
          %3643 = vmatprep.subr.bf16.mxu0 %v3402
          %3644 = vmatpush1.bf16.msra.mxu0 %v3401
          %3645 = vmatprep.subr.bf16.mxu0 %v3404
          %3646 = vmatpush1.bf16.msra.mxu0 %v3403
          %3647 = vmatprep.subr.bf16.mxu0 %v3406
          %3648 = vmatpush1.bf16.msra.mxu0 %v3405
          %3649 = vmatprep.subr.bf16.mxu0 %v3408
          %3650 = vmatpush1.bf16.msra.mxu0 %v3407
          %3651 = vmatprep.subr.bf16.mxu0 %v3410
          %3652 = vmatpush1.bf16.msra.mxu0 %v3409
          %3653 = vmatprep.subr.bf16.mxu0 %v3412
          %3654 = vmatpush1.bf16.msra.mxu0 %v3411
          %3655 = vmatprep.subr.bf16.mxu0 %v3414
          %3656 = vmatpush1.bf16.msra.mxu0 %v3413
          %3657 = vmatprep.subr.bf16.mxu0 %v3416
          %3658 = vmatpush1.bf16.msra.mxu0 %v3415
          %3659 = vmatprep.subr.bf16.mxu0 %v3418
          %3660 = vmatpush1.bf16.msra.mxu0 %v3417
          %3661 = vmatprep.mubr.bf16.mxu0 %v2857
          %3662 = vmatmul.mubr.bf16.gmra.mrb[0].mxu0 %v2853
          %v3663 = vpop.f32.mrb[0].mxu0
          %v3664 = vadd.f32 %v3623, %v3663
          %v3665 = vpop.f32.mrb[0].mxu0
          %v3666 = vadd.f32 %v3625, %v3665
          %v3667 = vpop.f32.mrb[0].mxu0
          %v3668 = vpop.f32.mrb[0].mxu0
          %3669 = vdwg.mxu0
          %3670 = vmatprep.subr.bf16.mxu0 %v3420
          %3671 = vmatpush1.bf16.msra.mxu0 %v3419
          %3672 = vmatprep.subr.bf16.mxu0 %v3422
          %3673 = vmatpush1.bf16.msra.mxu0 %v3421
          %3674 = vmatprep.subr.bf16.mxu0 %v3424
          %3675 = vmatpush1.bf16.msra.mxu0 %v3423
          %3676 = vmatprep.subr.bf16.mxu0 %v3426
          %3677 = vmatpush1.bf16.msra.mxu0 %v3425
          %3678 = vmatprep.subr.bf16.mxu0 %v3428
          %3679 = vmatpush1.bf16.msra.mxu0 %v3427
          %3680 = vmatprep.subr.bf16.mxu0 %v3430
          %3681 = vmatpush1.bf16.msra.mxu0 %v3429
          %3682 = vmatprep.subr.bf16.mxu0 %v3432
          %3683 = vmatpush1.bf16.msra.mxu0 %v3431
          %3684 = vmatprep.subr.bf16.mxu0 %v3434
          %3685 = vmatpush1.bf16.msra.mxu0 %v3433
          %3686 = vmatprep.subr.bf16.mxu0 0
          %3687 = vmatpush1.bf16.msra.mxu0 0
          %3688 = vmatprep.subr.bf16.mxu0 0
          %3689 = vmatpush1.bf16.msra.mxu0 0
          %3690 = vmatprep.subr.bf16.mxu0 0
          %3691 = vmatpush1.bf16.msra.mxu0 0
          %3692 = vmatprep.subr.bf16.mxu0 0
          %3693 = vmatpush1.bf16.msra.mxu0 0
          %3694 = vmatprep.subr.bf16.mxu0 0
          %3695 = vmatpush1.bf16.msra.mxu0 0
          %3696 = vmatprep.subr.bf16.mxu0 0
          %3697 = vmatpush1.bf16.msra.mxu0 0
          %3698 = vmatprep.subr.bf16.mxu0 0
          %3699 = vmatpush1.bf16.msra.mxu0 0
          %3700 = vmatprep.subr.bf16.mxu0 0
          %3701 = vmatpush1.bf16.msra.mxu0 0
          %3702 = vmatprep.mubr.bf16.mxu0 0
          %3703 = vmatmul.mubr.bf16.gmra.mrb[0].mxu0 %v2861
          %v3704 = vpop.f32.mrb[0].mxu0
          %v3705 = vadd.f32 %v3664, %v3704
          %v3706 = vpop.f32.mrb[0].mxu0
          %v3707 = vadd.f32 %v3666, %v3706
          %v3708 = vpop.f32.mrb[0].mxu0
          %v3709 = vpop.f32.mrb[0].mxu0
          %3710 = vdwg.mxu0
          %vm3711 = vcmp.gt.f32.partialorder %v3705, 0.0
          %vm3712 = vcmp.gt.f32.partialorder %v3707, 0.0
          %v3713 = vmul.f32 %v3705, 0.1
          %v3714 = vmul.f32 %v3707, 0.1
          %v3715 = vsel %vm3711, %v3705, %v3713
          %v3716 = vsel %vm3712, %v3707, %v3714
          %v3717 = vpack.c.bf16 %v3715, %v3715
          %v3718 = vpack.c.bf16 %v3716, %v3716
          %v3719 = vld [vmem:[#allocation14] sm:$0xf]
          %v3720 = vld [vmem:[#allocation14 + $0x4] sm:$0xf]
          %v3721 = vld [vmem:[#allocation14 + $0x8] sm:$0xf]
          %v3722 = vld [vmem:[#allocation14 + $0xc] sm:$0xf]
          %v3723 = vld [vmem:[#allocation14 + $0x10] sm:$0xf]
          %v3724 = vld [vmem:[#allocation14 + $0x14] sm:$0xf]
          %v3725 = vld [vmem:[#allocation14 + $0x18] sm:$0xf]
          %v3726 = vld [vmem:[#allocation14 + $0x1c] sm:$0xf]
          %v3727 = vld [vmem:[#allocation14 + $0x20] sm:$0xf]
          %v3728 = vld [vmem:[#allocation14 + $0x24] sm:$0xf]
          %v3729 = vld [vmem:[#allocation14 + $0x28] sm:$0xf]
          %v3730 = vld [vmem:[#allocation14 + $0x2c] sm:$0xf]
          %v3731 = vld [vmem:[#allocation14 + $0x30] sm:$0xf]
          %v3732 = vld [vmem:[#allocation14 + $0x34] sm:$0xf]
          %v3733 = vld [vmem:[#allocation14 + $0x38] sm:$0xf]
          %v3734 = vld [vmem:[#allocation14 + $0x3c] sm:$0xf]
          %v3735 = vld [vmem:[#allocation14 + $0x40] sm:$0xf]
          %v3736 = vld [vmem:[#allocation14 + $0x44] sm:$0xf]
          %v3737 = vld [vmem:[#allocation14 + $0x48] sm:$0xf]
          %v3738 = vld [vmem:[#allocation14 + $0x4c] sm:$0xf]
          %v3739 = vld [vmem:[#allocation14 + $0x50] sm:$0xf]
          %v3740 = vld [vmem:[#allocation14 + $0x54] sm:$0xf]
          %v3741 = vld [vmem:[#allocation14 + $0x58] sm:$0xf]
          %v3742 = vld [vmem:[#allocation14 + $0x5c] sm:$0xf]
          %v3743 = vld [vmem:[#allocation14 + $0x60] sm:$0xf]
          %v3744 = vld [vmem:[#allocation14 + $0x64] sm:$0xf]
          %v3745 = vld [vmem:[#allocation14 + $0x68] sm:$0xf]
          %v3746 = vld [vmem:[#allocation14 + $0x6c] sm:$0xf]
          %v3747 = vld [vmem:[#allocation14 + $0x70] sm:$0xf]
          %v3748 = vld [vmem:[#allocation14 + $0x74] sm:$0xf]
          %v3749 = vld [vmem:[#allocation14 + $0x78] sm:$0xf]
          %v3750 = vld [vmem:[#allocation14 + $0x7c] sm:$0xf]
          %v3751 = vld [vmem:[#allocation16] sm:$0x1]
          %v3753 = vlaneseq
          %v3754 = vshrl.u32 %v3753, 7
          %v3755 = vsub.s32 0, %v3754
          %v3756 = vrot.slane %v3751, %v3755
          %v3790 = vunpack.c.l.b16 %v3719
          %v3791 = vunpack.c.l.b16 %v3720
          %v3792 = vunpack.c.l.b16 %v3721
          %v3793 = vunpack.c.l.b16 %v3722
          %v3794 = vunpack.c.l.b16 %v3723
          %v3795 = vunpack.c.l.b16 %v3724
          %v3796 = vunpack.c.l.b16 %v3725
          %v3797 = vunpack.c.l.b16 %v3726
          %v3798 = vunpack.c.l.b16 %v3727
          %v3799 = vunpack.c.l.b16 %v3728
          %v3800 = vunpack.c.l.b16 %v3729
          %v3801 = vunpack.c.l.b16 %v3730
          %v3802 = vunpack.c.l.b16 %v3731
          %v3803 = vunpack.c.l.b16 %v3732
          %v3804 = vunpack.c.l.b16 %v3733
          %v3805 = vunpack.c.l.b16 %v3734
          %v3806 = vunpack.c.l.b16 %v3735
          %v3807 = vunpack.c.l.b16 %v3736
          %v3808 = vunpack.c.l.b16 %v3737
          %v3809 = vunpack.c.l.b16 %v3738
          %v3810 = vunpack.c.l.b16 %v3739
          %v3811 = vunpack.c.l.b16 %v3740
          %v3812 = vunpack.c.l.b16 %v3741
          %v3813 = vunpack.c.l.b16 %v3742
          %v3814 = vunpack.c.l.b16 %v3743
          %v3815 = vunpack.c.l.b16 %v3744
          %v3816 = vunpack.c.l.b16 %v3745
          %v3817 = vunpack.c.l.b16 %v3746
          %v3818 = vunpack.c.l.b16 %v3747
          %v3819 = vunpack.c.l.b16 %v3748
          %v3820 = vunpack.c.l.b16 %v3749
          %v3821 = vunpack.c.l.b16 %v3750
          %v3822 = vpack.c.b16 %v3791, %v3790
          %v3823 = vpack.c.b16 %v3793, %v3792
          %v3824 = vpack.c.b16 %v3795, %v3794
          %v3825 = vpack.c.b16 %v3797, %v3796
          %v3826 = vpack.c.b16 %v3799, %v3798
          %v3827 = vpack.c.b16 %v3801, %v3800
          %v3828 = vpack.c.b16 %v3803, %v3802
          %v3829 = vpack.c.b16 %v3805, %v3804
          %v3830 = vpack.c.b16 %v3807, %v3806
          %v3831 = vpack.c.b16 %v3809, %v3808
          %v3832 = vpack.c.b16 %v3811, %v3810
          %v3833 = vpack.c.b16 %v3813, %v3812
          %v3834 = vpack.c.b16 %v3815, %v3814
          %v3835 = vpack.c.b16 %v3817, %v3816
          %v3836 = vpack.c.b16 %v3819, %v3818
          %v3837 = vpack.c.b16 %v3821, %v3820
          %3854 = vmatprep.subr.bf16.mxu0 0
          %3855 = vmatpush1.bf16.msra.mxu0 %v3822
          %3856 = vmatprep.subr.bf16.mxu0 0
          %3857 = vmatpush1.bf16.msra.mxu0 %v3823
          %3858 = vmatprep.subr.bf16.mxu0 0
          %3859 = vmatpush1.bf16.msra.mxu0 %v3824
          %3860 = vmatprep.subr.bf16.mxu0 0
          %3861 = vmatpush1.bf16.msra.mxu0 %v3825
          %3862 = vmatprep.subr.bf16.mxu0 0
          %3863 = vmatpush1.bf16.msra.mxu0 %v3826
          %3864 = vmatprep.subr.bf16.mxu0 0
          %3865 = vmatpush1.bf16.msra.mxu0 %v3827
          %3866 = vmatprep.subr.bf16.mxu0 0
          %3867 = vmatpush1.bf16.msra.mxu0 %v3828
          %3868 = vmatprep.subr.bf16.mxu0 0
          %3869 = vmatpush1.bf16.msra.mxu0 %v3829
          %3870 = vmatprep.subr.bf16.mxu0 0
          %3871 = vmatpush1.bf16.msra.mxu0 %v3830
          %3872 = vmatprep.subr.bf16.mxu0 0
          %3873 = vmatpush1.bf16.msra.mxu0 %v3831
          %3874 = vmatprep.subr.bf16.mxu0 0
          %3875 = vmatpush1.bf16.msra.mxu0 %v3832
          %3876 = vmatprep.subr.bf16.mxu0 0
          %3877 = vmatpush1.bf16.msra.mxu0 %v3833
          %3878 = vmatprep.subr.bf16.mxu0 0
          %3879 = vmatpush1.bf16.msra.mxu0 %v3834
          %3880 = vmatprep.subr.bf16.mxu0 0
          %3881 = vmatpush1.bf16.msra.mxu0 %v3835
          %3882 = vmatprep.subr.bf16.mxu0 0
          %3883 = vmatpush1.bf16.msra.mxu0 %v3836
          %3884 = vmatprep.subr.bf16.mxu0 0
          %3885 = vmatpush1.bf16.msra.mxu0 %v3837
          %3886 = vmatprep.mubr.bf16.mxu0 %v3718
          %3887 = vmatmul.mubr.bf16.gmra.mrb[0].mxu0 %v3717
          %v3888 = vpop.f32.mrb[0].mxu0
          %v3889 = vadd.f32 %v3756, %v3888
          %v3890 = vpop.f32.mrb[0].mxu0
          %v3891 = vpop.f32.mrb[0].mxu0
          %v3892 = vpop.f32.mrb[0].mxu0
          %3893 = vdwg.mxu0
          %vm3894 = vcmp.gt.f32.partialorder %v3889, 0.0
          %v3895 = vmul.f32 %v3889, 0.1
          %v3896 = vsel %vm3894, %v3889, %v3895
          %v3897 = vpack.c.bf16 %v3896, %v3896
          %v3898 = vld [vmem:[#allocation17] sm:$0xf]
          %v3899 = vld [vmem:[#allocation17 + $0x4] sm:$0xf]
          %v3900 = vld [vmem:[#allocation17 + $0x8] sm:$0xf]
          %v3901 = vld [vmem:[#allocation17 + $0xc] sm:$0xf]
          %v3902 = vld [vmem:[#allocation17 + $0x10] sm:$0xf]
          %v3903 = vld [vmem:[#allocation17 + $0x14] sm:$0xf]
          %v3904 = vld [vmem:[#allocation17 + $0x18] sm:$0xf]
          %v3905 = vld [vmem:[#allocation17 + $0x1c] sm:$0xf]
          %v3906 = vld [vmem:[#allocation17 + $0x20] sm:$0xf]
          %v3907 = vld [vmem:[#allocation17 + $0x24] sm:$0xf]
          %v3908 = vld [vmem:[#allocation17 + $0x28] sm:$0xf]
          %v3909 = vld [vmem:[#allocation17 + $0x2c] sm:$0xf]
          %v3910 = vld [vmem:[#allocation17 + $0x30] sm:$0xf]
          %v3911 = vld [vmem:[#allocation17 + $0x34] sm:$0xf]
          %v3912 = vld [vmem:[#allocation17 + $0x38] sm:$0xf]
          %v3913 = vld [vmem:[#allocation17 + $0x3c] sm:$0xf]
          %v3914 = vld [vmem:[#allocation19] sm:$0x1]
          %v3916 = vlaneseq
          %v3917 = vshrl.u32 %v3916, 7
          %v3918 = vsub.s32 0, %v3917
          %v3919 = vrot.slane %v3914, %v3918
          %v3937 = vunpack.c.l.b16 %v3898
          %v3938 = vunpack.c.l.b16 %v3899
          %v3939 = vunpack.c.l.b16 %v3900
          %v3940 = vunpack.c.l.b16 %v3901
          %v3941 = vunpack.c.l.b16 %v3902
          %v3942 = vunpack.c.l.b16 %v3903
          %v3943 = vunpack.c.l.b16 %v3904
          %v3944 = vunpack.c.l.b16 %v3905
          %v3945 = vunpack.c.l.b16 %v3906
          %v3946 = vunpack.c.l.b16 %v3907
          %v3947 = vunpack.c.l.b16 %v3908
          %v3948 = vunpack.c.l.b16 %v3909
          %v3949 = vunpack.c.l.b16 %v3910
          %v3950 = vunpack.c.l.b16 %v3911
          %v3951 = vunpack.c.l.b16 %v3912
          %v3952 = vunpack.c.l.b16 %v3913
          %v3953 = vpack.c.b16 %v3938, %v3937
          %v3954 = vpack.c.b16 %v3940, %v3939
          %v3955 = vpack.c.b16 %v3942, %v3941
          %v3956 = vpack.c.b16 %v3944, %v3943
          %v3957 = vpack.c.b16 %v3946, %v3945
          %v3958 = vpack.c.b16 %v3948, %v3947
          %v3959 = vpack.c.b16 %v3950, %v3949
          %v3960 = vpack.c.b16 %v3952, %v3951
          %3969 = vmatprep.subr.bf16.mxu0 0
          %3970 = vmatpush1.bf16.msra.mxu0 %v3953
          %3971 = vmatprep.subr.bf16.mxu0 0
          %3972 = vmatpush1.bf16.msra.mxu0 %v3954
          %3973 = vmatprep.subr.bf16.mxu0 0
          %3974 = vmatpush1.bf16.msra.mxu0 %v3955
          %3975 = vmatprep.subr.bf16.mxu0 0
          %3976 = vmatpush1.bf16.msra.mxu0 %v3956
          %3977 = vmatprep.subr.bf16.mxu0 0
          %3978 = vmatpush1.bf16.msra.mxu0 %v3957
          %3979 = vmatprep.subr.bf16.mxu0 0
          %3980 = vmatpush1.bf16.msra.mxu0 %v3958
          %3981 = vmatprep.subr.bf16.mxu0 0
          %3982 = vmatpush1.bf16.msra.mxu0 %v3959
          %3983 = vmatprep.subr.bf16.mxu0 0
          %3984 = vmatpush1.bf16.msra.mxu0 %v3960
          %3985 = vmatprep.subr.bf16.mxu0 0
          %3986 = vmatpush1.bf16.msra.mxu0 0
          %3987 = vmatprep.subr.bf16.mxu0 0
          %3988 = vmatpush1.bf16.msra.mxu0 0
          %3989 = vmatprep.subr.bf16.mxu0 0
          %3990 = vmatpush1.bf16.msra.mxu0 0
          %3991 = vmatprep.subr.bf16.mxu0 0
          %3992 = vmatpush1.bf16.msra.mxu0 0
          %3993 = vmatprep.subr.bf16.mxu0 0
          %3994 = vmatpush1.bf16.msra.mxu0 0
          %3995 = vmatprep.subr.bf16.mxu0 0
          %3996 = vmatpush1.bf16.msra.mxu0 0
          %3997 = vmatprep.subr.bf16.mxu0 0
          %3998 = vmatpush1.bf16.msra.mxu0 0
          %3999 = vmatprep.subr.bf16.mxu0 0
          %4000 = vmatpush1.bf16.msra.mxu0 0
          %4001 = vmatprep.mubr.bf16.mxu0 0
          %4002 = vmatmul.mubr.bf16.gmra.mrb[0].mxu0 %v3897
          %v4003 = vpop.f32.mrb[0].mxu0
          %v4004 = vadd.f32 %v3919, %v4003
          %v4005 = vpop.f32.mrb[0].mxu0
          %v4006 = vpop.f32.mrb[0].mxu0
          %v4007 = vpop.f32.mrb[0].mxu0
          %4008 = vdwg.mxu0
          %4009 = vst [vmem:[%s474] sm:$0xff] %v4004
        $region100: #{tpu_custom_call.1} parent=55 // pred_fallthru
          _
        %s4010 = sand.u32 %s246, 1
        %s4011 = scalar_lea.sflag [#allocation7], %s4010
        %s4012 = sand.u32 %s246, 1
        %s4013 = smul.addr %s4012, 8
        %s4014 = scalar_lea.vmem [#allocation20], %s4013
        // Predicated region
        $region101: #{tpu_custom_call.1} parent=55 // pred_check
          %p4015 = pneg %p256
        $region102: #{tpu_custom_call.1} parent=55 // pred_check_branch
          %4017 = sbr.rel (%p4015) target = $region104
        $region103: #{tpu_custom_call.1} parent=55 // pred_region
          %s4019 = ssub.s32 128, 128
          %4020 = vsyncadd %s4011, %s4019
          %s4021 = smul.addr %s34, 128
          %s4022 = scalar_lea.hbm %s9, %s4021
          %s4024 = sshll.u32 %s4014, 4
          %s4025 = int_to_ptr.vmem [resolvable:$true] %s4024
          %4027 = dma.vmem_to_hbm [thread:$0]  %s4025, 128, %s4022, %s4011
        $region104: #{tpu_custom_call.1} parent=55 // pred_fallthru
          _
      $region56: #{tpu_custom_call.1} parent=5 // pred_fallthru
        _
      %p4028 = scmp.le.s32.totalorder 2, %s25
      // Predicated region
      $region105: #{tpu_custom_call.1} parent=5 // pred_check
        %p4029 = pneg %p4028
      $region106: #{tpu_custom_call.1} parent=5 // pred_check_branch
        %4031 = sbr.rel (%p4029) target = $region108
      $region107: #{tpu_custom_call.1} parent=5 // pred_region
        %s4032 = ssub.s32 %s25, 2
        // Predicated region
        $region109: #{tpu_custom_call.1} parent=107 // pred_check
          %p4033 = pneg %p262
        $region110: #{tpu_custom_call.1} parent=107 // pred_check_branch
          %4035 = sbr.rel (%p4033) target = $region112
        $region111: #{tpu_custom_call.1} parent=107 // pred_region
          %s4036 = sand.u32 %s247, 1
          %s4037 = scalar_lea.sflag [#allocation7], %s4036
          %s4038 = sand.u32 %s247, 1
          %s4039 = smul.addr %s4038, 8
          %s4040 = scalar_lea.vmem [#allocation20], %s4039
          %4041 = dma.done %s4037, 128
        $region112: #{tpu_custom_call.1} parent=107 // pred_fallthru
          _
      $region108: #{tpu_custom_call.1} parent=5 // pred_fallthru
        _
    $region6: #{tpu_custom_call.1} parent=1 // loop_footer
      %s29 = sadd.s32 1, %s25
    $region7: #{tpu_custom_call.1} parent=1 // loop_footer_branch
      %24 = sbr.rel target = $region3
    $region8: #{tpu_custom_call.1} parent=1 // loop_exit
      _
    %4042 = vsyncpa [#allocation6], 1
    %s4043 = scalar_lea.sflag [#allocation6], 1
    %4044 = vsyncpa %s4043, 1
    %4045 = vsyncpa [#allocation9], 1
    %4046 = vsyncpa [#allocation12], 1
    %4047 = vsyncpa [#allocation15], 1
    %4048 = vsyncpa [#allocation18], 1
    %4049 = vsyncpa [#allocation7], 1
    %s4050 = scalar_lea.sflag [#allocation7], 1
    %4051 = vsyncpa %s4050, 1

</llo_original>
